<compile_context>
chip_gen: v6e
topology: v6e:2x2x1
jax: 0.10.0
libtpu: 0.0.40
codegen_flags: <defaults>
</compile_context>

<pallas_src>
import functools

import jax
import jax.numpy as jnp
from jax.experimental import pallas as pl
from jax.experimental.pallas import tpu as pltpu


def _conv1x1_bn_kernel(x_ref, w_ref, gamma_ref, beta_ref, o_ref, *, eps, m):
    # MXU: (TN, Cin) @ (Cin, M) -> (TN, M).  bf16 operands, f32 accumulation.
    # x is cast to bf16 in-kernel (VALU slack) so its HBM stream stays a single
    # untouched f32 read with no wrapper cast op.
    y = jax.lax.dot_general(
        w_ref[...],
        x_ref[...].astype(jnp.bfloat16),
        dimension_numbers=(((1,), (0,)), ((), ())),
        preferred_element_type=jnp.float32,
    )  # (TN, M) f32

    # BatchNorm (training mode): per-channel batch mean / biased variance over
    # the M = N*H*W positions (lane axis).  Two-pass stats in f32.
    inv_m = 1.0 / float(m)
    mean = jnp.sum(y, axis=1, keepdims=True) * inv_m          # (TN, 1)
    d = y - mean
    var = jnp.sum(d * d, axis=1, keepdims=True) * inv_m       # (TN, 1), biased
    scale = gamma_ref[...] * jax.lax.rsqrt(var + eps)         # (TN, 1)
    o_ref[...] = (d * scale + beta_ref[...]).astype(o_ref.dtype)


def _pick_tn(cout):
    # Generation-specific Cout tile width:
    #   v6e: single grid step (per-tile compute cannot hide the weight DMA, so
    #        drop the extra per-step overheads; VMEM is ample).
    #   v5e / v7x (default): two grid steps -- overlaps next weight DMA with
    #        compute on v5e and gives the 2-TC megacore split on v7x.
    try:
        kind = jax.devices()[0].device_kind.lower()
    except Exception:  # pragma: no cover - defensive
        kind = ""
    if "v6" in kind:
        return cout
    return min(256, cout)


def conv1x1_bn_pallas(x_cin_m, w_co_ci, gamma_co_1, beta_co_1, *, eps=1e-3, tn=None):
    cin, m = x_cin_m.shape
    cout = w_co_ci.shape[0]
    if tn is None:
        tn = _pick_tn(cout)
    if cout % tn != 0:
        tn = cout  # fall back to a single full-width tile

    out_dtype = jnp.float32
    kernel = functools.partial(_conv1x1_bn_kernel, eps=eps, m=m)

    flops = 2 * m * cin * cout
    bytes_accessed = (
        x_cin_m.size * x_cin_m.dtype.itemsize
        + w_co_ci.size * w_co_ci.dtype.itemsize
        + gamma_co_1.size * 4
        + beta_co_1.size * 4
        + cout * m * 4
    )

    return pl.pallas_call(
        kernel,
        out_shape=jax.ShapeDtypeStruct((cout, m), out_dtype),
        grid=(cout // tn,),
        in_specs=[
            # x: same block every step -> the pipeline fetches it exactly once.
            pl.BlockSpec((cin, m), lambda j: (0, 0)),
            # weight column tile (TN, Cin) in bf16 -- the dominant (double-
            # buffered) DMA stream.
            pl.BlockSpec((tn, cin), lambda j: (j, 0)),
            pl.BlockSpec((tn, 1), lambda j: (j, 0)),
            pl.BlockSpec((tn, 1), lambda j: (j, 0)),
        ],
        out_specs=pl.BlockSpec((tn, m), lambda j: (j, 0)),
        compiler_params=pltpu.CompilerParams(
            # Per-channel BN stats make Cout tiles fully independent, so this
            # axis can be split across TensorCores.
            dimension_semantics=("parallel",)),
        cost_estimate=pl.CostEstimate(
            flops=flops, transcendentals=0, bytes_accessed=bytes_accessed),
    )(x_cin_m, w_co_ci, gamma_co_1, beta_co_1)


def module_forward(x_nchw, w_oihw, gamma, beta, *, eps=1e-3):
    """Full module: NCHW in -> NCHW out (PyTorch convention)."""
    n, cin, h, w = x_nchw.shape
    cout = w_oihw.shape[0]

    # (Cout, Cin, 1, 1) -> (Cout, Cin): pure reshape, no copy.
    w_2d = w_oihw.reshape(cout, cin)
    if w_2d.dtype != jnp.bfloat16:
        # TODO(synk): store the conv weight in bf16 to avoid this per-call cast.
        w_2d = w_2d.astype(jnp.bfloat16)

    if n == 1:
        # NCHW with N==1 -> (Cin, H*W) is a pure reshape: no transpose traffic.
        x_2d = x_nchw.reshape(cin, h * w)
    else:
        x_2d = jnp.transpose(x_nchw, (1, 0, 2, 3)).reshape(cin, n * h * w)

    out_2d = conv1x1_bn_pallas(
        x_2d, w_2d, gamma.reshape(cout, 1), beta.reshape(cout, 1), eps=eps)

    if n == 1:
        # (Cout, H*W) -> (1, Cout, H, W): pure reshape again.
        return out_2d.reshape(1, cout, h, w)
    return jnp.transpose(out_2d.reshape(cout, n, h, w), (1, 0, 2, 3))


if __name__ == "__main__":
    # Shapes consistent with the module: Conv2d(3072 -> 512, 1x1), input 1x3072x7x7.
    N, CIN, COUT, H, W = 1, 3072, 512, 7, 7
    EPS = 1e-3

    key = jax.random.PRNGKey(0)
    kx, kw = jax.random.split(key)

    x_nchw = jax.random.normal(kx, (N, CIN, H, W), dtype=jnp.float32)
    # Deterministic synthetic conv weight (PyTorch shape: [Cout, Cin, 1, 1]).
    w_oihw = jax.random.normal(kw, (COUT, CIN, 1, 1), dtype=jnp.float32) * (1.0 / CIN) ** 0.5
    # BatchNorm affine params at PyTorch defaults: weight=1, bias=0.
    gamma = jnp.ones((COUT,), dtype=jnp.float32)
    beta = jnp.zeros((COUT,), dtype=jnp.float32)

    # Weight fed to the kernel in bf16 (one-time cast outside the jitted
    # forward, mirroring bf16 parameter storage) -- halves the dominant DMA.
    w_bf16 = w_oihw.astype(jnp.bfloat16)

    fwd = jax.jit(functools.partial(module_forward, eps=EPS))
    out = jax.block_until_ready(fwd(x_nchw, w_bf16, gamma, beta))
    assert out.shape == (N, COUT, H, W), out.shape

    # Reference 1: same bf16-rounded operand feed, exact f32 math afterwards
    # (matches the kernel's MXU numerics -> tight tolerance).
    x_2d = x_nchw.reshape(CIN, N * H * W)
    x_bf = x_2d.astype(jnp.bfloat16).astype(jnp.float32)
    w_bf = w_bf16.reshape(COUT, CIN).astype(jnp.float32)
    y = jnp.dot(w_bf, x_bf, precision=jax.lax.Precision.HIGHEST)     # (Cout, M)
    mean = y.mean(axis=1, keepdims=True)
    var = ((y - mean) ** 2).mean(axis=1, keepdims=True)              # biased var
    ref2d = (y - mean) / jnp.sqrt(var + EPS) * gamma[:, None] + beta[:, None]
    ref_bf = ref2d.reshape(N, COUT, H, W)
    err_bf = float(jnp.max(jnp.abs(out - ref_bf)))
    assert err_bf < 2e-3, err_bf

    # Reference 2: full-f32 module semantics (loose tolerance for the bf16 feed).
    y32 = jnp.dot(w_oihw.reshape(COUT, CIN), x_2d,
                  precision=jax.lax.Precision.HIGHEST)
    mean32 = y32.mean(axis=1, keepdims=True)
    var32 = ((y32 - mean32) ** 2).mean(axis=1, keepdims=True)
    ref32 = ((y32 - mean32) / jnp.sqrt(var32 + EPS) * gamma[:, None]
             + beta[:, None]).reshape(N, COUT, H, W)
    err32 = float(jnp.max(jnp.abs(out - ref32)))
    assert err32 < 5e-2, err32

    print("KERNEL_OK")
</pallas_src>

<mosaic_0001>
module attributes {stable_mosaic.version = 11 : i64} {
  func.func @_conv1x1_bn_kernel(%arg0: i32, %arg1: memref<3072x49xf32, #tpu.memory_space<vmem>>, %arg2: memref<256x3072xbf16, #tpu.memory_space<vmem>>, %arg3: memref<256x1xf32, #tpu.memory_space<vmem>>, %arg4: memref<256x1xf32, #tpu.memory_space<vmem>>, %arg5: memref<256x49xf32, #tpu.memory_space<vmem>>) attributes {dimension_semantics = [#tpu.dimension_semantics<parallel>], iteration_bounds = array<i64: 2>, scalar_prefetch = 0 : i64, scratch_operands = 0 : i64, tpu.core_type = #tpu.core_type<tc>, window_params = [{pipeline_mode = #tpu.pipeline_mode<synchronous>, transform_indices = @transform_0, window_bounds = array<i64: 3072, 49>}, {transform_indices = @transform_1, window_bounds = array<i64: 256, 3072>}, {transform_indices = @transform_2, window_bounds = array<i64: 256, 1>}, {transform_indices = @transform_3, window_bounds = array<i64: 256, 1>}, {transform_indices = @transform_4, window_bounds = array<i64: 256, 49>}]} {
    %c0 = arith.constant 0 : index
    %c0_0 = arith.constant 0 : index
    %0 = vector.load %arg2[%c0, %c0_0] : memref<256x3072xbf16, #tpu.memory_space<vmem>>, vector<256x3072xbf16>
    %c0_1 = arith.constant 0 : index
    %c0_2 = arith.constant 0 : index
    %1 = vector.load %arg1[%c0_1, %c0_2] : memref<3072x49xf32, #tpu.memory_space<vmem>>, vector<3072x49xf32>
    %2 = arith.truncf %1 : vector<3072x49xf32> to vector<3072x49xbf16>
    %cst = arith.constant dense<0.000000e+00> : vector<256x49xf32>
    %3 = tpu.matmul %0, %2, %cst {dimension_numbers = #tpu.dot_dimension_numbers<[1], [0], [0], [1], [0, 0, 1, 1], [], []>} : vector<256x3072xbf16>, vector<3072x49xbf16>, vector<256x49xf32> -> vector<256x49xf32>
    %cst_3 = arith.constant dense<0.000000e+00> : vector<256xf32>
    %4 = vector.multi_reduction <add>, %3, %cst_3 [1] : vector<256x49xf32> to vector<256xf32>
    %5 = vector.shape_cast %4 : vector<256xf32> to vector<256x1xf32>
    %cst_4 = arith.constant 0.0204081628 : f32
    %6 = vector.broadcast %cst_4 : f32 to vector<256x1xf32>
    %7 = arith.mulf %5, %6 : vector<256x1xf32>
    %8 = vector.broadcast %7 : vector<256x1xf32> to vector<256x49xf32>
    %9 = arith.subf %3, %8 : vector<256x49xf32>
    %10 = arith.mulf %9, %9 : vector<256x49xf32>
    %cst_5 = arith.constant dense<0.000000e+00> : vector<256xf32>
    %11 = vector.multi_reduction <add>, %10, %cst_5 [1] : vector<256x49xf32> to vector<256xf32>
    %12 = vector.shape_cast %11 : vector<256xf32> to vector<256x1xf32>
    %cst_6 = arith.constant 0.0204081628 : f32
    %13 = vector.broadcast %cst_6 : f32 to vector<256x1xf32>
    %14 = arith.mulf %12, %13 : vector<256x1xf32>
    %c0_7 = arith.constant 0 : index
    %c0_8 = arith.constant 0 : index
    %15 = vector.load %arg3[%c0_7, %c0_8] : memref<256x1xf32, #tpu.memory_space<vmem>>, vector<256x1xf32>
    %cst_9 = arith.constant 1.000000e-03 : f32
    %16 = vector.broadcast %cst_9 : f32 to vector<256x1xf32>
    %17 = arith.addf %14, %16 : vector<256x1xf32>
    %18 = math.rsqrt %17 : vector<256x1xf32>
    %19 = arith.mulf %15, %18 : vector<256x1xf32>
    %20 = vector.broadcast %19 : vector<256x1xf32> to vector<256x49xf32>
    %21 = arith.mulf %9, %20 : vector<256x49xf32>
    %c0_10 = arith.constant 0 : index
    %c0_11 = arith.constant 0 : index
    %22 = vector.load %arg4[%c0_10, %c0_11] : memref<256x1xf32, #tpu.memory_space<vmem>>, vector<256x1xf32>
    %23 = vector.broadcast %22 : vector<256x1xf32> to vector<256x49xf32>
    %24 = arith.addf %21, %23 : vector<256x49xf32>
    %c0_12 = arith.constant 0 : index
    %c0_13 = arith.constant 0 : index
    %25 = vector.load %arg5[%c0_12, %c0_13] : memref<256x49xf32, #tpu.memory_space<vmem>>, vector<256x49xf32>
    tpu.vector_store %arg5[%c0_12, %c0_13], %24 {strides = array<i32>} : memref<256x49xf32, #tpu.memory_space<vmem>>, vector<256x49xf32>,
    return
  }
  func.func @transform_0(%arg0: i32) -> (i32, i32) {
    %c0_i32 = arith.constant 0 : i32
    %c0_i32_0 = arith.constant 0 : i32
    %c0_i32_1 = arith.constant 0 : i32
    return %c0_i32, %c0_i32_0 : i32, i32
  }
  func.func @transform_1(%arg0: i32) -> (i32, i32) {
    %c0_i32 = arith.constant 0 : i32
    %c0_i32_0 = arith.constant 0 : i32
    return %arg0, %c0_i32 : i32, i32
  }
  func.func @transform_2(%arg0: i32) -> (i32, i32) {
    %c0_i32 = arith.constant 0 : i32
    %c0_i32_0 = arith.constant 0 : i32
    return %arg0, %c0_i32 : i32, i32
  }
  func.func @transform_3(%arg0: i32) -> (i32, i32) {
    %c0_i32 = arith.constant 0 : i32
    %c0_i32_0 = arith.constant 0 : i32
    return %arg0, %c0_i32 : i32, i32
  }
  func.func @transform_4(%arg0: i32) -> (i32, i32) {
    %c0_i32 = arith.constant 0 : i32
    %c0_i32_0 = arith.constant 0 : i32
    return %arg0, %c0_i32 : i32, i32
  }
}

</mosaic_0001>

<llo_original>
// kernel: module_forward.1
$region0: #{module_forward.1}
  #allocation0 [shape = 'u32[]', space=smem, size = 0x4, offset = 0x4, fixed_abs, tag = 'smem constant byte address 0x4 - core index']
  #allocation1 [shape = 'u32[144,128]{1,0:T(1,128)}', space=vmem, size = 0x12000, scoped, tag = 'internal scratch']
  %s0 = inlined_call_operand.vmem [shape: f32[3072,49], index: 0, kind: input, shape index: {}]
  %s1 = inlined_call_operand.vmem [shape: bf16[512,3072], index: 1, kind: input, shape index: {}]
  %s2 = inlined_call_operand.vmem [shape: f32[512,1], index: 2, kind: input, shape index: {}]
  %s3 = inlined_call_operand.vmem [shape: f32[512,1], index: 3, kind: input, shape index: {}]
  %s4 = inlined_call_operand.vmem [shape: f32[512,49], index: 4, kind: output, shape index: {}]
  %s5 = sld [smem:[#allocation0]]
  $region49: #{module_forward.1} parent=0
    _
  %s7 = ssub.s32 1, %s5
  %s8 = scalar_select 0, %s7, %s5
  loop: start=0, step=1, limit=4
  $region2: #{module_forward.1} parent=0 // loop_pre_header
    _
  $region3: #{module_forward.1} parent=0 // loop_header
    %s10 = sphi 0, %s14
    %p11 = scmp.ge.s32.totalorder %s10, 4
    %s18 = sphi 0, %s18
    %s20 = sphi 0, %s18
    %s21 = sphi 0, %s20
    %s35 = sphi 0, %s21
    %s41 = sphi 0, %s43
    %s44 = sphi 0, %s41
    %s45 = sphi 0, %s44
    %s61 = sphi 0, %s45
    %s67 = sphi 0, %s69
    %s70 = sphi 0, %s67
    %s71 = sphi 0, %s70
    %s87 = sphi 0, %s71
    %s93 = sphi 0, %s95
    %s96 = sphi 0, %s93
    %s97 = sphi 0, %s96
    %s113 = sphi 0, %s97
    %s119 = sphi 0, %s121
    %s122 = sphi 0, %s119
    %s123 = sphi 0, %s122
    %s139 = sphi 0, %s123
  $region4: #{module_forward.1} parent=0 // loop_header_branch
    %13 = sbr.rel (%p11) target = $region8
  $region5: #{module_forward.1} parent=0 // loop_body
    %s15 = ssub.s32 %s10, 1
    %s16 = ssub.s32 %s10, 2
    %s17 = sadd.s32 %s10, 1
    %s19 = sadd.s32 %s18, 1
    %p22 = scmp.eq.s32.totalorder %s10, 1
    %p23 = scmp.ne.s32.totalorder %s18, %s20
    %p24 = scmp.eq.s32.totalorder %s10, 0
    %p25 = por %p23, %p24
    %p26 = scmp.ne.s32.totalorder %s18, %s20
    %p27 = scmp.eq.s32.totalorder %s15, 1
    %p28 = por %p26, %p27
    %p29 = scmp.ne.s32.totalorder %s20, %s21
    %p30 = scmp.eq.s32.totalorder %s15, 0
    %p31 = por %p29, %p30
    %p32 = scmp.ne.s32.totalorder %s20, %s21
    %p33 = scmp.eq.s32.totalorder %s16, 1
    %p34 = por %p32, %p33
    %p36 = scmp.ne.s32.totalorder %s21, %s35
    %p37 = scmp.eq.s32.totalorder %s16, 0
    %p38 = por %p36, %p37
    %s39 = ssub.s32 %s10, %s17
    %p40 = scmp.eq.s32.totalorder %s39, 0
    %s42 = sadd.s32 %s41, 1
    %s43 = scalar_select %p40, %s41, %s42
    %p46 = pneg %p40
    %p47 = scmp.eq.s32.totalorder %s10, 1
    %p48 = por %p46, %p47
    %p49 = scmp.ne.s32.totalorder %s41, %s44
    %p50 = scmp.eq.s32.totalorder %s10, 0
    %p51 = por %p49, %p50
    %p52 = scmp.ne.s32.totalorder %s41, %s44
    %p53 = scmp.eq.s32.totalorder %s15, 1
    %p54 = por %p52, %p53
    %p55 = scmp.ne.s32.totalorder %s44, %s45
    %p56 = scmp.eq.s32.totalorder %s15, 0
    %p57 = por %p55, %p56
    %p58 = scmp.ne.s32.totalorder %s44, %s45
    %p59 = scmp.eq.s32.totalorder %s16, 1
    %p60 = por %p58, %p59
    %p62 = scmp.ne.s32.totalorder %s45, %s61
    %p63 = scmp.eq.s32.totalorder %s16, 0
    %p64 = por %p62, %p63
    %s65 = ssub.s32 %s10, %s17
    %p66 = scmp.eq.s32.totalorder %s65, 0
    %s68 = sadd.s32 %s67, 1
    %s69 = scalar_select %p66, %s67, %s68
    %p72 = pneg %p66
    %p73 = scmp.eq.s32.totalorder %s10, 1
    %p74 = por %p72, %p73
    %p75 = scmp.ne.s32.totalorder %s67, %s70
    %p76 = scmp.eq.s32.totalorder %s10, 0
    %p77 = por %p75, %p76
    %p78 = scmp.ne.s32.totalorder %s67, %s70
    %p79 = scmp.eq.s32.totalorder %s15, 1
    %p80 = por %p78, %p79
    %p81 = scmp.ne.s32.totalorder %s70, %s71
    %p82 = scmp.eq.s32.totalorder %s15, 0
    %p83 = por %p81, %p82
    %p84 = scmp.ne.s32.totalorder %s70, %s71
    %p85 = scmp.eq.s32.totalorder %s16, 1
    %p86 = por %p84, %p85
    %p88 = scmp.ne.s32.totalorder %s71, %s87
    %p89 = scmp.eq.s32.totalorder %s16, 0
    %p90 = por %p88, %p89
    %s91 = ssub.s32 %s10, %s17
    %p92 = scmp.eq.s32.totalorder %s91, 0
    %s94 = sadd.s32 %s93, 1
    %s95 = scalar_select %p92, %s93, %s94
    %p98 = pneg %p92
    %p99 = scmp.eq.s32.totalorder %s10, 1
    %p100 = por %p98, %p99
    %p101 = scmp.ne.s32.totalorder %s93, %s96
    %p102 = scmp.eq.s32.totalorder %s10, 0
    %p103 = por %p101, %p102
    %p104 = scmp.ne.s32.totalorder %s93, %s96
    %p105 = scmp.eq.s32.totalorder %s15, 1
    %p106 = por %p104, %p105
    %p107 = scmp.ne.s32.totalorder %s96, %s97
    %p108 = scmp.eq.s32.totalorder %s15, 0
    %p109 = por %p107, %p108
    %p110 = scmp.ne.s32.totalorder %s96, %s97
    %p111 = scmp.eq.s32.totalorder %s16, 1
    %p112 = por %p110, %p111
    %p114 = scmp.ne.s32.totalorder %s97, %s113
    %p115 = scmp.eq.s32.totalorder %s16, 0
    %p116 = por %p114, %p115
    %s117 = ssub.s32 %s10, %s17
    %p118 = scmp.eq.s32.totalorder %s117, 0
    %s120 = sadd.s32 %s119, 1
    %s121 = scalar_select %p118, %s119, %s120
    %p124 = pneg %p118
    %p125 = scmp.eq.s32.totalorder %s10, 1
    %p126 = por %p124, %p125
    %p127 = scmp.ne.s32.totalorder %s119, %s122
    %p128 = scmp.eq.s32.totalorder %s10, 0
    %p129 = por %p127, %p128
    %p130 = scmp.ne.s32.totalorder %s119, %s122
    %p131 = scmp.eq.s32.totalorder %s15, 1
    %p132 = por %p130, %p131
    %p133 = scmp.ne.s32.totalorder %s122, %s123
    %p134 = scmp.eq.s32.totalorder %s15, 0
    %p135 = por %p133, %p134
    %p136 = scmp.ne.s32.totalorder %s122, %s123
    %p137 = scmp.eq.s32.totalorder %s16, 1
    %p138 = por %p136, %p137
    %p140 = scmp.ne.s32.totalorder %s123, %s139
    %p141 = scmp.eq.s32.totalorder %s16, 0
    %p142 = por %p140, %p141
    %p143 = scmp.le.s32.totalorder 1, %s10
    %p144 = scmp.lt.s32.totalorder %s10, 3
    %p145 = pnand %p143, %p144
    %p146 = pneg %p145
    // Predicated region
    $region9: #{module_forward.1} parent=5 // pred_check
      _
    $region10: #{module_forward.1} parent=5 // pred_check_branch
      %148 = sbr.rel (%p145) target = $region12
    $region11: #{module_forward.1} parent=5 // pred_region
      %s149 = ssub.s32 %s10, 1
      // Predicated region
      $region13: #{module_forward.1} parent=11 // pred_check
        %p150 = pneg %p31
      $region14: #{module_forward.1} parent=11 // pred_check_branch
        %152 = sbr.rel (%p150) target = $region16
      $region15: #{module_forward.1} parent=11 // pred_region
        _
      $region16: #{module_forward.1} parent=11 // pred_fallthru
        _
    $region12: #{module_forward.1} parent=5 // pred_fallthru
      _
    %p153 = scmp.lt.s32.totalorder %s10, 2
    // Predicated region
    $region17: #{module_forward.1} parent=5 // pred_check
      %p154 = pneg %p153
    $region18: #{module_forward.1} parent=5 // pred_check_branch
      %156 = sbr.rel (%p154) target = $region20
    $region19: #{module_forward.1} parent=5 // pred_region
      // Predicated region
      $region21: #{module_forward.1} parent=19 // pred_check
        %p157 = pneg %p51
      $region22: #{module_forward.1} parent=19 // pred_check_branch
        %159 = sbr.rel (%p157) target = $region24
      $region23: #{module_forward.1} parent=19 // pred_region
        %s160 = smul.u32 32, %s10
        %p161 = scmp.lt.s32.totalorder %s160, 63
        %s162 = scalar_select %p161, %s160, 63
        %s163 = smul.addr %s162, 24
        %s164 = smul.addr %s163, 4
        %s165 = scalar_lea.vmem %s1, %s164
        %s166 = smul.u32 32, %s10
      $region24: #{module_forward.1} parent=19 // pred_fallthru
        _
      // Predicated region
      $region25: #{module_forward.1} parent=19 // pred_check
        %p167 = pneg %p77
      $region26: #{module_forward.1} parent=19 // pred_check_branch
        %169 = sbr.rel (%p167) target = $region28
      $region27: #{module_forward.1} parent=19 // pred_region
        %s170 = smul.u32 32, %s10
        %p171 = scmp.lt.s32.totalorder %s170, 63
        %s172 = scalar_select %p171, %s170, 63
        %s173 = smul.addr %s172, 8
        %s174 = scalar_lea.vmem %s2, %s173
        %s175 = smul.u32 32, %s10
      $region28: #{module_forward.1} parent=19 // pred_fallthru
        _
      // Predicated region
      $region29: #{module_forward.1} parent=19 // pred_check
        %p176 = pneg %p103
      $region30: #{module_forward.1} parent=19 // pred_check_branch
        %178 = sbr.rel (%p176) target = $region32
      $region31: #{module_forward.1} parent=19 // pred_region
        %s179 = smul.u32 32, %s10
        %p180 = scmp.lt.s32.totalorder %s179, 63
        %s181 = scalar_select %p180, %s179, 63
        %s182 = smul.addr %s181, 8
        %s183 = scalar_lea.vmem %s3, %s182
        %s184 = smul.u32 32, %s10
      $region32: #{module_forward.1} parent=19 // pred_fallthru
        _
    $region20: #{module_forward.1} parent=5 // pred_fallthru
      _
    %p185 = scmp.le.s32.totalorder 1, %s10
    %p186 = scmp.lt.s32.totalorder %s10, 3
    %p187 = pnand %p185, %p186
    %p188 = pneg %p187
    // Predicated region
    $region33: #{module_forward.1} parent=5 // pred_check
      _
    $region34: #{module_forward.1} parent=5 // pred_check_branch
      %190 = sbr.rel (%p187) target = $region36
    $region35: #{module_forward.1} parent=5 // pred_region
      %s191 = ssub.s32 %s10, 1
      %p192 = pneg %p31
      %p193 = pneg %p28
      %s194 = smul.u32 32, %s15
      %p195 = scmp.lt.s32.totalorder %s194, 63
      %s196 = scalar_select %p195, %s194, 63
      %s197 = smul.addr %s196, 24
      %s198 = smul.addr %s197, 4
      %s199 = scalar_lea.vmem %s1, %s198
      %p200 = pneg %p57
      %p201 = pneg %p54
      %s202 = smul.u32 32, %s15
      %p203 = scmp.lt.s32.totalorder %s202, 63
      %s204 = scalar_select %p203, %s202, 63
      %s205 = smul.addr %s204, 8
      %s206 = scalar_lea.vmem %s2, %s205
      %p207 = pneg %p83
      %p208 = pneg %p80
      %s209 = smul.u32 32, %s15
      %p210 = scmp.lt.s32.totalorder %s209, 63
      %s211 = scalar_select %p210, %s209, 63
      %s212 = smul.addr %s211, 8
      %s213 = scalar_lea.vmem %s3, %s212
      %p214 = pneg %p109
      %p215 = pneg %p106
      %p216 = pneg %p135
      %p217 = pneg %p132
      %s218 = smul.u32 32, %s15
      %p219 = scmp.lt.s32.totalorder %s218, 63
      %s220 = scalar_select %p219, %s218, 63
      %s221 = smul.addr %s220, 8
      %s222 = scalar_lea.vmem %s4, %s221
      %s223 = smul.u32 32, %s15
      %p224 = scmp.lt.s32.totalorder %s223, 63
      %s225 = scalar_select %p224, %s223, 63
      %s226 = smul.addr %s225, 24
      %s227 = smul.addr %s226, 4
      %s228 = scalar_lea.vmem %s1, %s227
      %s229 = smul.u32 32, %s15
      %s230 = smul.u32 32, %s15
      %p231 = scmp.lt.s32.totalorder %s230, 63
      %s232 = scalar_select %p231, %s230, 63
      %s233 = smul.addr %s232, 8
      %s234 = scalar_lea.vmem %s2, %s233
      %s235 = smul.u32 32, %s15
      %s236 = smul.u32 32, %s15
      %p237 = scmp.lt.s32.totalorder %s236, 63
      %s238 = scalar_select %p237, %s236, 63
      %s239 = smul.addr %s238, 8
      %s240 = scalar_lea.vmem %s3, %s239
      %s241 = smul.u32 32, %s15
      %s242 = smul.u32 32, %s15
      %p243 = scmp.lt.s32.totalorder %s242, 63
      %s244 = scalar_select %p243, %s242, 63
      %s245 = smul.addr %s244, 8
      %s246 = scalar_lea.vmem %s4, %s245
      %s247 = smul.u32 32, %s15
      %v249 = vld [vmem:[%s228] sm:$0xff]
      %v250 = vld [vmem:[%s228 + $0x8] sm:$0xff]
      %v251 = vld [vmem:[%s228 + $0x10] sm:$0xff]
      %v252 = vld [vmem:[%s228 + $0x18] sm:$0xff]
      %v253 = vld [vmem:[%s228 + $0x20] sm:$0xff]
      %v254 = vld [vmem:[%s228 + $0x28] sm:$0xff]
      %v255 = vld [vmem:[%s228 + $0x30] sm:$0xff]
      %v256 = vld [vmem:[%s228 + $0x38] sm:$0xff]
      %v257 = vld [vmem:[%s228 + $0x40] sm:$0xff]
      %v258 = vld [vmem:[%s228 + $0x48] sm:$0xff]
      %v259 = vld [vmem:[%s228 + $0x50] sm:$0xff]
      %v260 = vld [vmem:[%s228 + $0x58] sm:$0xff]
      %v261 = vld [vmem:[%s228 + $0x60] sm:$0xff]
      %v262 = vld [vmem:[%s228 + $0x68] sm:$0xff]
      %v263 = vld [vmem:[%s228 + $0x70] sm:$0xff]
      %v264 = vld [vmem:[%s228 + $0x78] sm:$0xff]
      %v265 = vld [vmem:[%s228 + $0x80] sm:$0xff]
      %v266 = vld [vmem:[%s228 + $0x88] sm:$0xff]
      %v267 = vld [vmem:[%s228 + $0x90] sm:$0xff]
      %v268 = vld [vmem:[%s228 + $0x98] sm:$0xff]
      %v269 = vld [vmem:[%s228 + $0xa0] sm:$0xff]
      %v270 = vld [vmem:[%s228 + $0xa8] sm:$0xff]
      %v271 = vld [vmem:[%s228 + $0xb0] sm:$0xff]
      %v272 = vld [vmem:[%s228 + $0xb8] sm:$0xff]
      %v273 = vld [vmem:[%s228 + $0xc0] sm:$0xff]
      %v274 = vld [vmem:[%s228 + $0xc8] sm:$0xff]
      %v275 = vld [vmem:[%s228 + $0xd0] sm:$0xff]
      %v276 = vld [vmem:[%s228 + $0xd8] sm:$0xff]
      %v277 = vld [vmem:[%s228 + $0xe0] sm:$0xff]
      %v278 = vld [vmem:[%s228 + $0xe8] sm:$0xff]
      %v279 = vld [vmem:[%s228 + $0xf0] sm:$0xff]
      %v280 = vld [vmem:[%s228 + $0xf8] sm:$0xff]
      %v281 = vld [vmem:[%s228 + $0x100] sm:$0xff]
      %v282 = vld [vmem:[%s228 + $0x108] sm:$0xff]
      %v283 = vld [vmem:[%s228 + $0x110] sm:$0xff]
      %v284 = vld [vmem:[%s228 + $0x118] sm:$0xff]
      %v285 = vld [vmem:[%s228 + $0x120] sm:$0xff]
      %v286 = vld [vmem:[%s228 + $0x128] sm:$0xff]
      %v287 = vld [vmem:[%s228 + $0x130] sm:$0xff]
      %v288 = vld [vmem:[%s228 + $0x138] sm:$0xff]
      %v289 = vld [vmem:[%s228 + $0x140] sm:$0xff]
      %v290 = vld [vmem:[%s228 + $0x148] sm:$0xff]
      %v291 = vld [vmem:[%s228 + $0x150] sm:$0xff]
      %v292 = vld [vmem:[%s228 + $0x158] sm:$0xff]
      %v293 = vld [vmem:[%s228 + $0x160] sm:$0xff]
      %v294 = vld [vmem:[%s228 + $0x168] sm:$0xff]
      %v295 = vld [vmem:[%s228 + $0x170] sm:$0xff]
      %v296 = vld [vmem:[%s228 + $0x178] sm:$0xff]
      %v297 = vld [vmem:[%s228 + $0x180] sm:$0xff]
      %v298 = vld [vmem:[%s228 + $0x188] sm:$0xff]
      %v299 = vld [vmem:[%s228 + $0x190] sm:$0xff]
      %v300 = vld [vmem:[%s228 + $0x198] sm:$0xff]
      %v301 = vld [vmem:[%s228 + $0x1a0] sm:$0xff]
      %v302 = vld [vmem:[%s228 + $0x1a8] sm:$0xff]
      %v303 = vld [vmem:[%s228 + $0x1b0] sm:$0xff]
      %v304 = vld [vmem:[%s228 + $0x1b8] sm:$0xff]
      %v305 = vld [vmem:[%s228 + $0x1c0] sm:$0xff]
      %v306 = vld [vmem:[%s228 + $0x1c8] sm:$0xff]
      %v307 = vld [vmem:[%s228 + $0x1d0] sm:$0xff]
      %v308 = vld [vmem:[%s228 + $0x1d8] sm:$0xff]
      %v309 = vld [vmem:[%s228 + $0x1e0] sm:$0xff]
      %v310 = vld [vmem:[%s228 + $0x1e8] sm:$0xff]
      %v311 = vld [vmem:[%s228 + $0x1f0] sm:$0xff]
      %v312 = vld [vmem:[%s228 + $0x1f8] sm:$0xff]
      %v313 = vld [vmem:[%s228 + $0x200] sm:$0xff]
      %v314 = vld [vmem:[%s228 + $0x208] sm:$0xff]
      %v315 = vld [vmem:[%s228 + $0x210] sm:$0xff]
      %v316 = vld [vmem:[%s228 + $0x218] sm:$0xff]
      %v317 = vld [vmem:[%s228 + $0x220] sm:$0xff]
      %v318 = vld [vmem:[%s228 + $0x228] sm:$0xff]
      %v319 = vld [vmem:[%s228 + $0x230] sm:$0xff]
      %v320 = vld [vmem:[%s228 + $0x238] sm:$0xff]
      %v321 = vld [vmem:[%s228 + $0x240] sm:$0xff]
      %v322 = vld [vmem:[%s228 + $0x248] sm:$0xff]
      %v323 = vld [vmem:[%s228 + $0x250] sm:$0xff]
      %v324 = vld [vmem:[%s228 + $0x258] sm:$0xff]
      %v325 = vld [vmem:[%s228 + $0x260] sm:$0xff]
      %v326 = vld [vmem:[%s228 + $0x268] sm:$0xff]
      %v327 = vld [vmem:[%s228 + $0x270] sm:$0xff]
      %v328 = vld [vmem:[%s228 + $0x278] sm:$0xff]
      %v329 = vld [vmem:[%s228 + $0x280] sm:$0xff]
      %v330 = vld [vmem:[%s228 + $0x288] sm:$0xff]
      %v331 = vld [vmem:[%s228 + $0x290] sm:$0xff]
      %v332 = vld [vmem:[%s228 + $0x298] sm:$0xff]
      %v333 = vld [vmem:[%s228 + $0x2a0] sm:$0xff]
      %v334 = vld [vmem:[%s228 + $0x2a8] sm:$0xff]
      %v335 = vld [vmem:[%s228 + $0x2b0] sm:$0xff]
      %v336 = vld [vmem:[%s228 + $0x2b8] sm:$0xff]
      %v337 = vld [vmem:[%s228 + $0x2c0] sm:$0xff]
      %v338 = vld [vmem:[%s228 + $0x2c8] sm:$0xff]
      %v339 = vld [vmem:[%s228 + $0x2d0] sm:$0xff]
      %v340 = vld [vmem:[%s228 + $0x2d8] sm:$0xff]
      %v341 = vld [vmem:[%s228 + $0x2e0] sm:$0xff]
      %v342 = vld [vmem:[%s228 + $0x2e8] sm:$0xff]
      %v343 = vld [vmem:[%s228 + $0x2f0] sm:$0xff]
      %v344 = vld [vmem:[%s228 + $0x2f8] sm:$0xff]
      %v345 = vld [vmem:[%s228 + $0x300] sm:$0xff]
      %v346 = vld [vmem:[%s228 + $0x308] sm:$0xff]
      %v347 = vld [vmem:[%s228 + $0x310] sm:$0xff]
      %v348 = vld [vmem:[%s228 + $0x318] sm:$0xff]
      %v349 = vld [vmem:[%s228 + $0x320] sm:$0xff]
      %v350 = vld [vmem:[%s228 + $0x328] sm:$0xff]
      %v351 = vld [vmem:[%s228 + $0x330] sm:$0xff]
      %v352 = vld [vmem:[%s228 + $0x338] sm:$0xff]
      %v353 = vld [vmem:[%s228 + $0x340] sm:$0xff]
      %v354 = vld [vmem:[%s228 + $0x348] sm:$0xff]
      %v355 = vld [vmem:[%s228 + $0x350] sm:$0xff]
      %v356 = vld [vmem:[%s228 + $0x358] sm:$0xff]
      %v357 = vld [vmem:[%s228 + $0x360] sm:$0xff]
      %v358 = vld [vmem:[%s228 + $0x368] sm:$0xff]
      %v359 = vld [vmem:[%s228 + $0x370] sm:$0xff]
      %v360 = vld [vmem:[%s228 + $0x378] sm:$0xff]
      %v361 = vld [vmem:[%s228 + $0x380] sm:$0xff]
      %v362 = vld [vmem:[%s228 + $0x388] sm:$0xff]
      %v363 = vld [vmem:[%s228 + $0x390] sm:$0xff]
      %v364 = vld [vmem:[%s228 + $0x398] sm:$0xff]
      %v365 = vld [vmem:[%s228 + $0x3a0] sm:$0xff]
      %v366 = vld [vmem:[%s228 + $0x3a8] sm:$0xff]
      %v367 = vld [vmem:[%s228 + $0x3b0] sm:$0xff]
      %v368 = vld [vmem:[%s228 + $0x3b8] sm:$0xff]
      %v369 = vld [vmem:[%s228 + $0x3c0] sm:$0xff]
      %v370 = vld [vmem:[%s228 + $0x3c8] sm:$0xff]
      %v371 = vld [vmem:[%s228 + $0x3d0] sm:$0xff]
      %v372 = vld [vmem:[%s228 + $0x3d8] sm:$0xff]
      %v373 = vld [vmem:[%s228 + $0x3e0] sm:$0xff]
      %v374 = vld [vmem:[%s228 + $0x3e8] sm:$0xff]
      %v375 = vld [vmem:[%s228 + $0x3f0] sm:$0xff]
      %v376 = vld [vmem:[%s228 + $0x3f8] sm:$0xff]
      %v377 = vld [vmem:[%s228 + $0x400] sm:$0xff]
      %v378 = vld [vmem:[%s228 + $0x408] sm:$0xff]
      %v379 = vld [vmem:[%s228 + $0x410] sm:$0xff]
      %v380 = vld [vmem:[%s228 + $0x418] sm:$0xff]
      %v381 = vld [vmem:[%s228 + $0x420] sm:$0xff]
      %v382 = vld [vmem:[%s228 + $0x428] sm:$0xff]
      %v383 = vld [vmem:[%s228 + $0x430] sm:$0xff]
      %v384 = vld [vmem:[%s228 + $0x438] sm:$0xff]
      %v385 = vld [vmem:[%s228 + $0x440] sm:$0xff]
      %v386 = vld [vmem:[%s228 + $0x448] sm:$0xff]
      %v387 = vld [vmem:[%s228 + $0x450] sm:$0xff]
      %v388 = vld [vmem:[%s228 + $0x458] sm:$0xff]
      %v389 = vld [vmem:[%s228 + $0x460] sm:$0xff]
      %v390 = vld [vmem:[%s228 + $0x468] sm:$0xff]
      %v391 = vld [vmem:[%s228 + $0x470] sm:$0xff]
      %v392 = vld [vmem:[%s228 + $0x478] sm:$0xff]
      %v393 = vld [vmem:[%s228 + $0x480] sm:$0xff]
      %v394 = vld [vmem:[%s228 + $0x488] sm:$0xff]
      %v395 = vld [vmem:[%s228 + $0x490] sm:$0xff]
      %v396 = vld [vmem:[%s228 + $0x498] sm:$0xff]
      %v397 = vld [vmem:[%s228 + $0x4a0] sm:$0xff]
      %v398 = vld [vmem:[%s228 + $0x4a8] sm:$0xff]
      %v399 = vld [vmem:[%s228 + $0x4b0] sm:$0xff]
      %v400 = vld [vmem:[%s228 + $0x4b8] sm:$0xff]
      %v401 = vld [vmem:[%s228 + $0x4c0] sm:$0xff]
      %v402 = vld [vmem:[%s228 + $0x4c8] sm:$0xff]
      %v403 = vld [vmem:[%s228 + $0x4d0] sm:$0xff]
      %v404 = vld [vmem:[%s228 + $0x4d8] sm:$0xff]
      %v405 = vld [vmem:[%s228 + $0x4e0] sm:$0xff]
      %v406 = vld [vmem:[%s228 + $0x4e8] sm:$0xff]
      %v407 = vld [vmem:[%s228 + $0x4f0] sm:$0xff]
      %v408 = vld [vmem:[%s228 + $0x4f8] sm:$0xff]
      %v409 = vld [vmem:[%s228 + $0x500] sm:$0xff]
      %v410 = vld [vmem:[%s228 + $0x508] sm:$0xff]
      %v411 = vld [vmem:[%s228 + $0x510] sm:$0xff]
      %v412 = vld [vmem:[%s228 + $0x518] sm:$0xff]
      %v413 = vld [vmem:[%s228 + $0x520] sm:$0xff]
      %v414 = vld [vmem:[%s228 + $0x528] sm:$0xff]
      %v415 = vld [vmem:[%s228 + $0x530] sm:$0xff]
      %v416 = vld [vmem:[%s228 + $0x538] sm:$0xff]
      %v417 = vld [vmem:[%s228 + $0x540] sm:$0xff]
      %v418 = vld [vmem:[%s228 + $0x548] sm:$0xff]
      %v419 = vld [vmem:[%s228 + $0x550] sm:$0xff]
      %v420 = vld [vmem:[%s228 + $0x558] sm:$0xff]
      %v421 = vld [vmem:[%s228 + $0x560] sm:$0xff]
      %v422 = vld [vmem:[%s228 + $0x568] sm:$0xff]
      %v423 = vld [vmem:[%s228 + $0x570] sm:$0xff]
      %v424 = vld [vmem:[%s228 + $0x578] sm:$0xff]
      %v425 = vld [vmem:[%s228 + $0x580] sm:$0xff]
      %v426 = vld [vmem:[%s228 + $0x588] sm:$0xff]
      %v427 = vld [vmem:[%s228 + $0x590] sm:$0xff]
      %v428 = vld [vmem:[%s228 + $0x598] sm:$0xff]
      %v429 = vld [vmem:[%s228 + $0x5a0] sm:$0xff]
      %v430 = vld [vmem:[%s228 + $0x5a8] sm:$0xff]
      %v431 = vld [vmem:[%s228 + $0x5b0] sm:$0xff]
      %v432 = vld [vmem:[%s228 + $0x5b8] sm:$0xff]
      %v433 = vld [vmem:[%s228 + $0x5c0] sm:$0xff]
      %v434 = vld [vmem:[%s228 + $0x5c8] sm:$0xff]
      %v435 = vld [vmem:[%s228 + $0x5d0] sm:$0xff]
      %v436 = vld [vmem:[%s228 + $0x5d8] sm:$0xff]
      %v437 = vld [vmem:[%s228 + $0x5e0] sm:$0xff]
      %v438 = vld [vmem:[%s228 + $0x5e8] sm:$0xff]
      %v439 = vld [vmem:[%s228 + $0x5f0] sm:$0xff]
      %v440 = vld [vmem:[%s228 + $0x5f8] sm:$0xff]
      %v441 = vld [vmem:[%s228 + $0x600] sm:$0xff]
      %v442 = vld [vmem:[%s228 + $0x608] sm:$0xff]
      %v443 = vld [vmem:[%s228 + $0x610] sm:$0xff]
      %v444 = vld [vmem:[%s228 + $0x618] sm:$0xff]
      %v445 = vld [vmem:[%s228 + $0x620] sm:$0xff]
      %v446 = vld [vmem:[%s228 + $0x628] sm:$0xff]
      %v447 = vld [vmem:[%s228 + $0x630] sm:$0xff]
      %v448 = vld [vmem:[%s228 + $0x638] sm:$0xff]
      %v449 = vld [vmem:[%s228 + $0x640] sm:$0xff]
      %v450 = vld [vmem:[%s228 + $0x648] sm:$0xff]
      %v451 = vld [vmem:[%s228 + $0x650] sm:$0xff]
      %v452 = vld [vmem:[%s228 + $0x658] sm:$0xff]
      %v453 = vld [vmem:[%s228 + $0x660] sm:$0xff]
      %v454 = vld [vmem:[%s228 + $0x668] sm:$0xff]
      %v455 = vld [vmem:[%s228 + $0x670] sm:$0xff]
      %v456 = vld [vmem:[%s228 + $0x678] sm:$0xff]
      %v457 = vld [vmem:[%s228 + $0x680] sm:$0xff]
      %v458 = vld [vmem:[%s228 + $0x688] sm:$0xff]
      %v459 = vld [vmem:[%s228 + $0x690] sm:$0xff]
      %v460 = vld [vmem:[%s228 + $0x698] sm:$0xff]
      %v461 = vld [vmem:[%s228 + $0x6a0] sm:$0xff]
      %v462 = vld [vmem:[%s228 + $0x6a8] sm:$0xff]
      %v463 = vld [vmem:[%s228 + $0x6b0] sm:$0xff]
      %v464 = vld [vmem:[%s228 + $0x6b8] sm:$0xff]
      %v465 = vld [vmem:[%s228 + $0x6c0] sm:$0xff]
      %v466 = vld [vmem:[%s228 + $0x6c8] sm:$0xff]
      %v467 = vld [vmem:[%s228 + $0x6d0] sm:$0xff]
      %v468 = vld [vmem:[%s228 + $0x6d8] sm:$0xff]
      %v469 = vld [vmem:[%s228 + $0x6e0] sm:$0xff]
      %v470 = vld [vmem:[%s228 + $0x6e8] sm:$0xff]
      %v471 = vld [vmem:[%s228 + $0x6f0] sm:$0xff]
      %v472 = vld [vmem:[%s228 + $0x6f8] sm:$0xff]
      %v473 = vld [vmem:[%s228 + $0x700] sm:$0xff]
      %v474 = vld [vmem:[%s228 + $0x708] sm:$0xff]
      %v475 = vld [vmem:[%s228 + $0x710] sm:$0xff]
      %v476 = vld [vmem:[%s228 + $0x718] sm:$0xff]
      %v477 = vld [vmem:[%s228 + $0x720] sm:$0xff]
      %v478 = vld [vmem:[%s228 + $0x728] sm:$0xff]
      %v479 = vld [vmem:[%s228 + $0x730] sm:$0xff]
      %v480 = vld [vmem:[%s228 + $0x738] sm:$0xff]
      %v481 = vld [vmem:[%s228 + $0x740] sm:$0xff]
      %v482 = vld [vmem:[%s228 + $0x748] sm:$0xff]
      %v483 = vld [vmem:[%s228 + $0x750] sm:$0xff]
      %v484 = vld [vmem:[%s228 + $0x758] sm:$0xff]
      %v485 = vld [vmem:[%s228 + $0x760] sm:$0xff]
      %v486 = vld [vmem:[%s228 + $0x768] sm:$0xff]
      %v487 = vld [vmem:[%s228 + $0x770] sm:$0xff]
      %v488 = vld [vmem:[%s228 + $0x778] sm:$0xff]
      %v489 = vld [vmem:[%s228 + $0x780] sm:$0xff]
      %v490 = vld [vmem:[%s228 + $0x788] sm:$0xff]
      %v491 = vld [vmem:[%s228 + $0x790] sm:$0xff]
      %v492 = vld [vmem:[%s228 + $0x798] sm:$0xff]
      %v493 = vld [vmem:[%s228 + $0x7a0] sm:$0xff]
      %v494 = vld [vmem:[%s228 + $0x7a8] sm:$0xff]
      %v495 = vld [vmem:[%s228 + $0x7b0] sm:$0xff]
      %v496 = vld [vmem:[%s228 + $0x7b8] sm:$0xff]
      %v497 = vld [vmem:[%s228 + $0x7c0] sm:$0xff]
      %v498 = vld [vmem:[%s228 + $0x7c8] sm:$0xff]
      %v499 = vld [vmem:[%s228 + $0x7d0] sm:$0xff]
      %v500 = vld [vmem:[%s228 + $0x7d8] sm:$0xff]
      %v501 = vld [vmem:[%s228 + $0x7e0] sm:$0xff]
      %v502 = vld [vmem:[%s228 + $0x7e8] sm:$0xff]
      %v503 = vld [vmem:[%s228 + $0x7f0] sm:$0xff]
      %v504 = vld [vmem:[%s228 + $0x7f8] sm:$0xff]
      %v505 = vld [vmem:[%s228 + $0x800] sm:$0xff]
      %v506 = vld [vmem:[%s228 + $0x808] sm:$0xff]
      %v507 = vld [vmem:[%s228 + $0x810] sm:$0xff]
      %v508 = vld [vmem:[%s228 + $0x818] sm:$0xff]
      %v509 = vld [vmem:[%s228 + $0x820] sm:$0xff]
      %v510 = vld [vmem:[%s228 + $0x828] sm:$0xff]
      %v511 = vld [vmem:[%s228 + $0x830] sm:$0xff]
      %v512 = vld [vmem:[%s228 + $0x838] sm:$0xff]
      %v513 = vld [vmem:[%s228 + $0x840] sm:$0xff]
      %v514 = vld [vmem:[%s228 + $0x848] sm:$0xff]
      %v515 = vld [vmem:[%s228 + $0x850] sm:$0xff]
      %v516 = vld [vmem:[%s228 + $0x858] sm:$0xff]
      %v517 = vld [vmem:[%s228 + $0x860] sm:$0xff]
      %v518 = vld [vmem:[%s228 + $0x868] sm:$0xff]
      %v519 = vld [vmem:[%s228 + $0x870] sm:$0xff]
      %v520 = vld [vmem:[%s228 + $0x878] sm:$0xff]
      %v521 = vld [vmem:[%s228 + $0x880] sm:$0xff]
      %v522 = vld [vmem:[%s228 + $0x888] sm:$0xff]
      %v523 = vld [vmem:[%s228 + $0x890] sm:$0xff]
      %v524 = vld [vmem:[%s228 + $0x898] sm:$0xff]
      %v525 = vld [vmem:[%s228 + $0x8a0] sm:$0xff]
      %v526 = vld [vmem:[%s228 + $0x8a8] sm:$0xff]
      %v527 = vld [vmem:[%s228 + $0x8b0] sm:$0xff]
      %v528 = vld [vmem:[%s228 + $0x8b8] sm:$0xff]
      %v529 = vld [vmem:[%s228 + $0x8c0] sm:$0xff]
      %v530 = vld [vmem:[%s228 + $0x8c8] sm:$0xff]
      %v531 = vld [vmem:[%s228 + $0x8d0] sm:$0xff]
      %v532 = vld [vmem:[%s228 + $0x8d8] sm:$0xff]
      %v533 = vld [vmem:[%s228 + $0x8e0] sm:$0xff]
      %v534 = vld [vmem:[%s228 + $0x8e8] sm:$0xff]
      %v535 = vld [vmem:[%s228 + $0x8f0] sm:$0xff]
      %v536 = vld [vmem:[%s228 + $0x8f8] sm:$0xff]
      %v537 = vld [vmem:[%s228 + $0x900] sm:$0xff]
      %v538 = vld [vmem:[%s228 + $0x908] sm:$0xff]
      %v539 = vld [vmem:[%s228 + $0x910] sm:$0xff]
      %v540 = vld [vmem:[%s228 + $0x918] sm:$0xff]
      %v541 = vld [vmem:[%s228 + $0x920] sm:$0xff]
      %v542 = vld [vmem:[%s228 + $0x928] sm:$0xff]
      %v543 = vld [vmem:[%s228 + $0x930] sm:$0xff]
      %v544 = vld [vmem:[%s228 + $0x938] sm:$0xff]
      %v545 = vld [vmem:[%s228 + $0x940] sm:$0xff]
      %v546 = vld [vmem:[%s228 + $0x948] sm:$0xff]
      %v547 = vld [vmem:[%s228 + $0x950] sm:$0xff]
      %v548 = vld [vmem:[%s228 + $0x958] sm:$0xff]
      %v549 = vld [vmem:[%s228 + $0x960] sm:$0xff]
      %v550 = vld [vmem:[%s228 + $0x968] sm:$0xff]
      %v551 = vld [vmem:[%s228 + $0x970] sm:$0xff]
      %v552 = vld [vmem:[%s228 + $0x978] sm:$0xff]
      %v553 = vld [vmem:[%s228 + $0x980] sm:$0xff]
      %v554 = vld [vmem:[%s228 + $0x988] sm:$0xff]
      %v555 = vld [vmem:[%s228 + $0x990] sm:$0xff]
      %v556 = vld [vmem:[%s228 + $0x998] sm:$0xff]
      %v557 = vld [vmem:[%s228 + $0x9a0] sm:$0xff]
      %v558 = vld [vmem:[%s228 + $0x9a8] sm:$0xff]
      %v559 = vld [vmem:[%s228 + $0x9b0] sm:$0xff]
      %v560 = vld [vmem:[%s228 + $0x9b8] sm:$0xff]
      %v561 = vld [vmem:[%s228 + $0x9c0] sm:$0xff]
      %v562 = vld [vmem:[%s228 + $0x9c8] sm:$0xff]
      %v563 = vld [vmem:[%s228 + $0x9d0] sm:$0xff]
      %v564 = vld [vmem:[%s228 + $0x9d8] sm:$0xff]
      %v565 = vld [vmem:[%s228 + $0x9e0] sm:$0xff]
      %v566 = vld [vmem:[%s228 + $0x9e8] sm:$0xff]
      %v567 = vld [vmem:[%s228 + $0x9f0] sm:$0xff]
      %v568 = vld [vmem:[%s228 + $0x9f8] sm:$0xff]
      %v569 = vld [vmem:[%s228 + $0xa00] sm:$0xff]
      %v570 = vld [vmem:[%s228 + $0xa08] sm:$0xff]
      %v571 = vld [vmem:[%s228 + $0xa10] sm:$0xff]
      %v572 = vld [vmem:[%s228 + $0xa18] sm:$0xff]
      %v573 = vld [vmem:[%s228 + $0xa20] sm:$0xff]
      %v574 = vld [vmem:[%s228 + $0xa28] sm:$0xff]
      %v575 = vld [vmem:[%s228 + $0xa30] sm:$0xff]
      %v576 = vld [vmem:[%s228 + $0xa38] sm:$0xff]
      %v577 = vld [vmem:[%s228 + $0xa40] sm:$0xff]
      %v578 = vld [vmem:[%s228 + $0xa48] sm:$0xff]
      %v579 = vld [vmem:[%s228 + $0xa50] sm:$0xff]
      %v580 = vld [vmem:[%s228 + $0xa58] sm:$0xff]
      %v581 = vld [vmem:[%s228 + $0xa60] sm:$0xff]
      %v582 = vld [vmem:[%s228 + $0xa68] sm:$0xff]
      %v583 = vld [vmem:[%s228 + $0xa70] sm:$0xff]
      %v584 = vld [vmem:[%s228 + $0xa78] sm:$0xff]
      %v585 = vld [vmem:[%s228 + $0xa80] sm:$0xff]
      %v586 = vld [vmem:[%s228 + $0xa88] sm:$0xff]
      %v587 = vld [vmem:[%s228 + $0xa90] sm:$0xff]
      %v588 = vld [vmem:[%s228 + $0xa98] sm:$0xff]
      %v589 = vld [vmem:[%s228 + $0xaa0] sm:$0xff]
      %v590 = vld [vmem:[%s228 + $0xaa8] sm:$0xff]
      %v591 = vld [vmem:[%s228 + $0xab0] sm:$0xff]
      %v592 = vld [vmem:[%s228 + $0xab8] sm:$0xff]
      %v593 = vld [vmem:[%s228 + $0xac0] sm:$0xff]
      %v594 = vld [vmem:[%s228 + $0xac8] sm:$0xff]
      %v595 = vld [vmem:[%s228 + $0xad0] sm:$0xff]
      %v596 = vld [vmem:[%s228 + $0xad8] sm:$0xff]
      %v597 = vld [vmem:[%s228 + $0xae0] sm:$0xff]
      %v598 = vld [vmem:[%s228 + $0xae8] sm:$0xff]
      %v599 = vld [vmem:[%s228 + $0xaf0] sm:$0xff]
      %v600 = vld [vmem:[%s228 + $0xaf8] sm:$0xff]
      %v601 = vld [vmem:[%s228 + $0xb00] sm:$0xff]
      %v602 = vld [vmem:[%s228 + $0xb08] sm:$0xff]
      %v603 = vld [vmem:[%s228 + $0xb10] sm:$0xff]
      %v604 = vld [vmem:[%s228 + $0xb18] sm:$0xff]
      %v605 = vld [vmem:[%s228 + $0xb20] sm:$0xff]
      %v606 = vld [vmem:[%s228 + $0xb28] sm:$0xff]
      %v607 = vld [vmem:[%s228 + $0xb30] sm:$0xff]
      %v608 = vld [vmem:[%s228 + $0xb38] sm:$0xff]
      %v609 = vld [vmem:[%s228 + $0xb40] sm:$0xff]
      %v610 = vld [vmem:[%s228 + $0xb48] sm:$0xff]
      %v611 = vld [vmem:[%s228 + $0xb50] sm:$0xff]
      %v612 = vld [vmem:[%s228 + $0xb58] sm:$0xff]
      %v613 = vld [vmem:[%s228 + $0xb60] sm:$0xff]
      %v614 = vld [vmem:[%s228 + $0xb68] sm:$0xff]
      %v615 = vld [vmem:[%s228 + $0xb70] sm:$0xff]
      %v616 = vld [vmem:[%s228 + $0xb78] sm:$0xff]
      %v617 = vld [vmem:[%s228 + $0xb80] sm:$0xff]
      %v618 = vld [vmem:[%s228 + $0xb88] sm:$0xff]
      %v619 = vld [vmem:[%s228 + $0xb90] sm:$0xff]
      %v620 = vld [vmem:[%s228 + $0xb98] sm:$0xff]
      %v621 = vld [vmem:[%s228 + $0xba0] sm:$0xff]
      %v622 = vld [vmem:[%s228 + $0xba8] sm:$0xff]
      %v623 = vld [vmem:[%s228 + $0xbb0] sm:$0xff]
      %v624 = vld [vmem:[%s228 + $0xbb8] sm:$0xff]
      %v625 = vld [vmem:[%s228 + $0xbc0] sm:$0xff]
      %v626 = vld [vmem:[%s228 + $0xbc8] sm:$0xff]
      %v627 = vld [vmem:[%s228 + $0xbd0] sm:$0xff]
      %v628 = vld [vmem:[%s228 + $0xbd8] sm:$0xff]
      %v629 = vld [vmem:[%s228 + $0xbe0] sm:$0xff]
      %v630 = vld [vmem:[%s228 + $0xbe8] sm:$0xff]
      %v631 = vld [vmem:[%s228 + $0xbf0] sm:$0xff]
      %v632 = vld [vmem:[%s228 + $0xbf8] sm:$0xff]
      %v633 = vld [vmem:[%s0] sm:$0xff]
      %v634 = vld [vmem:[%s0 + $0x8] sm:$0xff]
      %v635 = vld [vmem:[%s0 + $0x10] sm:$0xff]
      %v636 = vld [vmem:[%s0 + $0x18] sm:$0xff]
      %v637 = vld [vmem:[%s0 + $0x20] sm:$0xff]
      %v638 = vld [vmem:[%s0 + $0x28] sm:$0xff]
      %v639 = vld [vmem:[%s0 + $0x30] sm:$0xff]
      %v640 = vld [vmem:[%s0 + $0x38] sm:$0xff]
      %v641 = vld [vmem:[%s0 + $0x40] sm:$0xff]
      %v642 = vld [vmem:[%s0 + $0x48] sm:$0xff]
      %v643 = vld [vmem:[%s0 + $0x50] sm:$0xff]
      %v644 = vld [vmem:[%s0 + $0x58] sm:$0xff]
      %v645 = vld [vmem:[%s0 + $0x60] sm:$0xff]
      %v646 = vld [vmem:[%s0 + $0x68] sm:$0xff]
      %v647 = vld [vmem:[%s0 + $0x70] sm:$0xff]
      %v648 = vld [vmem:[%s0 + $0x78] sm:$0xff]
      %v649 = vld [vmem:[%s0 + $0x80] sm:$0xff]
      %v650 = vld [vmem:[%s0 + $0x88] sm:$0xff]
      %v651 = vld [vmem:[%s0 + $0x90] sm:$0xff]
      %v652 = vld [vmem:[%s0 + $0x98] sm:$0xff]
      %v653 = vld [vmem:[%s0 + $0xa0] sm:$0xff]
      %v654 = vld [vmem:[%s0 + $0xa8] sm:$0xff]
      %v655 = vld [vmem:[%s0 + $0xb0] sm:$0xff]
      %v656 = vld [vmem:[%s0 + $0xb8] sm:$0xff]
      %v657 = vld [vmem:[%s0 + $0xc0] sm:$0xff]
      %v658 = vld [vmem:[%s0 + $0xc8] sm:$0xff]
      %v659 = vld [vmem:[%s0 + $0xd0] sm:$0xff]
      %v660 = vld [vmem:[%s0 + $0xd8] sm:$0xff]
      %v661 = vld [vmem:[%s0 + $0xe0] sm:$0xff]
      %v662 = vld [vmem:[%s0 + $0xe8] sm:$0xff]
      %v663 = vld [vmem:[%s0 + $0xf0] sm:$0xff]
      %v664 = vld [vmem:[%s0 + $0xf8] sm:$0xff]
      %v665 = vld [vmem:[%s0 + $0x100] sm:$0xff]
      %v666 = vld [vmem:[%s0 + $0x108] sm:$0xff]
      %v667 = vld [vmem:[%s0 + $0x110] sm:$0xff]
      %v668 = vld [vmem:[%s0 + $0x118] sm:$0xff]
      %v669 = vld [vmem:[%s0 + $0x120] sm:$0xff]
      %v670 = vld [vmem:[%s0 + $0x128] sm:$0xff]
      %v671 = vld [vmem:[%s0 + $0x130] sm:$0xff]
      %v672 = vld [vmem:[%s0 + $0x138] sm:$0xff]
      %v673 = vld [vmem:[%s0 + $0x140] sm:$0xff]
      %v674 = vld [vmem:[%s0 + $0x148] sm:$0xff]
      %v675 = vld [vmem:[%s0 + $0x150] sm:$0xff]
      %v676 = vld [vmem:[%s0 + $0x158] sm:$0xff]
      %v677 = vld [vmem:[%s0 + $0x160] sm:$0xff]
      %v678 = vld [vmem:[%s0 + $0x168] sm:$0xff]
      %v679 = vld [vmem:[%s0 + $0x170] sm:$0xff]
      %v680 = vld [vmem:[%s0 + $0x178] sm:$0xff]
      %v681 = vld [vmem:[%s0 + $0x180] sm:$0xff]
      %v682 = vld [vmem:[%s0 + $0x188] sm:$0xff]
      %v683 = vld [vmem:[%s0 + $0x190] sm:$0xff]
      %v684 = vld [vmem:[%s0 + $0x198] sm:$0xff]
      %v685 = vld [vmem:[%s0 + $0x1a0] sm:$0xff]
      %v686 = vld [vmem:[%s0 + $0x1a8] sm:$0xff]
      %v687 = vld [vmem:[%s0 + $0x1b0] sm:$0xff]
      %v688 = vld [vmem:[%s0 + $0x1b8] sm:$0xff]
      %v689 = vld [vmem:[%s0 + $0x1c0] sm:$0xff]
      %v690 = vld [vmem:[%s0 + $0x1c8] sm:$0xff]
      %v691 = vld [vmem:[%s0 + $0x1d0] sm:$0xff]
      %v692 = vld [vmem:[%s0 + $0x1d8] sm:$0xff]
      %v693 = vld [vmem:[%s0 + $0x1e0] sm:$0xff]
      %v694 = vld [vmem:[%s0 + $0x1e8] sm:$0xff]
      %v695 = vld [vmem:[%s0 + $0x1f0] sm:$0xff]
      %v696 = vld [vmem:[%s0 + $0x1f8] sm:$0xff]
      %v697 = vld [vmem:[%s0 + $0x200] sm:$0xff]
      %v698 = vld [vmem:[%s0 + $0x208] sm:$0xff]
      %v699 = vld [vmem:[%s0 + $0x210] sm:$0xff]
      %v700 = vld [vmem:[%s0 + $0x218] sm:$0xff]
      %v701 = vld [vmem:[%s0 + $0x220] sm:$0xff]
      %v702 = vld [vmem:[%s0 + $0x228] sm:$0xff]
      %v703 = vld [vmem:[%s0 + $0x230] sm:$0xff]
      %v704 = vld [vmem:[%s0 + $0x238] sm:$0xff]
      %v705 = vld [vmem:[%s0 + $0x240] sm:$0xff]
      %v706 = vld [vmem:[%s0 + $0x248] sm:$0xff]
      %v707 = vld [vmem:[%s0 + $0x250] sm:$0xff]
      %v708 = vld [vmem:[%s0 + $0x258] sm:$0xff]
      %v709 = vld [vmem:[%s0 + $0x260] sm:$0xff]
      %v710 = vld [vmem:[%s0 + $0x268] sm:$0xff]
      %v711 = vld [vmem:[%s0 + $0x270] sm:$0xff]
      %v712 = vld [vmem:[%s0 + $0x278] sm:$0xff]
      %v713 = vld [vmem:[%s0 + $0x280] sm:$0xff]
      %v714 = vld [vmem:[%s0 + $0x288] sm:$0xff]
      %v715 = vld [vmem:[%s0 + $0x290] sm:$0xff]
      %v716 = vld [vmem:[%s0 + $0x298] sm:$0xff]
      %v717 = vld [vmem:[%s0 + $0x2a0] sm:$0xff]
      %v718 = vld [vmem:[%s0 + $0x2a8] sm:$0xff]
      %v719 = vld [vmem:[%s0 + $0x2b0] sm:$0xff]
      %v720 = vld [vmem:[%s0 + $0x2b8] sm:$0xff]
      %v721 = vld [vmem:[%s0 + $0x2c0] sm:$0xff]
      %v722 = vld [vmem:[%s0 + $0x2c8] sm:$0xff]
      %v723 = vld [vmem:[%s0 + $0x2d0] sm:$0xff]
      %v724 = vld [vmem:[%s0 + $0x2d8] sm:$0xff]
      %v725 = vld [vmem:[%s0 + $0x2e0] sm:$0xff]
      %v726 = vld [vmem:[%s0 + $0x2e8] sm:$0xff]
      %v727 = vld [vmem:[%s0 + $0x2f0] sm:$0xff]
      %v728 = vld [vmem:[%s0 + $0x2f8] sm:$0xff]
      %v729 = vld [vmem:[%s0 + $0x300] sm:$0xff]
      %v730 = vld [vmem:[%s0 + $0x308] sm:$0xff]
      %v731 = vld [vmem:[%s0 + $0x310] sm:$0xff]
      %v732 = vld [vmem:[%s0 + $0x318] sm:$0xff]
      %v733 = vld [vmem:[%s0 + $0x320] sm:$0xff]
      %v734 = vld [vmem:[%s0 + $0x328] sm:$0xff]
      %v735 = vld [vmem:[%s0 + $0x330] sm:$0xff]
      %v736 = vld [vmem:[%s0 + $0x338] sm:$0xff]
      %v737 = vld [vmem:[%s0 + $0x340] sm:$0xff]
      %v738 = vld [vmem:[%s0 + $0x348] sm:$0xff]
      %v739 = vld [vmem:[%s0 + $0x350] sm:$0xff]
      %v740 = vld [vmem:[%s0 + $0x358] sm:$0xff]
      %v741 = vld [vmem:[%s0 + $0x360] sm:$0xff]
      %v742 = vld [vmem:[%s0 + $0x368] sm:$0xff]
      %v743 = vld [vmem:[%s0 + $0x370] sm:$0xff]
      %v744 = vld [vmem:[%s0 + $0x378] sm:$0xff]
      %v745 = vld [vmem:[%s0 + $0x380] sm:$0xff]
      %v746 = vld [vmem:[%s0 + $0x388] sm:$0xff]
      %v747 = vld [vmem:[%s0 + $0x390] sm:$0xff]
      %v748 = vld [vmem:[%s0 + $0x398] sm:$0xff]
      %v749 = vld [vmem:[%s0 + $0x3a0] sm:$0xff]
      %v750 = vld [vmem:[%s0 + $0x3a8] sm:$0xff]
      %v751 = vld [vmem:[%s0 + $0x3b0] sm:$0xff]
      %v752 = vld [vmem:[%s0 + $0x3b8] sm:$0xff]
      %v753 = vld [vmem:[%s0 + $0x3c0] sm:$0xff]
      %v754 = vld [vmem:[%s0 + $0x3c8] sm:$0xff]
      %v755 = vld [vmem:[%s0 + $0x3d0] sm:$0xff]
      %v756 = vld [vmem:[%s0 + $0x3d8] sm:$0xff]
      %v757 = vld [vmem:[%s0 + $0x3e0] sm:$0xff]
      %v758 = vld [vmem:[%s0 + $0x3e8] sm:$0xff]
      %v759 = vld [vmem:[%s0 + $0x3f0] sm:$0xff]
      %v760 = vld [vmem:[%s0 + $0x3f8] sm:$0xff]
      %v761 = vld [vmem:[%s0 + $0x400] sm:$0xff]
      %v762 = vld [vmem:[%s0 + $0x408] sm:$0xff]
      %v763 = vld [vmem:[%s0 + $0x410] sm:$0xff]
      %v764 = vld [vmem:[%s0 + $0x418] sm:$0xff]
      %v765 = vld [vmem:[%s0 + $0x420] sm:$0xff]
      %v766 = vld [vmem:[%s0 + $0x428] sm:$0xff]
      %v767 = vld [vmem:[%s0 + $0x430] sm:$0xff]
      %v768 = vld [vmem:[%s0 + $0x438] sm:$0xff]
      %v769 = vld [vmem:[%s0 + $0x440] sm:$0xff]
      %v770 = vld [vmem:[%s0 + $0x448] sm:$0xff]
      %v771 = vld [vmem:[%s0 + $0x450] sm:$0xff]
      %v772 = vld [vmem:[%s0 + $0x458] sm:$0xff]
      %v773 = vld [vmem:[%s0 + $0x460] sm:$0xff]
      %v774 = vld [vmem:[%s0 + $0x468] sm:$0xff]
      %v775 = vld [vmem:[%s0 + $0x470] sm:$0xff]
      %v776 = vld [vmem:[%s0 + $0x478] sm:$0xff]
      %v777 = vld [vmem:[%s0 + $0x480] sm:$0xff]
      %v778 = vld [vmem:[%s0 + $0x488] sm:$0xff]
      %v779 = vld [vmem:[%s0 + $0x490] sm:$0xff]
      %v780 = vld [vmem:[%s0 + $0x498] sm:$0xff]
      %v781 = vld [vmem:[%s0 + $0x4a0] sm:$0xff]
      %v782 = vld [vmem:[%s0 + $0x4a8] sm:$0xff]
      %v783 = vld [vmem:[%s0 + $0x4b0] sm:$0xff]
      %v784 = vld [vmem:[%s0 + $0x4b8] sm:$0xff]
      %v785 = vld [vmem:[%s0 + $0x4c0] sm:$0xff]
      %v786 = vld [vmem:[%s0 + $0x4c8] sm:$0xff]
      %v787 = vld [vmem:[%s0 + $0x4d0] sm:$0xff]
      %v788 = vld [vmem:[%s0 + $0x4d8] sm:$0xff]
      %v789 = vld [vmem:[%s0 + $0x4e0] sm:$0xff]
      %v790 = vld [vmem:[%s0 + $0x4e8] sm:$0xff]
      %v791 = vld [vmem:[%s0 + $0x4f0] sm:$0xff]
      %v792 = vld [vmem:[%s0 + $0x4f8] sm:$0xff]
      %v793 = vld [vmem:[%s0 + $0x500] sm:$0xff]
      %v794 = vld [vmem:[%s0 + $0x508] sm:$0xff]
      %v795 = vld [vmem:[%s0 + $0x510] sm:$0xff]
      %v796 = vld [vmem:[%s0 + $0x518] sm:$0xff]
      %v797 = vld [vmem:[%s0 + $0x520] sm:$0xff]
      %v798 = vld [vmem:[%s0 + $0x528] sm:$0xff]
      %v799 = vld [vmem:[%s0 + $0x530] sm:$0xff]
      %v800 = vld [vmem:[%s0 + $0x538] sm:$0xff]
      %v801 = vld [vmem:[%s0 + $0x540] sm:$0xff]
      %v802 = vld [vmem:[%s0 + $0x548] sm:$0xff]
      %v803 = vld [vmem:[%s0 + $0x550] sm:$0xff]
      %v804 = vld [vmem:[%s0 + $0x558] sm:$0xff]
      %v805 = vld [vmem:[%s0 + $0x560] sm:$0xff]
      %v806 = vld [vmem:[%s0 + $0x568] sm:$0xff]
      %v807 = vld [vmem:[%s0 + $0x570] sm:$0xff]
      %v808 = vld [vmem:[%s0 + $0x578] sm:$0xff]
      %v809 = vld [vmem:[%s0 + $0x580] sm:$0xff]
      %v810 = vld [vmem:[%s0 + $0x588] sm:$0xff]
      %v811 = vld [vmem:[%s0 + $0x590] sm:$0xff]
      %v812 = vld [vmem:[%s0 + $0x598] sm:$0xff]
      %v813 = vld [vmem:[%s0 + $0x5a0] sm:$0xff]
      %v814 = vld [vmem:[%s0 + $0x5a8] sm:$0xff]
      %v815 = vld [vmem:[%s0 + $0x5b0] sm:$0xff]
      %v816 = vld [vmem:[%s0 + $0x5b8] sm:$0xff]
      %v817 = vld [vmem:[%s0 + $0x5c0] sm:$0xff]
      %v818 = vld [vmem:[%s0 + $0x5c8] sm:$0xff]
      %v819 = vld [vmem:[%s0 + $0x5d0] sm:$0xff]
      %v820 = vld [vmem:[%s0 + $0x5d8] sm:$0xff]
      %v821 = vld [vmem:[%s0 + $0x5e0] sm:$0xff]
      %v822 = vld [vmem:[%s0 + $0x5e8] sm:$0xff]
      %v823 = vld [vmem:[%s0 + $0x5f0] sm:$0xff]
      %v824 = vld [vmem:[%s0 + $0x5f8] sm:$0xff]
      %v825 = vld [vmem:[%s0 + $0x600] sm:$0xff]
      %v826 = vld [vmem:[%s0 + $0x608] sm:$0xff]
      %v827 = vld [vmem:[%s0 + $0x610] sm:$0xff]
      %v828 = vld [vmem:[%s0 + $0x618] sm:$0xff]
      %v829 = vld [vmem:[%s0 + $0x620] sm:$0xff]
      %v830 = vld [vmem:[%s0 + $0x628] sm:$0xff]
      %v831 = vld [vmem:[%s0 + $0x630] sm:$0xff]
      %v832 = vld [vmem:[%s0 + $0x638] sm:$0xff]
      %v833 = vld [vmem:[%s0 + $0x640] sm:$0xff]
      %v834 = vld [vmem:[%s0 + $0x648] sm:$0xff]
      %v835 = vld [vmem:[%s0 + $0x650] sm:$0xff]
      %v836 = vld [vmem:[%s0 + $0x658] sm:$0xff]
      %v837 = vld [vmem:[%s0 + $0x660] sm:$0xff]
      %v838 = vld [vmem:[%s0 + $0x668] sm:$0xff]
      %v839 = vld [vmem:[%s0 + $0x670] sm:$0xff]
      %v840 = vld [vmem:[%s0 + $0x678] sm:$0xff]
      %v841 = vld [vmem:[%s0 + $0x680] sm:$0xff]
      %v842 = vld [vmem:[%s0 + $0x688] sm:$0xff]
      %v843 = vld [vmem:[%s0 + $0x690] sm:$0xff]
      %v844 = vld [vmem:[%s0 + $0x698] sm:$0xff]
      %v845 = vld [vmem:[%s0 + $0x6a0] sm:$0xff]
      %v846 = vld [vmem:[%s0 + $0x6a8] sm:$0xff]
      %v847 = vld [vmem:[%s0 + $0x6b0] sm:$0xff]
      %v848 = vld [vmem:[%s0 + $0x6b8] sm:$0xff]
      %v849 = vld [vmem:[%s0 + $0x6c0] sm:$0xff]
      %v850 = vld [vmem:[%s0 + $0x6c8] sm:$0xff]
      %v851 = vld [vmem:[%s0 + $0x6d0] sm:$0xff]
      %v852 = vld [vmem:[%s0 + $0x6d8] sm:$0xff]
      %v853 = vld [vmem:[%s0 + $0x6e0] sm:$0xff]
      %v854 = vld [vmem:[%s0 + $0x6e8] sm:$0xff]
      %v855 = vld [vmem:[%s0 + $0x6f0] sm:$0xff]
      %v856 = vld [vmem:[%s0 + $0x6f8] sm:$0xff]
      %v857 = vld [vmem:[%s0 + $0x700] sm:$0xff]
      %v858 = vld [vmem:[%s0 + $0x708] sm:$0xff]
      %v859 = vld [vmem:[%s0 + $0x710] sm:$0xff]
      %v860 = vld [vmem:[%s0 + $0x718] sm:$0xff]
      %v861 = vld [vmem:[%s0 + $0x720] sm:$0xff]
      %v862 = vld [vmem:[%s0 + $0x728] sm:$0xff]
      %v863 = vld [vmem:[%s0 + $0x730] sm:$0xff]
      %v864 = vld [vmem:[%s0 + $0x738] sm:$0xff]
      %v865 = vld [vmem:[%s0 + $0x740] sm:$0xff]
      %v866 = vld [vmem:[%s0 + $0x748] sm:$0xff]
      %v867 = vld [vmem:[%s0 + $0x750] sm:$0xff]
      %v868 = vld [vmem:[%s0 + $0x758] sm:$0xff]
      %v869 = vld [vmem:[%s0 + $0x760] sm:$0xff]
      %v870 = vld [vmem:[%s0 + $0x768] sm:$0xff]
      %v871 = vld [vmem:[%s0 + $0x770] sm:$0xff]
      %v872 = vld [vmem:[%s0 + $0x778] sm:$0xff]
      %v873 = vld [vmem:[%s0 + $0x780] sm:$0xff]
      %v874 = vld [vmem:[%s0 + $0x788] sm:$0xff]
      %v875 = vld [vmem:[%s0 + $0x790] sm:$0xff]
      %v876 = vld [vmem:[%s0 + $0x798] sm:$0xff]
      %v877 = vld [vmem:[%s0 + $0x7a0] sm:$0xff]
      %v878 = vld [vmem:[%s0 + $0x7a8] sm:$0xff]
      %v879 = vld [vmem:[%s0 + $0x7b0] sm:$0xff]
      %v880 = vld [vmem:[%s0 + $0x7b8] sm:$0xff]
      %v881 = vld [vmem:[%s0 + $0x7c0] sm:$0xff]
      %v882 = vld [vmem:[%s0 + $0x7c8] sm:$0xff]
      %v883 = vld [vmem:[%s0 + $0x7d0] sm:$0xff]
      %v884 = vld [vmem:[%s0 + $0x7d8] sm:$0xff]
      %v885 = vld [vmem:[%s0 + $0x7e0] sm:$0xff]
      %v886 = vld [vmem:[%s0 + $0x7e8] sm:$0xff]
      %v887 = vld [vmem:[%s0 + $0x7f0] sm:$0xff]
      %v888 = vld [vmem:[%s0 + $0x7f8] sm:$0xff]
      %v889 = vld [vmem:[%s0 + $0x800] sm:$0xff]
      %v890 = vld [vmem:[%s0 + $0x808] sm:$0xff]
      %v891 = vld [vmem:[%s0 + $0x810] sm:$0xff]
      %v892 = vld [vmem:[%s0 + $0x818] sm:$0xff]
      %v893 = vld [vmem:[%s0 + $0x820] sm:$0xff]
      %v894 = vld [vmem:[%s0 + $0x828] sm:$0xff]
      %v895 = vld [vmem:[%s0 + $0x830] sm:$0xff]
      %v896 = vld [vmem:[%s0 + $0x838] sm:$0xff]
      %v897 = vld [vmem:[%s0 + $0x840] sm:$0xff]
      %v898 = vld [vmem:[%s0 + $0x848] sm:$0xff]
      %v899 = vld [vmem:[%s0 + $0x850] sm:$0xff]
      %v900 = vld [vmem:[%s0 + $0x858] sm:$0xff]
      %v901 = vld [vmem:[%s0 + $0x860] sm:$0xff]
      %v902 = vld [vmem:[%s0 + $0x868] sm:$0xff]
      %v903 = vld [vmem:[%s0 + $0x870] sm:$0xff]
      %v904 = vld [vmem:[%s0 + $0x878] sm:$0xff]
      %v905 = vld [vmem:[%s0 + $0x880] sm:$0xff]
      %v906 = vld [vmem:[%s0 + $0x888] sm:$0xff]
      %v907 = vld [vmem:[%s0 + $0x890] sm:$0xff]
      %v908 = vld [vmem:[%s0 + $0x898] sm:$0xff]
      %v909 = vld [vmem:[%s0 + $0x8a0] sm:$0xff]
      %v910 = vld [vmem:[%s0 + $0x8a8] sm:$0xff]
      %v911 = vld [vmem:[%s0 + $0x8b0] sm:$0xff]
      %v912 = vld [vmem:[%s0 + $0x8b8] sm:$0xff]
      %v913 = vld [vmem:[%s0 + $0x8c0] sm:$0xff]
      %v914 = vld [vmem:[%s0 + $0x8c8] sm:$0xff]
      %v915 = vld [vmem:[%s0 + $0x8d0] sm:$0xff]
      %v916 = vld [vmem:[%s0 + $0x8d8] sm:$0xff]
      %v917 = vld [vmem:[%s0 + $0x8e0] sm:$0xff]
      %v918 = vld [vmem:[%s0 + $0x8e8] sm:$0xff]
      %v919 = vld [vmem:[%s0 + $0x8f0] sm:$0xff]
      %v920 = vld [vmem:[%s0 + $0x8f8] sm:$0xff]
      %v921 = vld [vmem:[%s0 + $0x900] sm:$0xff]
      %v922 = vld [vmem:[%s0 + $0x908] sm:$0xff]
      %v923 = vld [vmem:[%s0 + $0x910] sm:$0xff]
      %v924 = vld [vmem:[%s0 + $0x918] sm:$0xff]
      %v925 = vld [vmem:[%s0 + $0x920] sm:$0xff]
      %v926 = vld [vmem:[%s0 + $0x928] sm:$0xff]
      %v927 = vld [vmem:[%s0 + $0x930] sm:$0xff]
      %v928 = vld [vmem:[%s0 + $0x938] sm:$0xff]
      %v929 = vld [vmem:[%s0 + $0x940] sm:$0xff]
      %v930 = vld [vmem:[%s0 + $0x948] sm:$0xff]
      %v931 = vld [vmem:[%s0 + $0x950] sm:$0xff]
      %v932 = vld [vmem:[%s0 + $0x958] sm:$0xff]
      %v933 = vld [vmem:[%s0 + $0x960] sm:$0xff]
      %v934 = vld [vmem:[%s0 + $0x968] sm:$0xff]
      %v935 = vld [vmem:[%s0 + $0x970] sm:$0xff]
      %v936 = vld [vmem:[%s0 + $0x978] sm:$0xff]
      %v937 = vld [vmem:[%s0 + $0x980] sm:$0xff]
      %v938 = vld [vmem:[%s0 + $0x988] sm:$0xff]
      %v939 = vld [vmem:[%s0 + $0x990] sm:$0xff]
      %v940 = vld [vmem:[%s0 + $0x998] sm:$0xff]
      %v941 = vld [vmem:[%s0 + $0x9a0] sm:$0xff]
      %v942 = vld [vmem:[%s0 + $0x9a8] sm:$0xff]
      %v943 = vld [vmem:[%s0 + $0x9b0] sm:$0xff]
      %v944 = vld [vmem:[%s0 + $0x9b8] sm:$0xff]
      %v945 = vld [vmem:[%s0 + $0x9c0] sm:$0xff]
      %v946 = vld [vmem:[%s0 + $0x9c8] sm:$0xff]
      %v947 = vld [vmem:[%s0 + $0x9d0] sm:$0xff]
      %v948 = vld [vmem:[%s0 + $0x9d8] sm:$0xff]
      %v949 = vld [vmem:[%s0 + $0x9e0] sm:$0xff]
      %v950 = vld [vmem:[%s0 + $0x9e8] sm:$0xff]
      %v951 = vld [vmem:[%s0 + $0x9f0] sm:$0xff]
      %v952 = vld [vmem:[%s0 + $0x9f8] sm:$0xff]
      %v953 = vld [vmem:[%s0 + $0xa00] sm:$0xff]
      %v954 = vld [vmem:[%s0 + $0xa08] sm:$0xff]
      %v955 = vld [vmem:[%s0 + $0xa10] sm:$0xff]
      %v956 = vld [vmem:[%s0 + $0xa18] sm:$0xff]
      %v957 = vld [vmem:[%s0 + $0xa20] sm:$0xff]
      %v958 = vld [vmem:[%s0 + $0xa28] sm:$0xff]
      %v959 = vld [vmem:[%s0 + $0xa30] sm:$0xff]
      %v960 = vld [vmem:[%s0 + $0xa38] sm:$0xff]
      %v961 = vld [vmem:[%s0 + $0xa40] sm:$0xff]
      %v962 = vld [vmem:[%s0 + $0xa48] sm:$0xff]
      %v963 = vld [vmem:[%s0 + $0xa50] sm:$0xff]
      %v964 = vld [vmem:[%s0 + $0xa58] sm:$0xff]
      %v965 = vld [vmem:[%s0 + $0xa60] sm:$0xff]
      %v966 = vld [vmem:[%s0 + $0xa68] sm:$0xff]
      %v967 = vld [vmem:[%s0 + $0xa70] sm:$0xff]
      %v968 = vld [vmem:[%s0 + $0xa78] sm:$0xff]
      %v969 = vld [vmem:[%s0 + $0xa80] sm:$0xff]
      %v970 = vld [vmem:[%s0 + $0xa88] sm:$0xff]
      %v971 = vld [vmem:[%s0 + $0xa90] sm:$0xff]
      %v972 = vld [vmem:[%s0 + $0xa98] sm:$0xff]
      %v973 = vld [vmem:[%s0 + $0xaa0] sm:$0xff]
      %v974 = vld [vmem:[%s0 + $0xaa8] sm:$0xff]
      %v975 = vld [vmem:[%s0 + $0xab0] sm:$0xff]
      %v976 = vld [vmem:[%s0 + $0xab8] sm:$0xff]
      %v977 = vld [vmem:[%s0 + $0xac0] sm:$0xff]
      %v978 = vld [vmem:[%s0 + $0xac8] sm:$0xff]
      %v979 = vld [vmem:[%s0 + $0xad0] sm:$0xff]
      %v980 = vld [vmem:[%s0 + $0xad8] sm:$0xff]
      %v981 = vld [vmem:[%s0 + $0xae0] sm:$0xff]
      %v982 = vld [vmem:[%s0 + $0xae8] sm:$0xff]
      %v983 = vld [vmem:[%s0 + $0xaf0] sm:$0xff]
      %v984 = vld [vmem:[%s0 + $0xaf8] sm:$0xff]
      %v985 = vld [vmem:[%s0 + $0xb00] sm:$0xff]
      %v986 = vld [vmem:[%s0 + $0xb08] sm:$0xff]
      %v987 = vld [vmem:[%s0 + $0xb10] sm:$0xff]
      %v988 = vld [vmem:[%s0 + $0xb18] sm:$0xff]
      %v989 = vld [vmem:[%s0 + $0xb20] sm:$0xff]
      %v990 = vld [vmem:[%s0 + $0xb28] sm:$0xff]
      %v991 = vld [vmem:[%s0 + $0xb30] sm:$0xff]
      %v992 = vld [vmem:[%s0 + $0xb38] sm:$0xff]
      %v993 = vld [vmem:[%s0 + $0xb40] sm:$0xff]
      %v994 = vld [vmem:[%s0 + $0xb48] sm:$0xff]
      %v995 = vld [vmem:[%s0 + $0xb50] sm:$0xff]
      %v996 = vld [vmem:[%s0 + $0xb58] sm:$0xff]
      %v997 = vld [vmem:[%s0 + $0xb60] sm:$0xff]
      %v998 = vld [vmem:[%s0 + $0xb68] sm:$0xff]
      %v999 = vld [vmem:[%s0 + $0xb70] sm:$0xff]
      %v1000 = vld [vmem:[%s0 + $0xb78] sm:$0xff]
      %v1001 = vld [vmem:[%s0 + $0xb80] sm:$0xff]
      %v1002 = vld [vmem:[%s0 + $0xb88] sm:$0xff]
      %v1003 = vld [vmem:[%s0 + $0xb90] sm:$0xff]
      %v1004 = vld [vmem:[%s0 + $0xb98] sm:$0xff]
      %v1005 = vld [vmem:[%s0 + $0xba0] sm:$0xff]
      %v1006 = vld [vmem:[%s0 + $0xba8] sm:$0xff]
      %v1007 = vld [vmem:[%s0 + $0xbb0] sm:$0xff]
      %v1008 = vld [vmem:[%s0 + $0xbb8] sm:$0xff]
      %v1009 = vld [vmem:[%s0 + $0xbc0] sm:$0xff]
      %v1010 = vld [vmem:[%s0 + $0xbc8] sm:$0xff]
      %v1011 = vld [vmem:[%s0 + $0xbd0] sm:$0xff]
      %v1012 = vld [vmem:[%s0 + $0xbd8] sm:$0xff]
      %v1013 = vld [vmem:[%s0 + $0xbe0] sm:$0xff]
      %v1014 = vld [vmem:[%s0 + $0xbe8] sm:$0xff]
      %v1015 = vld [vmem:[%s0 + $0xbf0] sm:$0xff]
      %v1016 = vld [vmem:[%s0 + $0xbf8] sm:$0xff]
      %v1017 = vpack.c.bf16 %v634, %v633
      %v1018 = vpack.c.bf16 %v636, %v635
      %v1019 = vpack.c.bf16 %v638, %v637
      %v1020 = vpack.c.bf16 %v640, %v639
      %v1021 = vpack.c.bf16 %v642, %v641
      %v1022 = vpack.c.bf16 %v644, %v643
      %v1023 = vpack.c.bf16 %v646, %v645
      %v1024 = vpack.c.bf16 %v648, %v647
      %v1025 = vpack.c.bf16 %v650, %v649
      %v1026 = vpack.c.bf16 %v652, %v651
      %v1027 = vpack.c.bf16 %v654, %v653
      %v1028 = vpack.c.bf16 %v656, %v655
      %v1029 = vpack.c.bf16 %v658, %v657
      %v1030 = vpack.c.bf16 %v660, %v659
      %v1031 = vpack.c.bf16 %v662, %v661
      %v1032 = vpack.c.bf16 %v664, %v663
      %v1033 = vpack.c.bf16 %v666, %v665
      %v1034 = vpack.c.bf16 %v668, %v667
      %v1035 = vpack.c.bf16 %v670, %v669
      %v1036 = vpack.c.bf16 %v672, %v671
      %v1037 = vpack.c.bf16 %v674, %v673
      %v1038 = vpack.c.bf16 %v676, %v675
      %v1039 = vpack.c.bf16 %v678, %v677
      %v1040 = vpack.c.bf16 %v680, %v679
      %v1041 = vpack.c.bf16 %v682, %v681
      %v1042 = vpack.c.bf16 %v684, %v683
      %v1043 = vpack.c.bf16 %v686, %v685
      %v1044 = vpack.c.bf16 %v688, %v687
      %v1045 = vpack.c.bf16 %v690, %v689
      %v1046 = vpack.c.bf16 %v692, %v691
      %v1047 = vpack.c.bf16 %v694, %v693
      %v1048 = vpack.c.bf16 %v696, %v695
      %v1049 = vpack.c.bf16 %v698, %v697
      %v1050 = vpack.c.bf16 %v700, %v699
      %v1051 = vpack.c.bf16 %v702, %v701
      %v1052 = vpack.c.bf16 %v704, %v703
      %v1053 = vpack.c.bf16 %v706, %v705
      %v1054 = vpack.c.bf16 %v708, %v707
      %v1055 = vpack.c.bf16 %v710, %v709
      %v1056 = vpack.c.bf16 %v712, %v711
      %v1057 = vpack.c.bf16 %v714, %v713
      %v1058 = vpack.c.bf16 %v716, %v715
      %v1059 = vpack.c.bf16 %v718, %v717
      %v1060 = vpack.c.bf16 %v720, %v719
      %v1061 = vpack.c.bf16 %v722, %v721
      %v1062 = vpack.c.bf16 %v724, %v723
      %v1063 = vpack.c.bf16 %v726, %v725
      %v1064 = vpack.c.bf16 %v728, %v727
      %v1065 = vpack.c.bf16 %v730, %v729
      %v1066 = vpack.c.bf16 %v732, %v731
      %v1067 = vpack.c.bf16 %v734, %v733
      %v1068 = vpack.c.bf16 %v736, %v735
      %v1069 = vpack.c.bf16 %v738, %v737
      %v1070 = vpack.c.bf16 %v740, %v739
      %v1071 = vpack.c.bf16 %v742, %v741
      %v1072 = vpack.c.bf16 %v744, %v743
      %v1073 = vpack.c.bf16 %v746, %v745
      %v1074 = vpack.c.bf16 %v748, %v747
      %v1075 = vpack.c.bf16 %v750, %v749
      %v1076 = vpack.c.bf16 %v752, %v751
      %v1077 = vpack.c.bf16 %v754, %v753
      %v1078 = vpack.c.bf16 %v756, %v755
      %v1079 = vpack.c.bf16 %v758, %v757
      %v1080 = vpack.c.bf16 %v760, %v759
      %v1081 = vpack.c.bf16 %v762, %v761
      %v1082 = vpack.c.bf16 %v764, %v763
      %v1083 = vpack.c.bf16 %v766, %v765
      %v1084 = vpack.c.bf16 %v768, %v767
      %v1085 = vpack.c.bf16 %v770, %v769
      %v1086 = vpack.c.bf16 %v772, %v771
      %v1087 = vpack.c.bf16 %v774, %v773
      %v1088 = vpack.c.bf16 %v776, %v775
      %v1089 = vpack.c.bf16 %v778, %v777
      %v1090 = vpack.c.bf16 %v780, %v779
      %v1091 = vpack.c.bf16 %v782, %v781
      %v1092 = vpack.c.bf16 %v784, %v783
      %v1093 = vpack.c.bf16 %v786, %v785
      %v1094 = vpack.c.bf16 %v788, %v787
      %v1095 = vpack.c.bf16 %v790, %v789
      %v1096 = vpack.c.bf16 %v792, %v791
      %v1097 = vpack.c.bf16 %v794, %v793
      %v1098 = vpack.c.bf16 %v796, %v795
      %v1099 = vpack.c.bf16 %v798, %v797
      %v1100 = vpack.c.bf16 %v800, %v799
      %v1101 = vpack.c.bf16 %v802, %v801
      %v1102 = vpack.c.bf16 %v804, %v803
      %v1103 = vpack.c.bf16 %v806, %v805
      %v1104 = vpack.c.bf16 %v808, %v807
      %v1105 = vpack.c.bf16 %v810, %v809
      %v1106 = vpack.c.bf16 %v812, %v811
      %v1107 = vpack.c.bf16 %v814, %v813
      %v1108 = vpack.c.bf16 %v816, %v815
      %v1109 = vpack.c.bf16 %v818, %v817
      %v1110 = vpack.c.bf16 %v820, %v819
      %v1111 = vpack.c.bf16 %v822, %v821
      %v1112 = vpack.c.bf16 %v824, %v823
      %v1113 = vpack.c.bf16 %v826, %v825
      %v1114 = vpack.c.bf16 %v828, %v827
      %v1115 = vpack.c.bf16 %v830, %v829
      %v1116 = vpack.c.bf16 %v832, %v831
      %v1117 = vpack.c.bf16 %v834, %v833
      %v1118 = vpack.c.bf16 %v836, %v835
      %v1119 = vpack.c.bf16 %v838, %v837
      %v1120 = vpack.c.bf16 %v840, %v839
      %v1121 = vpack.c.bf16 %v842, %v841
      %v1122 = vpack.c.bf16 %v844, %v843
      %v1123 = vpack.c.bf16 %v846, %v845
      %v1124 = vpack.c.bf16 %v848, %v847
      %v1125 = vpack.c.bf16 %v850, %v849
      %v1126 = vpack.c.bf16 %v852, %v851
      %v1127 = vpack.c.bf16 %v854, %v853
      %v1128 = vpack.c.bf16 %v856, %v855
      %v1129 = vpack.c.bf16 %v858, %v857
      %v1130 = vpack.c.bf16 %v860, %v859
      %v1131 = vpack.c.bf16 %v862, %v861
      %v1132 = vpack.c.bf16 %v864, %v863
      %v1133 = vpack.c.bf16 %v866, %v865
      %v1134 = vpack.c.bf16 %v868, %v867
      %v1135 = vpack.c.bf16 %v870, %v869
      %v1136 = vpack.c.bf16 %v872, %v871
      %v1137 = vpack.c.bf16 %v874, %v873
      %v1138 = vpack.c.bf16 %v876, %v875
      %v1139 = vpack.c.bf16 %v878, %v877
      %v1140 = vpack.c.bf16 %v880, %v879
      %v1141 = vpack.c.bf16 %v882, %v881
      %v1142 = vpack.c.bf16 %v884, %v883
      %v1143 = vpack.c.bf16 %v886, %v885
      %v1144 = vpack.c.bf16 %v888, %v887
      %v1145 = vpack.c.bf16 %v890, %v889
      %v1146 = vpack.c.bf16 %v892, %v891
      %v1147 = vpack.c.bf16 %v894, %v893
      %v1148 = vpack.c.bf16 %v896, %v895
      %v1149 = vpack.c.bf16 %v898, %v897
      %v1150 = vpack.c.bf16 %v900, %v899
      %v1151 = vpack.c.bf16 %v902, %v901
      %v1152 = vpack.c.bf16 %v904, %v903
      %v1153 = vpack.c.bf16 %v906, %v905
      %v1154 = vpack.c.bf16 %v908, %v907
      %v1155 = vpack.c.bf16 %v910, %v909
      %v1156 = vpack.c.bf16 %v912, %v911
      %v1157 = vpack.c.bf16 %v914, %v913
      %v1158 = vpack.c.bf16 %v916, %v915
      %v1159 = vpack.c.bf16 %v918, %v917
      %v1160 = vpack.c.bf16 %v920, %v919
      %v1161 = vpack.c.bf16 %v922, %v921
      %v1162 = vpack.c.bf16 %v924, %v923
      %v1163 = vpack.c.bf16 %v926, %v925
      %v1164 = vpack.c.bf16 %v928, %v927
      %v1165 = vpack.c.bf16 %v930, %v929
      %v1166 = vpack.c.bf16 %v932, %v931
      %v1167 = vpack.c.bf16 %v934, %v933
      %v1168 = vpack.c.bf16 %v936, %v935
      %v1169 = vpack.c.bf16 %v938, %v937
      %v1170 = vpack.c.bf16 %v940, %v939
      %v1171 = vpack.c.bf16 %v942, %v941
      %v1172 = vpack.c.bf16 %v944, %v943
      %v1173 = vpack.c.bf16 %v946, %v945
      %v1174 = vpack.c.bf16 %v948, %v947
      %v1175 = vpack.c.bf16 %v950, %v949
      %v1176 = vpack.c.bf16 %v952, %v951
      %v1177 = vpack.c.bf16 %v954, %v953
      %v1178 = vpack.c.bf16 %v956, %v955
      %v1179 = vpack.c.bf16 %v958, %v957
      %v1180 = vpack.c.bf16 %v960, %v959
      %v1181 = vpack.c.bf16 %v962, %v961
      %v1182 = vpack.c.bf16 %v964, %v963
      %v1183 = vpack.c.bf16 %v966, %v965
      %v1184 = vpack.c.bf16 %v968, %v967
      %v1185 = vpack.c.bf16 %v970, %v969
      %v1186 = vpack.c.bf16 %v972, %v971
      %v1187 = vpack.c.bf16 %v974, %v973
      %v1188 = vpack.c.bf16 %v976, %v975
      %v1189 = vpack.c.bf16 %v978, %v977
      %v1190 = vpack.c.bf16 %v980, %v979
      %v1191 = vpack.c.bf16 %v982, %v981
      %v1192 = vpack.c.bf16 %v984, %v983
      %v1193 = vpack.c.bf16 %v986, %v985
      %v1194 = vpack.c.bf16 %v988, %v987
      %v1195 = vpack.c.bf16 %v990, %v989
      %v1196 = vpack.c.bf16 %v992, %v991
      %v1197 = vpack.c.bf16 %v994, %v993
      %v1198 = vpack.c.bf16 %v996, %v995
      %v1199 = vpack.c.bf16 %v998, %v997
      %v1200 = vpack.c.bf16 %v1000, %v999
      %v1201 = vpack.c.bf16 %v1002, %v1001
      %v1202 = vpack.c.bf16 %v1004, %v1003
      %v1203 = vpack.c.bf16 %v1006, %v1005
      %v1204 = vpack.c.bf16 %v1008, %v1007
      %v1205 = vpack.c.bf16 %v1010, %v1009
      %v1206 = vpack.c.bf16 %v1012, %v1011
      %v1207 = vpack.c.bf16 %v1014, %v1013
      %v1208 = vpack.c.bf16 %v1016, %v1015
      %v1593 = vunpack.c.l.b16 %v249
      %v1594 = vunpack.c.h.b16 %v249
      %v1595 = vunpack.c.l.b16 %v250
      %v1596 = vunpack.c.h.b16 %v250
      %v1597 = vunpack.c.l.b16 %v251
      %v1598 = vunpack.c.h.b16 %v251
      %v1599 = vunpack.c.l.b16 %v252
      %v1600 = vunpack.c.h.b16 %v252
      %v1601 = vunpack.c.l.b16 %v253
      %v1602 = vunpack.c.h.b16 %v253
      %v1603 = vunpack.c.l.b16 %v254
      %v1604 = vunpack.c.h.b16 %v254
      %v1605 = vunpack.c.l.b16 %v255
      %v1606 = vunpack.c.h.b16 %v255
      %v1607 = vunpack.c.l.b16 %v256
      %v1608 = vunpack.c.h.b16 %v256
      %v1609 = vunpack.c.l.b16 %v257
      %v1610 = vunpack.c.h.b16 %v257
      %v1611 = vunpack.c.l.b16 %v258
      %v1612 = vunpack.c.h.b16 %v258
      %v1613 = vunpack.c.l.b16 %v259
      %v1614 = vunpack.c.h.b16 %v259
      %v1615 = vunpack.c.l.b16 %v260
      %v1616 = vunpack.c.h.b16 %v260
      %v1617 = vunpack.c.l.b16 %v261
      %v1618 = vunpack.c.h.b16 %v261
      %v1619 = vunpack.c.l.b16 %v262
      %v1620 = vunpack.c.h.b16 %v262
      %v1621 = vunpack.c.l.b16 %v263
      %v1622 = vunpack.c.h.b16 %v263
      %v1623 = vunpack.c.l.b16 %v264
      %v1624 = vunpack.c.h.b16 %v264
      %v1625 = vunpack.c.l.b16 %v265
      %v1626 = vunpack.c.h.b16 %v265
      %v1627 = vunpack.c.l.b16 %v266
      %v1628 = vunpack.c.h.b16 %v266
      %v1629 = vunpack.c.l.b16 %v267
      %v1630 = vunpack.c.h.b16 %v267
      %v1631 = vunpack.c.l.b16 %v268
      %v1632 = vunpack.c.h.b16 %v268
      %v1633 = vunpack.c.l.b16 %v269
      %v1634 = vunpack.c.h.b16 %v269
      %v1635 = vunpack.c.l.b16 %v270
      %v1636 = vunpack.c.h.b16 %v270
      %v1637 = vunpack.c.l.b16 %v271
      %v1638 = vunpack.c.h.b16 %v271
      %v1639 = vunpack.c.l.b16 %v272
      %v1640 = vunpack.c.h.b16 %v272
      %v1641 = vunpack.c.l.b16 %v273
      %v1642 = vunpack.c.h.b16 %v273
      %v1643 = vunpack.c.l.b16 %v274
      %v1644 = vunpack.c.h.b16 %v274
      %v1645 = vunpack.c.l.b16 %v275
      %v1646 = vunpack.c.h.b16 %v275
      %v1647 = vunpack.c.l.b16 %v276
      %v1648 = vunpack.c.h.b16 %v276
      %v1649 = vunpack.c.l.b16 %v277
      %v1650 = vunpack.c.h.b16 %v277
      %v1651 = vunpack.c.l.b16 %v278
      %v1652 = vunpack.c.h.b16 %v278
      %v1653 = vunpack.c.l.b16 %v279
      %v1654 = vunpack.c.h.b16 %v279
      %v1655 = vunpack.c.l.b16 %v280
      %v1656 = vunpack.c.h.b16 %v280
      %v1657 = vunpack.c.l.b16 %v281
      %v1658 = vunpack.c.h.b16 %v281
      %v1659 = vunpack.c.l.b16 %v282
      %v1660 = vunpack.c.h.b16 %v282
      %v1661 = vunpack.c.l.b16 %v283
      %v1662 = vunpack.c.h.b16 %v283
      %v1663 = vunpack.c.l.b16 %v284
      %v1664 = vunpack.c.h.b16 %v284
      %v1665 = vunpack.c.l.b16 %v285
      %v1666 = vunpack.c.h.b16 %v285
      %v1667 = vunpack.c.l.b16 %v286
      %v1668 = vunpack.c.h.b16 %v286
      %v1669 = vunpack.c.l.b16 %v287
      %v1670 = vunpack.c.h.b16 %v287
      %v1671 = vunpack.c.l.b16 %v288
      %v1672 = vunpack.c.h.b16 %v288
      %v1673 = vunpack.c.l.b16 %v289
      %v1674 = vunpack.c.h.b16 %v289
      %v1675 = vunpack.c.l.b16 %v290
      %v1676 = vunpack.c.h.b16 %v290
      %v1677 = vunpack.c.l.b16 %v291
      %v1678 = vunpack.c.h.b16 %v291
      %v1679 = vunpack.c.l.b16 %v292
      %v1680 = vunpack.c.h.b16 %v292
      %v1681 = vunpack.c.l.b16 %v293
      %v1682 = vunpack.c.h.b16 %v293
      %v1683 = vunpack.c.l.b16 %v294
      %v1684 = vunpack.c.h.b16 %v294
      %v1685 = vunpack.c.l.b16 %v295
      %v1686 = vunpack.c.h.b16 %v295
      %v1687 = vunpack.c.l.b16 %v296
      %v1688 = vunpack.c.h.b16 %v296
      %v1689 = vunpack.c.l.b16 %v297
      %v1690 = vunpack.c.h.b16 %v297
      %v1691 = vunpack.c.l.b16 %v298
      %v1692 = vunpack.c.h.b16 %v298
      %v1693 = vunpack.c.l.b16 %v299
      %v1694 = vunpack.c.h.b16 %v299
      %v1695 = vunpack.c.l.b16 %v300
      %v1696 = vunpack.c.h.b16 %v300
      %v1697 = vunpack.c.l.b16 %v301
      %v1698 = vunpack.c.h.b16 %v301
      %v1699 = vunpack.c.l.b16 %v302
      %v1700 = vunpack.c.h.b16 %v302
      %v1701 = vunpack.c.l.b16 %v303
      %v1702 = vunpack.c.h.b16 %v303
      %v1703 = vunpack.c.l.b16 %v304
      %v1704 = vunpack.c.h.b16 %v304
      %v1705 = vunpack.c.l.b16 %v305
      %v1706 = vunpack.c.h.b16 %v305
      %v1707 = vunpack.c.l.b16 %v306
      %v1708 = vunpack.c.h.b16 %v306
      %v1709 = vunpack.c.l.b16 %v307
      %v1710 = vunpack.c.h.b16 %v307
      %v1711 = vunpack.c.l.b16 %v308
      %v1712 = vunpack.c.h.b16 %v308
      %v1713 = vunpack.c.l.b16 %v309
      %v1714 = vunpack.c.h.b16 %v309
      %v1715 = vunpack.c.l.b16 %v310
      %v1716 = vunpack.c.h.b16 %v310
      %v1717 = vunpack.c.l.b16 %v311
      %v1718 = vunpack.c.h.b16 %v311
      %v1719 = vunpack.c.l.b16 %v312
      %v1720 = vunpack.c.h.b16 %v312
      %v1721 = vunpack.c.l.b16 %v313
      %v1722 = vunpack.c.h.b16 %v313
      %v1723 = vunpack.c.l.b16 %v314
      %v1724 = vunpack.c.h.b16 %v314
      %v1725 = vunpack.c.l.b16 %v315
      %v1726 = vunpack.c.h.b16 %v315
      %v1727 = vunpack.c.l.b16 %v316
      %v1728 = vunpack.c.h.b16 %v316
      %v1729 = vunpack.c.l.b16 %v317
      %v1730 = vunpack.c.h.b16 %v317
      %v1731 = vunpack.c.l.b16 %v318
      %v1732 = vunpack.c.h.b16 %v318
      %v1733 = vunpack.c.l.b16 %v319
      %v1734 = vunpack.c.h.b16 %v319
      %v1735 = vunpack.c.l.b16 %v320
      %v1736 = vunpack.c.h.b16 %v320
      %v1737 = vunpack.c.l.b16 %v321
      %v1738 = vunpack.c.h.b16 %v321
      %v1739 = vunpack.c.l.b16 %v322
      %v1740 = vunpack.c.h.b16 %v322
      %v1741 = vunpack.c.l.b16 %v323
      %v1742 = vunpack.c.h.b16 %v323
      %v1743 = vunpack.c.l.b16 %v324
      %v1744 = vunpack.c.h.b16 %v324
      %v1745 = vunpack.c.l.b16 %v325
      %v1746 = vunpack.c.h.b16 %v325
      %v1747 = vunpack.c.l.b16 %v326
      %v1748 = vunpack.c.h.b16 %v326
      %v1749 = vunpack.c.l.b16 %v327
      %v1750 = vunpack.c.h.b16 %v327
      %v1751 = vunpack.c.l.b16 %v328
      %v1752 = vunpack.c.h.b16 %v328
      %v1753 = vunpack.c.l.b16 %v329
      %v1754 = vunpack.c.h.b16 %v329
      %v1755 = vunpack.c.l.b16 %v330
      %v1756 = vunpack.c.h.b16 %v330
      %v1757 = vunpack.c.l.b16 %v331
      %v1758 = vunpack.c.h.b16 %v331
      %v1759 = vunpack.c.l.b16 %v332
      %v1760 = vunpack.c.h.b16 %v332
      %v1761 = vunpack.c.l.b16 %v333
      %v1762 = vunpack.c.h.b16 %v333
      %v1763 = vunpack.c.l.b16 %v334
      %v1764 = vunpack.c.h.b16 %v334
      %v1765 = vunpack.c.l.b16 %v335
      %v1766 = vunpack.c.h.b16 %v335
      %v1767 = vunpack.c.l.b16 %v336
      %v1768 = vunpack.c.h.b16 %v336
      %v1769 = vunpack.c.l.b16 %v337
      %v1770 = vunpack.c.h.b16 %v337
      %v1771 = vunpack.c.l.b16 %v338
      %v1772 = vunpack.c.h.b16 %v338
      %v1773 = vunpack.c.l.b16 %v339
      %v1774 = vunpack.c.h.b16 %v339
      %v1775 = vunpack.c.l.b16 %v340
      %v1776 = vunpack.c.h.b16 %v340
      %v1777 = vunpack.c.l.b16 %v341
      %v1778 = vunpack.c.h.b16 %v341
      %v1779 = vunpack.c.l.b16 %v342
      %v1780 = vunpack.c.h.b16 %v342
      %v1781 = vunpack.c.l.b16 %v343
      %v1782 = vunpack.c.h.b16 %v343
      %v1783 = vunpack.c.l.b16 %v344
      %v1784 = vunpack.c.h.b16 %v344
      %v1785 = vunpack.c.l.b16 %v345
      %v1786 = vunpack.c.h.b16 %v345
      %v1787 = vunpack.c.l.b16 %v346
      %v1788 = vunpack.c.h.b16 %v346
      %v1789 = vunpack.c.l.b16 %v347
      %v1790 = vunpack.c.h.b16 %v347
      %v1791 = vunpack.c.l.b16 %v348
      %v1792 = vunpack.c.h.b16 %v348
      %v1793 = vunpack.c.l.b16 %v349
      %v1794 = vunpack.c.h.b16 %v349
      %v1795 = vunpack.c.l.b16 %v350
      %v1796 = vunpack.c.h.b16 %v350
      %v1797 = vunpack.c.l.b16 %v351
      %v1798 = vunpack.c.h.b16 %v351
      %v1799 = vunpack.c.l.b16 %v352
      %v1800 = vunpack.c.h.b16 %v352
      %v1801 = vunpack.c.l.b16 %v353
      %v1802 = vunpack.c.h.b16 %v353
      %v1803 = vunpack.c.l.b16 %v354
      %v1804 = vunpack.c.h.b16 %v354
      %v1805 = vunpack.c.l.b16 %v355
      %v1806 = vunpack.c.h.b16 %v355
      %v1807 = vunpack.c.l.b16 %v356
      %v1808 = vunpack.c.h.b16 %v356
      %v1809 = vunpack.c.l.b16 %v357
      %v1810 = vunpack.c.h.b16 %v357
      %v1811 = vunpack.c.l.b16 %v358
      %v1812 = vunpack.c.h.b16 %v358
      %v1813 = vunpack.c.l.b16 %v359
      %v1814 = vunpack.c.h.b16 %v359
      %v1815 = vunpack.c.l.b16 %v360
      %v1816 = vunpack.c.h.b16 %v360
      %v1817 = vunpack.c.l.b16 %v361
      %v1818 = vunpack.c.h.b16 %v361
      %v1819 = vunpack.c.l.b16 %v362
      %v1820 = vunpack.c.h.b16 %v362
      %v1821 = vunpack.c.l.b16 %v363
      %v1822 = vunpack.c.h.b16 %v363
      %v1823 = vunpack.c.l.b16 %v364
      %v1824 = vunpack.c.h.b16 %v364
      %v1825 = vunpack.c.l.b16 %v365
      %v1826 = vunpack.c.h.b16 %v365
      %v1827 = vunpack.c.l.b16 %v366
      %v1828 = vunpack.c.h.b16 %v366
      %v1829 = vunpack.c.l.b16 %v367
      %v1830 = vunpack.c.h.b16 %v367
      %v1831 = vunpack.c.l.b16 %v368
      %v1832 = vunpack.c.h.b16 %v368
      %v1833 = vunpack.c.l.b16 %v369
      %v1834 = vunpack.c.h.b16 %v369
      %v1835 = vunpack.c.l.b16 %v370
      %v1836 = vunpack.c.h.b16 %v370
      %v1837 = vunpack.c.l.b16 %v371
      %v1838 = vunpack.c.h.b16 %v371
      %v1839 = vunpack.c.l.b16 %v372
      %v1840 = vunpack.c.h.b16 %v372
      %v1841 = vunpack.c.l.b16 %v373
      %v1842 = vunpack.c.h.b16 %v373
      %v1843 = vunpack.c.l.b16 %v374
      %v1844 = vunpack.c.h.b16 %v374
      %v1845 = vunpack.c.l.b16 %v375
      %v1846 = vunpack.c.h.b16 %v375
      %v1847 = vunpack.c.l.b16 %v376
      %v1848 = vunpack.c.h.b16 %v376
      %v1849 = vunpack.c.l.b16 %v377
      %v1850 = vunpack.c.h.b16 %v377
      %v1851 = vunpack.c.l.b16 %v378
      %v1852 = vunpack.c.h.b16 %v378
      %v1853 = vunpack.c.l.b16 %v379
      %v1854 = vunpack.c.h.b16 %v379
      %v1855 = vunpack.c.l.b16 %v380
      %v1856 = vunpack.c.h.b16 %v380
      %v1857 = vunpack.c.l.b16 %v381
      %v1858 = vunpack.c.h.b16 %v381
      %v1859 = vunpack.c.l.b16 %v382
      %v1860 = vunpack.c.h.b16 %v382
      %v1861 = vunpack.c.l.b16 %v383
      %v1862 = vunpack.c.h.b16 %v383
      %v1863 = vunpack.c.l.b16 %v384
      %v1864 = vunpack.c.h.b16 %v384
      %v1865 = vunpack.c.l.b16 %v385
      %v1866 = vunpack.c.h.b16 %v385
      %v1867 = vunpack.c.l.b16 %v386
      %v1868 = vunpack.c.h.b16 %v386
      %v1869 = vunpack.c.l.b16 %v387
      %v1870 = vunpack.c.h.b16 %v387
      %v1871 = vunpack.c.l.b16 %v388
      %v1872 = vunpack.c.h.b16 %v388
      %v1873 = vunpack.c.l.b16 %v389
      %v1874 = vunpack.c.h.b16 %v389
      %v1875 = vunpack.c.l.b16 %v390
      %v1876 = vunpack.c.h.b16 %v390
      %v1877 = vunpack.c.l.b16 %v391
      %v1878 = vunpack.c.h.b16 %v391
      %v1879 = vunpack.c.l.b16 %v392
      %v1880 = vunpack.c.h.b16 %v392
      %v1881 = vunpack.c.l.b16 %v393
      %v1882 = vunpack.c.h.b16 %v393
      %v1883 = vunpack.c.l.b16 %v394
      %v1884 = vunpack.c.h.b16 %v394
      %v1885 = vunpack.c.l.b16 %v395
      %v1886 = vunpack.c.h.b16 %v395
      %v1887 = vunpack.c.l.b16 %v396
      %v1888 = vunpack.c.h.b16 %v396
      %v1889 = vunpack.c.l.b16 %v397
      %v1890 = vunpack.c.h.b16 %v397
      %v1891 = vunpack.c.l.b16 %v398
      %v1892 = vunpack.c.h.b16 %v398
      %v1893 = vunpack.c.l.b16 %v399
      %v1894 = vunpack.c.h.b16 %v399
      %v1895 = vunpack.c.l.b16 %v400
      %v1896 = vunpack.c.h.b16 %v400
      %v1897 = vunpack.c.l.b16 %v401
      %v1898 = vunpack.c.h.b16 %v401
      %v1899 = vunpack.c.l.b16 %v402
      %v1900 = vunpack.c.h.b16 %v402
      %v1901 = vunpack.c.l.b16 %v403
      %v1902 = vunpack.c.h.b16 %v403
      %v1903 = vunpack.c.l.b16 %v404
      %v1904 = vunpack.c.h.b16 %v404
      %v1905 = vunpack.c.l.b16 %v405
      %v1906 = vunpack.c.h.b16 %v405
      %v1907 = vunpack.c.l.b16 %v406
      %v1908 = vunpack.c.h.b16 %v406
      %v1909 = vunpack.c.l.b16 %v407
      %v1910 = vunpack.c.h.b16 %v407
      %v1911 = vunpack.c.l.b16 %v408
      %v1912 = vunpack.c.h.b16 %v408
      %v1913 = vunpack.c.l.b16 %v409
      %v1914 = vunpack.c.h.b16 %v409
      %v1915 = vunpack.c.l.b16 %v410
      %v1916 = vunpack.c.h.b16 %v410
      %v1917 = vunpack.c.l.b16 %v411
      %v1918 = vunpack.c.h.b16 %v411
      %v1919 = vunpack.c.l.b16 %v412
      %v1920 = vunpack.c.h.b16 %v412
      %v1921 = vunpack.c.l.b16 %v413
      %v1922 = vunpack.c.h.b16 %v413
      %v1923 = vunpack.c.l.b16 %v414
      %v1924 = vunpack.c.h.b16 %v414
      %v1925 = vunpack.c.l.b16 %v415
      %v1926 = vunpack.c.h.b16 %v415
      %v1927 = vunpack.c.l.b16 %v416
      %v1928 = vunpack.c.h.b16 %v416
      %v1929 = vunpack.c.l.b16 %v417
      %v1930 = vunpack.c.h.b16 %v417
      %v1931 = vunpack.c.l.b16 %v418
      %v1932 = vunpack.c.h.b16 %v418
      %v1933 = vunpack.c.l.b16 %v419
      %v1934 = vunpack.c.h.b16 %v419
      %v1935 = vunpack.c.l.b16 %v420
      %v1936 = vunpack.c.h.b16 %v420
      %v1937 = vunpack.c.l.b16 %v421
      %v1938 = vunpack.c.h.b16 %v421
      %v1939 = vunpack.c.l.b16 %v422
      %v1940 = vunpack.c.h.b16 %v422
      %v1941 = vunpack.c.l.b16 %v423
      %v1942 = vunpack.c.h.b16 %v423
      %v1943 = vunpack.c.l.b16 %v424
      %v1944 = vunpack.c.h.b16 %v424
      %v1945 = vunpack.c.l.b16 %v425
      %v1946 = vunpack.c.h.b16 %v425
      %v1947 = vunpack.c.l.b16 %v426
      %v1948 = vunpack.c.h.b16 %v426
      %v1949 = vunpack.c.l.b16 %v427
      %v1950 = vunpack.c.h.b16 %v427
      %v1951 = vunpack.c.l.b16 %v428
      %v1952 = vunpack.c.h.b16 %v428
      %v1953 = vunpack.c.l.b16 %v429
      %v1954 = vunpack.c.h.b16 %v429
      %v1955 = vunpack.c.l.b16 %v430
      %v1956 = vunpack.c.h.b16 %v430
      %v1957 = vunpack.c.l.b16 %v431
      %v1958 = vunpack.c.h.b16 %v431
      %v1959 = vunpack.c.l.b16 %v432
      %v1960 = vunpack.c.h.b16 %v432
      %v1961 = vunpack.c.l.b16 %v433
      %v1962 = vunpack.c.h.b16 %v433
      %v1963 = vunpack.c.l.b16 %v434
      %v1964 = vunpack.c.h.b16 %v434
      %v1965 = vunpack.c.l.b16 %v435
      %v1966 = vunpack.c.h.b16 %v435
      %v1967 = vunpack.c.l.b16 %v436
      %v1968 = vunpack.c.h.b16 %v436
      %v1969 = vunpack.c.l.b16 %v437
      %v1970 = vunpack.c.h.b16 %v437
      %v1971 = vunpack.c.l.b16 %v438
      %v1972 = vunpack.c.h.b16 %v438
      %v1973 = vunpack.c.l.b16 %v439
      %v1974 = vunpack.c.h.b16 %v439
      %v1975 = vunpack.c.l.b16 %v440
      %v1976 = vunpack.c.h.b16 %v440
      %v1977 = vunpack.c.l.b16 %v441
      %v1978 = vunpack.c.h.b16 %v441
      %v1979 = vunpack.c.l.b16 %v442
      %v1980 = vunpack.c.h.b16 %v442
      %v1981 = vunpack.c.l.b16 %v443
      %v1982 = vunpack.c.h.b16 %v443
      %v1983 = vunpack.c.l.b16 %v444
      %v1984 = vunpack.c.h.b16 %v444
      %v1985 = vunpack.c.l.b16 %v445
      %v1986 = vunpack.c.h.b16 %v445
      %v1987 = vunpack.c.l.b16 %v446
      %v1988 = vunpack.c.h.b16 %v446
      %v1989 = vunpack.c.l.b16 %v447
      %v1990 = vunpack.c.h.b16 %v447
      %v1991 = vunpack.c.l.b16 %v448
      %v1992 = vunpack.c.h.b16 %v448
      %v1993 = vunpack.c.l.b16 %v449
      %v1994 = vunpack.c.h.b16 %v449
      %v1995 = vunpack.c.l.b16 %v450
      %v1996 = vunpack.c.h.b16 %v450
      %v1997 = vunpack.c.l.b16 %v451
      %v1998 = vunpack.c.h.b16 %v451
      %v1999 = vunpack.c.l.b16 %v452
      %v2000 = vunpack.c.h.b16 %v452
      %v2001 = vunpack.c.l.b16 %v453
      %v2002 = vunpack.c.h.b16 %v453
      %v2003 = vunpack.c.l.b16 %v454
      %v2004 = vunpack.c.h.b16 %v454
      %v2005 = vunpack.c.l.b16 %v455
      %v2006 = vunpack.c.h.b16 %v455
      %v2007 = vunpack.c.l.b16 %v456
      %v2008 = vunpack.c.h.b16 %v456
      %v2009 = vunpack.c.l.b16 %v457
      %v2010 = vunpack.c.h.b16 %v457
      %v2011 = vunpack.c.l.b16 %v458
      %v2012 = vunpack.c.h.b16 %v458
      %v2013 = vunpack.c.l.b16 %v459
      %v2014 = vunpack.c.h.b16 %v459
      %v2015 = vunpack.c.l.b16 %v460
      %v2016 = vunpack.c.h.b16 %v460
      %v2017 = vunpack.c.l.b16 %v461
      %v2018 = vunpack.c.h.b16 %v461
      %v2019 = vunpack.c.l.b16 %v462
      %v2020 = vunpack.c.h.b16 %v462
      %v2021 = vunpack.c.l.b16 %v463
      %v2022 = vunpack.c.h.b16 %v463
      %v2023 = vunpack.c.l.b16 %v464
      %v2024 = vunpack.c.h.b16 %v464
      %v2025 = vunpack.c.l.b16 %v465
      %v2026 = vunpack.c.h.b16 %v465
      %v2027 = vunpack.c.l.b16 %v466
      %v2028 = vunpack.c.h.b16 %v466
      %v2029 = vunpack.c.l.b16 %v467
      %v2030 = vunpack.c.h.b16 %v467
      %v2031 = vunpack.c.l.b16 %v468
      %v2032 = vunpack.c.h.b16 %v468
      %v2033 = vunpack.c.l.b16 %v469
      %v2034 = vunpack.c.h.b16 %v469
      %v2035 = vunpack.c.l.b16 %v470
      %v2036 = vunpack.c.h.b16 %v470
      %v2037 = vunpack.c.l.b16 %v471
      %v2038 = vunpack.c.h.b16 %v471
      %v2039 = vunpack.c.l.b16 %v472
      %v2040 = vunpack.c.h.b16 %v472
      %v2041 = vunpack.c.l.b16 %v473
      %v2042 = vunpack.c.h.b16 %v473
      %v2043 = vunpack.c.l.b16 %v474
      %v2044 = vunpack.c.h.b16 %v474
      %v2045 = vunpack.c.l.b16 %v475
      %v2046 = vunpack.c.h.b16 %v475
      %v2047 = vunpack.c.l.b16 %v476
      %v2048 = vunpack.c.h.b16 %v476
      %v2049 = vunpack.c.l.b16 %v477
      %v2050 = vunpack.c.h.b16 %v477
      %v2051 = vunpack.c.l.b16 %v478
      %v2052 = vunpack.c.h.b16 %v478
      %v2053 = vunpack.c.l.b16 %v479
      %v2054 = vunpack.c.h.b16 %v479
      %v2055 = vunpack.c.l.b16 %v480
      %v2056 = vunpack.c.h.b16 %v480
      %v2057 = vunpack.c.l.b16 %v481
      %v2058 = vunpack.c.h.b16 %v481
      %v2059 = vunpack.c.l.b16 %v482
      %v2060 = vunpack.c.h.b16 %v482
      %v2061 = vunpack.c.l.b16 %v483
      %v2062 = vunpack.c.h.b16 %v483
      %v2063 = vunpack.c.l.b16 %v484
      %v2064 = vunpack.c.h.b16 %v484
      %v2065 = vunpack.c.l.b16 %v485
      %v2066 = vunpack.c.h.b16 %v485
      %v2067 = vunpack.c.l.b16 %v486
      %v2068 = vunpack.c.h.b16 %v486
      %v2069 = vunpack.c.l.b16 %v487
      %v2070 = vunpack.c.h.b16 %v487
      %v2071 = vunpack.c.l.b16 %v488
      %v2072 = vunpack.c.h.b16 %v488
      %v2073 = vunpack.c.l.b16 %v489
      %v2074 = vunpack.c.h.b16 %v489
      %v2075 = vunpack.c.l.b16 %v490
      %v2076 = vunpack.c.h.b16 %v490
      %v2077 = vunpack.c.l.b16 %v491
      %v2078 = vunpack.c.h.b16 %v491
      %v2079 = vunpack.c.l.b16 %v492
      %v2080 = vunpack.c.h.b16 %v492
      %v2081 = vunpack.c.l.b16 %v493
      %v2082 = vunpack.c.h.b16 %v493
      %v2083 = vunpack.c.l.b16 %v494
      %v2084 = vunpack.c.h.b16 %v494
      %v2085 = vunpack.c.l.b16 %v495
      %v2086 = vunpack.c.h.b16 %v495
      %v2087 = vunpack.c.l.b16 %v496
      %v2088 = vunpack.c.h.b16 %v496
      %v2089 = vunpack.c.l.b16 %v497
      %v2090 = vunpack.c.h.b16 %v497
      %v2091 = vunpack.c.l.b16 %v498
      %v2092 = vunpack.c.h.b16 %v498
      %v2093 = vunpack.c.l.b16 %v499
      %v2094 = vunpack.c.h.b16 %v499
      %v2095 = vunpack.c.l.b16 %v500
      %v2096 = vunpack.c.h.b16 %v500
      %v2097 = vunpack.c.l.b16 %v501
      %v2098 = vunpack.c.h.b16 %v501
      %v2099 = vunpack.c.l.b16 %v502
      %v2100 = vunpack.c.h.b16 %v502
      %v2101 = vunpack.c.l.b16 %v503
      %v2102 = vunpack.c.h.b16 %v503
      %v2103 = vunpack.c.l.b16 %v504
      %v2104 = vunpack.c.h.b16 %v504
      %v2105 = vunpack.c.l.b16 %v505
      %v2106 = vunpack.c.h.b16 %v505
      %v2107 = vunpack.c.l.b16 %v506
      %v2108 = vunpack.c.h.b16 %v506
      %v2109 = vunpack.c.l.b16 %v507
      %v2110 = vunpack.c.h.b16 %v507
      %v2111 = vunpack.c.l.b16 %v508
      %v2112 = vunpack.c.h.b16 %v508
      %v2113 = vunpack.c.l.b16 %v509
      %v2114 = vunpack.c.h.b16 %v509
      %v2115 = vunpack.c.l.b16 %v510
      %v2116 = vunpack.c.h.b16 %v510
      %v2117 = vunpack.c.l.b16 %v511
      %v2118 = vunpack.c.h.b16 %v511
      %v2119 = vunpack.c.l.b16 %v512
      %v2120 = vunpack.c.h.b16 %v512
      %v2121 = vunpack.c.l.b16 %v513
      %v2122 = vunpack.c.h.b16 %v513
      %v2123 = vunpack.c.l.b16 %v514
      %v2124 = vunpack.c.h.b16 %v514
      %v2125 = vunpack.c.l.b16 %v515
      %v2126 = vunpack.c.h.b16 %v515
      %v2127 = vunpack.c.l.b16 %v516
      %v2128 = vunpack.c.h.b16 %v516
      %v2129 = vunpack.c.l.b16 %v517
      %v2130 = vunpack.c.h.b16 %v517
      %v2131 = vunpack.c.l.b16 %v518
      %v2132 = vunpack.c.h.b16 %v518
      %v2133 = vunpack.c.l.b16 %v519
      %v2134 = vunpack.c.h.b16 %v519
      %v2135 = vunpack.c.l.b16 %v520
      %v2136 = vunpack.c.h.b16 %v520
      %v2137 = vunpack.c.l.b16 %v521
      %v2138 = vunpack.c.h.b16 %v521
      %v2139 = vunpack.c.l.b16 %v522
      %v2140 = vunpack.c.h.b16 %v522
      %v2141 = vunpack.c.l.b16 %v523
      %v2142 = vunpack.c.h.b16 %v523
      %v2143 = vunpack.c.l.b16 %v524
      %v2144 = vunpack.c.h.b16 %v524
      %v2145 = vunpack.c.l.b16 %v525
      %v2146 = vunpack.c.h.b16 %v525
      %v2147 = vunpack.c.l.b16 %v526
      %v2148 = vunpack.c.h.b16 %v526
      %v2149 = vunpack.c.l.b16 %v527
      %v2150 = vunpack.c.h.b16 %v527
      %v2151 = vunpack.c.l.b16 %v528
      %v2152 = vunpack.c.h.b16 %v528
      %v2153 = vunpack.c.l.b16 %v529
      %v2154 = vunpack.c.h.b16 %v529
      %v2155 = vunpack.c.l.b16 %v530
      %v2156 = vunpack.c.h.b16 %v530
      %v2157 = vunpack.c.l.b16 %v531
      %v2158 = vunpack.c.h.b16 %v531
      %v2159 = vunpack.c.l.b16 %v532
      %v2160 = vunpack.c.h.b16 %v532
      %v2161 = vunpack.c.l.b16 %v533
      %v2162 = vunpack.c.h.b16 %v533
      %v2163 = vunpack.c.l.b16 %v534
      %v2164 = vunpack.c.h.b16 %v534
      %v2165 = vunpack.c.l.b16 %v535
      %v2166 = vunpack.c.h.b16 %v535
      %v2167 = vunpack.c.l.b16 %v536
      %v2168 = vunpack.c.h.b16 %v536
      %v2169 = vunpack.c.l.b16 %v537
      %v2170 = vunpack.c.h.b16 %v537
      %v2171 = vunpack.c.l.b16 %v538
      %v2172 = vunpack.c.h.b16 %v538
      %v2173 = vunpack.c.l.b16 %v539
      %v2174 = vunpack.c.h.b16 %v539
      %v2175 = vunpack.c.l.b16 %v540
      %v2176 = vunpack.c.h.b16 %v540
      %v2177 = vunpack.c.l.b16 %v541
      %v2178 = vunpack.c.h.b16 %v541
      %v2179 = vunpack.c.l.b16 %v542
      %v2180 = vunpack.c.h.b16 %v542
      %v2181 = vunpack.c.l.b16 %v543
      %v2182 = vunpack.c.h.b16 %v543
      %v2183 = vunpack.c.l.b16 %v544
      %v2184 = vunpack.c.h.b16 %v544
      %v2185 = vunpack.c.l.b16 %v545
      %v2186 = vunpack.c.h.b16 %v545
      %v2187 = vunpack.c.l.b16 %v546
      %v2188 = vunpack.c.h.b16 %v546
      %v2189 = vunpack.c.l.b16 %v547
      %v2190 = vunpack.c.h.b16 %v547
      %v2191 = vunpack.c.l.b16 %v548
      %v2192 = vunpack.c.h.b16 %v548
      %v2193 = vunpack.c.l.b16 %v549
      %v2194 = vunpack.c.h.b16 %v549
      %v2195 = vunpack.c.l.b16 %v550
      %v2196 = vunpack.c.h.b16 %v550
      %v2197 = vunpack.c.l.b16 %v551
      %v2198 = vunpack.c.h.b16 %v551
      %v2199 = vunpack.c.l.b16 %v552
      %v2200 = vunpack.c.h.b16 %v552
      %v2201 = vunpack.c.l.b16 %v553
      %v2202 = vunpack.c.h.b16 %v553
      %v2203 = vunpack.c.l.b16 %v554
      %v2204 = vunpack.c.h.b16 %v554
      %v2205 = vunpack.c.l.b16 %v555
      %v2206 = vunpack.c.h.b16 %v555
      %v2207 = vunpack.c.l.b16 %v556
      %v2208 = vunpack.c.h.b16 %v556
      %v2209 = vunpack.c.l.b16 %v557
      %v2210 = vunpack.c.h.b16 %v557
      %v2211 = vunpack.c.l.b16 %v558
      %v2212 = vunpack.c.h.b16 %v558
      %v2213 = vunpack.c.l.b16 %v559
      %v2214 = vunpack.c.h.b16 %v559
      %v2215 = vunpack.c.l.b16 %v560
      %v2216 = vunpack.c.h.b16 %v560
      %v2217 = vunpack.c.l.b16 %v561
      %v2218 = vunpack.c.h.b16 %v561
      %v2219 = vunpack.c.l.b16 %v562
      %v2220 = vunpack.c.h.b16 %v562
      %v2221 = vunpack.c.l.b16 %v563
      %v2222 = vunpack.c.h.b16 %v563
      %v2223 = vunpack.c.l.b16 %v564
      %v2224 = vunpack.c.h.b16 %v564
      %v2225 = vunpack.c.l.b16 %v565
      %v2226 = vunpack.c.h.b16 %v565
      %v2227 = vunpack.c.l.b16 %v566
      %v2228 = vunpack.c.h.b16 %v566
      %v2229 = vunpack.c.l.b16 %v567
      %v2230 = vunpack.c.h.b16 %v567
      %v2231 = vunpack.c.l.b16 %v568
      %v2232 = vunpack.c.h.b16 %v568
      %v2233 = vunpack.c.l.b16 %v569
      %v2234 = vunpack.c.h.b16 %v569
      %v2235 = vunpack.c.l.b16 %v570
      %v2236 = vunpack.c.h.b16 %v570
      %v2237 = vunpack.c.l.b16 %v571
      %v2238 = vunpack.c.h.b16 %v571
      %v2239 = vunpack.c.l.b16 %v572
      %v2240 = vunpack.c.h.b16 %v572
      %v2241 = vunpack.c.l.b16 %v573
      %v2242 = vunpack.c.h.b16 %v573
      %v2243 = vunpack.c.l.b16 %v574
      %v2244 = vunpack.c.h.b16 %v574
      %v2245 = vunpack.c.l.b16 %v575
      %v2246 = vunpack.c.h.b16 %v575
      %v2247 = vunpack.c.l.b16 %v576
      %v2248 = vunpack.c.h.b16 %v576
      %v2249 = vunpack.c.l.b16 %v577
      %v2250 = vunpack.c.h.b16 %v577
      %v2251 = vunpack.c.l.b16 %v578
      %v2252 = vunpack.c.h.b16 %v578
      %v2253 = vunpack.c.l.b16 %v579
      %v2254 = vunpack.c.h.b16 %v579
      %v2255 = vunpack.c.l.b16 %v580
      %v2256 = vunpack.c.h.b16 %v580
      %v2257 = vunpack.c.l.b16 %v581
      %v2258 = vunpack.c.h.b16 %v581
      %v2259 = vunpack.c.l.b16 %v582
      %v2260 = vunpack.c.h.b16 %v582
      %v2261 = vunpack.c.l.b16 %v583
      %v2262 = vunpack.c.h.b16 %v583
      %v2263 = vunpack.c.l.b16 %v584
      %v2264 = vunpack.c.h.b16 %v584
      %v2265 = vunpack.c.l.b16 %v585
      %v2266 = vunpack.c.h.b16 %v585
      %v2267 = vunpack.c.l.b16 %v586
      %v2268 = vunpack.c.h.b16 %v586
      %v2269 = vunpack.c.l.b16 %v587
      %v2270 = vunpack.c.h.b16 %v587
      %v2271 = vunpack.c.l.b16 %v588
      %v2272 = vunpack.c.h.b16 %v588
      %v2273 = vunpack.c.l.b16 %v589
      %v2274 = vunpack.c.h.b16 %v589
      %v2275 = vunpack.c.l.b16 %v590
      %v2276 = vunpack.c.h.b16 %v590
      %v2277 = vunpack.c.l.b16 %v591
      %v2278 = vunpack.c.h.b16 %v591
      %v2279 = vunpack.c.l.b16 %v592
      %v2280 = vunpack.c.h.b16 %v592
      %v2281 = vunpack.c.l.b16 %v593
      %v2282 = vunpack.c.h.b16 %v593
      %v2283 = vunpack.c.l.b16 %v594
      %v2284 = vunpack.c.h.b16 %v594
      %v2285 = vunpack.c.l.b16 %v595
      %v2286 = vunpack.c.h.b16 %v595
      %v2287 = vunpack.c.l.b16 %v596
      %v2288 = vunpack.c.h.b16 %v596
      %v2289 = vunpack.c.l.b16 %v597
      %v2290 = vunpack.c.h.b16 %v597
      %v2291 = vunpack.c.l.b16 %v598
      %v2292 = vunpack.c.h.b16 %v598
      %v2293 = vunpack.c.l.b16 %v599
      %v2294 = vunpack.c.h.b16 %v599
      %v2295 = vunpack.c.l.b16 %v600
      %v2296 = vunpack.c.h.b16 %v600
      %v2297 = vunpack.c.l.b16 %v601
      %v2298 = vunpack.c.h.b16 %v601
      %v2299 = vunpack.c.l.b16 %v602
      %v2300 = vunpack.c.h.b16 %v602
      %v2301 = vunpack.c.l.b16 %v603
      %v2302 = vunpack.c.h.b16 %v603
      %v2303 = vunpack.c.l.b16 %v604
      %v2304 = vunpack.c.h.b16 %v604
      %v2305 = vunpack.c.l.b16 %v605
      %v2306 = vunpack.c.h.b16 %v605
      %v2307 = vunpack.c.l.b16 %v606
      %v2308 = vunpack.c.h.b16 %v606
      %v2309 = vunpack.c.l.b16 %v607
      %v2310 = vunpack.c.h.b16 %v607
      %v2311 = vunpack.c.l.b16 %v608
      %v2312 = vunpack.c.h.b16 %v608
      %v2313 = vunpack.c.l.b16 %v609
      %v2314 = vunpack.c.h.b16 %v609
      %v2315 = vunpack.c.l.b16 %v610
      %v2316 = vunpack.c.h.b16 %v610
      %v2317 = vunpack.c.l.b16 %v611
      %v2318 = vunpack.c.h.b16 %v611
      %v2319 = vunpack.c.l.b16 %v612
      %v2320 = vunpack.c.h.b16 %v612
      %v2321 = vunpack.c.l.b16 %v613
      %v2322 = vunpack.c.h.b16 %v613
      %v2323 = vunpack.c.l.b16 %v614
      %v2324 = vunpack.c.h.b16 %v614
      %v2325 = vunpack.c.l.b16 %v615
      %v2326 = vunpack.c.h.b16 %v615
      %v2327 = vunpack.c.l.b16 %v616
      %v2328 = vunpack.c.h.b16 %v616
      %v2329 = vunpack.c.l.b16 %v617
      %v2330 = vunpack.c.h.b16 %v617
      %v2331 = vunpack.c.l.b16 %v618
      %v2332 = vunpack.c.h.b16 %v618
      %v2333 = vunpack.c.l.b16 %v619
      %v2334 = vunpack.c.h.b16 %v619
      %v2335 = vunpack.c.l.b16 %v620
      %v2336 = vunpack.c.h.b16 %v620
      %v2337 = vunpack.c.l.b16 %v621
      %v2338 = vunpack.c.h.b16 %v621
      %v2339 = vunpack.c.l.b16 %v622
      %v2340 = vunpack.c.h.b16 %v622
      %v2341 = vunpack.c.l.b16 %v623
      %v2342 = vunpack.c.h.b16 %v623
      %v2343 = vunpack.c.l.b16 %v624
      %v2344 = vunpack.c.h.b16 %v624
      %v2345 = vunpack.c.l.b16 %v625
      %v2346 = vunpack.c.h.b16 %v625
      %v2347 = vunpack.c.l.b16 %v626
      %v2348 = vunpack.c.h.b16 %v626
      %v2349 = vunpack.c.l.b16 %v627
      %v2350 = vunpack.c.h.b16 %v627
      %v2351 = vunpack.c.l.b16 %v628
      %v2352 = vunpack.c.h.b16 %v628
      %v2353 = vunpack.c.l.b16 %v629
      %v2354 = vunpack.c.h.b16 %v629
      %v2355 = vunpack.c.l.b16 %v630
      %v2356 = vunpack.c.h.b16 %v630
      %v2357 = vunpack.c.l.b16 %v631
      %v2358 = vunpack.c.h.b16 %v631
      %v2359 = vunpack.c.l.b16 %v632
      %v2360 = vunpack.c.h.b16 %v632
      %v2361 = vpack.c.b16 %v1617, %v1593
      %v2362 = vpack.c.b16 %v1618, %v1594
      %v2363 = vpack.c.b16 %v1619, %v1595
      %v2364 = vpack.c.b16 %v1620, %v1596
      %v2365 = vpack.c.b16 %v1621, %v1597
      %v2366 = vpack.c.b16 %v1622, %v1598
      %v2367 = vpack.c.b16 %v1623, %v1599
      %v2368 = vpack.c.b16 %v1624, %v1600
      %v2369 = vpack.c.b16 %v1625, %v1601
      %v2370 = vpack.c.b16 %v1626, %v1602
      %v2371 = vpack.c.b16 %v1627, %v1603
      %v2372 = vpack.c.b16 %v1628, %v1604
      %v2373 = vpack.c.b16 %v1629, %v1605
      %v2374 = vpack.c.b16 %v1630, %v1606
      %v2375 = vpack.c.b16 %v1631, %v1607
      %v2376 = vpack.c.b16 %v1632, %v1608
      %v2377 = vpack.c.b16 %v1633, %v1609
      %v2378 = vpack.c.b16 %v1634, %v1610
      %v2379 = vpack.c.b16 %v1635, %v1611
      %v2380 = vpack.c.b16 %v1636, %v1612
      %v2381 = vpack.c.b16 %v1637, %v1613
      %v2382 = vpack.c.b16 %v1638, %v1614
      %v2383 = vpack.c.b16 %v1639, %v1615
      %v2384 = vpack.c.b16 %v1640, %v1616
      %v2385 = vpack.c.b16 %v1665, %v1641
      %v2386 = vpack.c.b16 %v1666, %v1642
      %v2387 = vpack.c.b16 %v1667, %v1643
      %v2388 = vpack.c.b16 %v1668, %v1644
      %v2389 = vpack.c.b16 %v1669, %v1645
      %v2390 = vpack.c.b16 %v1670, %v1646
      %v2391 = vpack.c.b16 %v1671, %v1647
      %v2392 = vpack.c.b16 %v1672, %v1648
      %v2393 = vpack.c.b16 %v1673, %v1649
      %v2394 = vpack.c.b16 %v1674, %v1650
      %v2395 = vpack.c.b16 %v1675, %v1651
      %v2396 = vpack.c.b16 %v1676, %v1652
      %v2397 = vpack.c.b16 %v1677, %v1653
      %v2398 = vpack.c.b16 %v1678, %v1654
      %v2399 = vpack.c.b16 %v1679, %v1655
      %v2400 = vpack.c.b16 %v1680, %v1656
      %v2401 = vpack.c.b16 %v1681, %v1657
      %v2402 = vpack.c.b16 %v1682, %v1658
      %v2403 = vpack.c.b16 %v1683, %v1659
      %v2404 = vpack.c.b16 %v1684, %v1660
      %v2405 = vpack.c.b16 %v1685, %v1661
      %v2406 = vpack.c.b16 %v1686, %v1662
      %v2407 = vpack.c.b16 %v1687, %v1663
      %v2408 = vpack.c.b16 %v1688, %v1664
      %v2409 = vpack.c.b16 %v1713, %v1689
      %v2410 = vpack.c.b16 %v1714, %v1690
      %v2411 = vpack.c.b16 %v1715, %v1691
      %v2412 = vpack.c.b16 %v1716, %v1692
      %v2413 = vpack.c.b16 %v1717, %v1693
      %v2414 = vpack.c.b16 %v1718, %v1694
      %v2415 = vpack.c.b16 %v1719, %v1695
      %v2416 = vpack.c.b16 %v1720, %v1696
      %v2417 = vpack.c.b16 %v1721, %v1697
      %v2418 = vpack.c.b16 %v1722, %v1698
      %v2419 = vpack.c.b16 %v1723, %v1699
      %v2420 = vpack.c.b16 %v1724, %v1700
      %v2421 = vpack.c.b16 %v1725, %v1701
      %v2422 = vpack.c.b16 %v1726, %v1702
      %v2423 = vpack.c.b16 %v1727, %v1703
      %v2424 = vpack.c.b16 %v1728, %v1704
      %v2425 = vpack.c.b16 %v1729, %v1705
      %v2426 = vpack.c.b16 %v1730, %v1706
      %v2427 = vpack.c.b16 %v1731, %v1707
      %v2428 = vpack.c.b16 %v1732, %v1708
      %v2429 = vpack.c.b16 %v1733, %v1709
      %v2430 = vpack.c.b16 %v1734, %v1710
      %v2431 = vpack.c.b16 %v1735, %v1711
      %v2432 = vpack.c.b16 %v1736, %v1712
      %v2433 = vpack.c.b16 %v1761, %v1737
      %v2434 = vpack.c.b16 %v1762, %v1738
      %v2435 = vpack.c.b16 %v1763, %v1739
      %v2436 = vpack.c.b16 %v1764, %v1740
      %v2437 = vpack.c.b16 %v1765, %v1741
      %v2438 = vpack.c.b16 %v1766, %v1742
      %v2439 = vpack.c.b16 %v1767, %v1743
      %v2440 = vpack.c.b16 %v1768, %v1744
      %v2441 = vpack.c.b16 %v1769, %v1745
      %v2442 = vpack.c.b16 %v1770, %v1746
      %v2443 = vpack.c.b16 %v1771, %v1747
      %v2444 = vpack.c.b16 %v1772, %v1748
      %v2445 = vpack.c.b16 %v1773, %v1749
      %v2446 = vpack.c.b16 %v1774, %v1750
      %v2447 = vpack.c.b16 %v1775, %v1751
      %v2448 = vpack.c.b16 %v1776, %v1752
      %v2449 = vpack.c.b16 %v1777, %v1753
      %v2450 = vpack.c.b16 %v1778, %v1754
      %v2451 = vpack.c.b16 %v1779, %v1755
      %v2452 = vpack.c.b16 %v1780, %v1756
      %v2453 = vpack.c.b16 %v1781, %v1757
      %v2454 = vpack.c.b16 %v1782, %v1758
      %v2455 = vpack.c.b16 %v1783, %v1759
      %v2456 = vpack.c.b16 %v1784, %v1760
      %v2457 = vpack.c.b16 %v1809, %v1785
      %v2458 = vpack.c.b16 %v1810, %v1786
      %v2459 = vpack.c.b16 %v1811, %v1787
      %v2460 = vpack.c.b16 %v1812, %v1788
      %v2461 = vpack.c.b16 %v1813, %v1789
      %v2462 = vpack.c.b16 %v1814, %v1790
      %v2463 = vpack.c.b16 %v1815, %v1791
      %v2464 = vpack.c.b16 %v1816, %v1792
      %v2465 = vpack.c.b16 %v1817, %v1793
      %v2466 = vpack.c.b16 %v1818, %v1794
      %v2467 = vpack.c.b16 %v1819, %v1795
      %v2468 = vpack.c.b16 %v1820, %v1796
      %v2469 = vpack.c.b16 %v1821, %v1797
      %v2470 = vpack.c.b16 %v1822, %v1798
      %v2471 = vpack.c.b16 %v1823, %v1799
      %v2472 = vpack.c.b16 %v1824, %v1800
      %v2473 = vpack.c.b16 %v1825, %v1801
      %v2474 = vpack.c.b16 %v1826, %v1802
      %v2475 = vpack.c.b16 %v1827, %v1803
      %v2476 = vpack.c.b16 %v1828, %v1804
      %v2477 = vpack.c.b16 %v1829, %v1805
      %v2478 = vpack.c.b16 %v1830, %v1806
      %v2479 = vpack.c.b16 %v1831, %v1807
      %v2480 = vpack.c.b16 %v1832, %v1808
      %v2481 = vpack.c.b16 %v1857, %v1833
      %v2482 = vpack.c.b16 %v1858, %v1834
      %v2483 = vpack.c.b16 %v1859, %v1835
      %v2484 = vpack.c.b16 %v1860, %v1836
      %v2485 = vpack.c.b16 %v1861, %v1837
      %v2486 = vpack.c.b16 %v1862, %v1838
      %v2487 = vpack.c.b16 %v1863, %v1839
      %v2488 = vpack.c.b16 %v1864, %v1840
      %v2489 = vpack.c.b16 %v1865, %v1841
      %v2490 = vpack.c.b16 %v1866, %v1842
      %v2491 = vpack.c.b16 %v1867, %v1843
      %v2492 = vpack.c.b16 %v1868, %v1844
      %v2493 = vpack.c.b16 %v1869, %v1845
      %v2494 = vpack.c.b16 %v1870, %v1846
      %v2495 = vpack.c.b16 %v1871, %v1847
      %v2496 = vpack.c.b16 %v1872, %v1848
      %v2497 = vpack.c.b16 %v1873, %v1849
      %v2498 = vpack.c.b16 %v1874, %v1850
      %v2499 = vpack.c.b16 %v1875, %v1851
      %v2500 = vpack.c.b16 %v1876, %v1852
      %v2501 = vpack.c.b16 %v1877, %v1853
      %v2502 = vpack.c.b16 %v1878, %v1854
      %v2503 = vpack.c.b16 %v1879, %v1855
      %v2504 = vpack.c.b16 %v1880, %v1856
      %v2505 = vpack.c.b16 %v1905, %v1881
      %v2506 = vpack.c.b16 %v1906, %v1882
      %v2507 = vpack.c.b16 %v1907, %v1883
      %v2508 = vpack.c.b16 %v1908, %v1884
      %v2509 = vpack.c.b16 %v1909, %v1885
      %v2510 = vpack.c.b16 %v1910, %v1886
      %v2511 = vpack.c.b16 %v1911, %v1887
      %v2512 = vpack.c.b16 %v1912, %v1888
      %v2513 = vpack.c.b16 %v1913, %v1889
      %v2514 = vpack.c.b16 %v1914, %v1890
      %v2515 = vpack.c.b16 %v1915, %v1891
      %v2516 = vpack.c.b16 %v1916, %v1892
      %v2517 = vpack.c.b16 %v1917, %v1893
      %v2518 = vpack.c.b16 %v1918, %v1894
      %v2519 = vpack.c.b16 %v1919, %v1895
      %v2520 = vpack.c.b16 %v1920, %v1896
      %v2521 = vpack.c.b16 %v1921, %v1897
      %v2522 = vpack.c.b16 %v1922, %v1898
      %v2523 = vpack.c.b16 %v1923, %v1899
      %v2524 = vpack.c.b16 %v1924, %v1900
      %v2525 = vpack.c.b16 %v1925, %v1901
      %v2526 = vpack.c.b16 %v1926, %v1902
      %v2527 = vpack.c.b16 %v1927, %v1903
      %v2528 = vpack.c.b16 %v1928, %v1904
      %v2529 = vpack.c.b16 %v1953, %v1929
      %v2530 = vpack.c.b16 %v1954, %v1930
      %v2531 = vpack.c.b16 %v1955, %v1931
      %v2532 = vpack.c.b16 %v1956, %v1932
      %v2533 = vpack.c.b16 %v1957, %v1933
      %v2534 = vpack.c.b16 %v1958, %v1934
      %v2535 = vpack.c.b16 %v1959, %v1935
      %v2536 = vpack.c.b16 %v1960, %v1936
      %v2537 = vpack.c.b16 %v1961, %v1937
      %v2538 = vpack.c.b16 %v1962, %v1938
      %v2539 = vpack.c.b16 %v1963, %v1939
      %v2540 = vpack.c.b16 %v1964, %v1940
      %v2541 = vpack.c.b16 %v1965, %v1941
      %v2542 = vpack.c.b16 %v1966, %v1942
      %v2543 = vpack.c.b16 %v1967, %v1943
      %v2544 = vpack.c.b16 %v1968, %v1944
      %v2545 = vpack.c.b16 %v1969, %v1945
      %v2546 = vpack.c.b16 %v1970, %v1946
      %v2547 = vpack.c.b16 %v1971, %v1947
      %v2548 = vpack.c.b16 %v1972, %v1948
      %v2549 = vpack.c.b16 %v1973, %v1949
      %v2550 = vpack.c.b16 %v1974, %v1950
      %v2551 = vpack.c.b16 %v1975, %v1951
      %v2552 = vpack.c.b16 %v1976, %v1952
      %v2553 = vpack.c.b16 %v2001, %v1977
      %v2554 = vpack.c.b16 %v2002, %v1978
      %v2555 = vpack.c.b16 %v2003, %v1979
      %v2556 = vpack.c.b16 %v2004, %v1980
      %v2557 = vpack.c.b16 %v2005, %v1981
      %v2558 = vpack.c.b16 %v2006, %v1982
      %v2559 = vpack.c.b16 %v2007, %v1983
      %v2560 = vpack.c.b16 %v2008, %v1984
      %v2561 = vpack.c.b16 %v2009, %v1985
      %v2562 = vpack.c.b16 %v2010, %v1986
      %v2563 = vpack.c.b16 %v2011, %v1987
      %v2564 = vpack.c.b16 %v2012, %v1988
      %v2565 = vpack.c.b16 %v2013, %v1989
      %v2566 = vpack.c.b16 %v2014, %v1990
      %v2567 = vpack.c.b16 %v2015, %v1991
      %v2568 = vpack.c.b16 %v2016, %v1992
      %v2569 = vpack.c.b16 %v2017, %v1993
      %v2570 = vpack.c.b16 %v2018, %v1994
      %v2571 = vpack.c.b16 %v2019, %v1995
      %v2572 = vpack.c.b16 %v2020, %v1996
      %v2573 = vpack.c.b16 %v2021, %v1997
      %v2574 = vpack.c.b16 %v2022, %v1998
      %v2575 = vpack.c.b16 %v2023, %v1999
      %v2576 = vpack.c.b16 %v2024, %v2000
      %v2577 = vpack.c.b16 %v2049, %v2025
      %v2578 = vpack.c.b16 %v2050, %v2026
      %v2579 = vpack.c.b16 %v2051, %v2027
      %v2580 = vpack.c.b16 %v2052, %v2028
      %v2581 = vpack.c.b16 %v2053, %v2029
      %v2582 = vpack.c.b16 %v2054, %v2030
      %v2583 = vpack.c.b16 %v2055, %v2031
      %v2584 = vpack.c.b16 %v2056, %v2032
      %v2585 = vpack.c.b16 %v2057, %v2033
      %v2586 = vpack.c.b16 %v2058, %v2034
      %v2587 = vpack.c.b16 %v2059, %v2035
      %v2588 = vpack.c.b16 %v2060, %v2036
      %v2589 = vpack.c.b16 %v2061, %v2037
      %v2590 = vpack.c.b16 %v2062, %v2038
      %v2591 = vpack.c.b16 %v2063, %v2039
      %v2592 = vpack.c.b16 %v2064, %v2040
      %v2593 = vpack.c.b16 %v2065, %v2041
      %v2594 = vpack.c.b16 %v2066, %v2042
      %v2595 = vpack.c.b16 %v2067, %v2043
      %v2596 = vpack.c.b16 %v2068, %v2044
      %v2597 = vpack.c.b16 %v2069, %v2045
      %v2598 = vpack.c.b16 %v2070, %v2046
      %v2599 = vpack.c.b16 %v2071, %v2047
      %v2600 = vpack.c.b16 %v2072, %v2048
      %v2601 = vpack.c.b16 %v2097, %v2073
      %v2602 = vpack.c.b16 %v2098, %v2074
      %v2603 = vpack.c.b16 %v2099, %v2075
      %v2604 = vpack.c.b16 %v2100, %v2076
      %v2605 = vpack.c.b16 %v2101, %v2077
      %v2606 = vpack.c.b16 %v2102, %v2078
      %v2607 = vpack.c.b16 %v2103, %v2079
      %v2608 = vpack.c.b16 %v2104, %v2080
      %v2609 = vpack.c.b16 %v2105, %v2081
      %v2610 = vpack.c.b16 %v2106, %v2082
      %v2611 = vpack.c.b16 %v2107, %v2083
      %v2612 = vpack.c.b16 %v2108, %v2084
      %v2613 = vpack.c.b16 %v2109, %v2085
      %v2614 = vpack.c.b16 %v2110, %v2086
      %v2615 = vpack.c.b16 %v2111, %v2087
      %v2616 = vpack.c.b16 %v2112, %v2088
      %v2617 = vpack.c.b16 %v2113, %v2089
      %v2618 = vpack.c.b16 %v2114, %v2090
      %v2619 = vpack.c.b16 %v2115, %v2091
      %v2620 = vpack.c.b16 %v2116, %v2092
      %v2621 = vpack.c.b16 %v2117, %v2093
      %v2622 = vpack.c.b16 %v2118, %v2094
      %v2623 = vpack.c.b16 %v2119, %v2095
      %v2624 = vpack.c.b16 %v2120, %v2096
      %v2625 = vpack.c.b16 %v2145, %v2121
      %v2626 = vpack.c.b16 %v2146, %v2122
      %v2627 = vpack.c.b16 %v2147, %v2123
      %v2628 = vpack.c.b16 %v2148, %v2124
      %v2629 = vpack.c.b16 %v2149, %v2125
      %v2630 = vpack.c.b16 %v2150, %v2126
      %v2631 = vpack.c.b16 %v2151, %v2127
      %v2632 = vpack.c.b16 %v2152, %v2128
      %v2633 = vpack.c.b16 %v2153, %v2129
      %v2634 = vpack.c.b16 %v2154, %v2130
      %v2635 = vpack.c.b16 %v2155, %v2131
      %v2636 = vpack.c.b16 %v2156, %v2132
      %v2637 = vpack.c.b16 %v2157, %v2133
      %v2638 = vpack.c.b16 %v2158, %v2134
      %v2639 = vpack.c.b16 %v2159, %v2135
      %v2640 = vpack.c.b16 %v2160, %v2136
      %v2641 = vpack.c.b16 %v2161, %v2137
      %v2642 = vpack.c.b16 %v2162, %v2138
      %v2643 = vpack.c.b16 %v2163, %v2139
      %v2644 = vpack.c.b16 %v2164, %v2140
      %v2645 = vpack.c.b16 %v2165, %v2141
      %v2646 = vpack.c.b16 %v2166, %v2142
      %v2647 = vpack.c.b16 %v2167, %v2143
      %v2648 = vpack.c.b16 %v2168, %v2144
      %v2649 = vpack.c.b16 %v2193, %v2169
      %v2650 = vpack.c.b16 %v2194, %v2170
      %v2651 = vpack.c.b16 %v2195, %v2171
      %v2652 = vpack.c.b16 %v2196, %v2172
      %v2653 = vpack.c.b16 %v2197, %v2173
      %v2654 = vpack.c.b16 %v2198, %v2174
      %v2655 = vpack.c.b16 %v2199, %v2175
      %v2656 = vpack.c.b16 %v2200, %v2176
      %v2657 = vpack.c.b16 %v2201, %v2177
      %v2658 = vpack.c.b16 %v2202, %v2178
      %v2659 = vpack.c.b16 %v2203, %v2179
      %v2660 = vpack.c.b16 %v2204, %v2180
      %v2661 = vpack.c.b16 %v2205, %v2181
      %v2662 = vpack.c.b16 %v2206, %v2182
      %v2663 = vpack.c.b16 %v2207, %v2183
      %v2664 = vpack.c.b16 %v2208, %v2184
      %v2665 = vpack.c.b16 %v2209, %v2185
      %v2666 = vpack.c.b16 %v2210, %v2186
      %v2667 = vpack.c.b16 %v2211, %v2187
      %v2668 = vpack.c.b16 %v2212, %v2188
      %v2669 = vpack.c.b16 %v2213, %v2189
      %v2670 = vpack.c.b16 %v2214, %v2190
      %v2671 = vpack.c.b16 %v2215, %v2191
      %v2672 = vpack.c.b16 %v2216, %v2192
      %v2673 = vpack.c.b16 %v2241, %v2217
      %v2674 = vpack.c.b16 %v2242, %v2218
      %v2675 = vpack.c.b16 %v2243, %v2219
      %v2676 = vpack.c.b16 %v2244, %v2220
      %v2677 = vpack.c.b16 %v2245, %v2221
      %v2678 = vpack.c.b16 %v2246, %v2222
      %v2679 = vpack.c.b16 %v2247, %v2223
      %v2680 = vpack.c.b16 %v2248, %v2224
      %v2681 = vpack.c.b16 %v2249, %v2225
      %v2682 = vpack.c.b16 %v2250, %v2226
      %v2683 = vpack.c.b16 %v2251, %v2227
      %v2684 = vpack.c.b16 %v2252, %v2228
      %v2685 = vpack.c.b16 %v2253, %v2229
      %v2686 = vpack.c.b16 %v2254, %v2230
      %v2687 = vpack.c.b16 %v2255, %v2231
      %v2688 = vpack.c.b16 %v2256, %v2232
      %v2689 = vpack.c.b16 %v2257, %v2233
      %v2690 = vpack.c.b16 %v2258, %v2234
      %v2691 = vpack.c.b16 %v2259, %v2235
      %v2692 = vpack.c.b16 %v2260, %v2236
      %v2693 = vpack.c.b16 %v2261, %v2237
      %v2694 = vpack.c.b16 %v2262, %v2238
      %v2695 = vpack.c.b16 %v2263, %v2239
      %v2696 = vpack.c.b16 %v2264, %v2240
      %v2697 = vpack.c.b16 %v2289, %v2265
      %v2698 = vpack.c.b16 %v2290, %v2266
      %v2699 = vpack.c.b16 %v2291, %v2267
      %v2700 = vpack.c.b16 %v2292, %v2268
      %v2701 = vpack.c.b16 %v2293, %v2269
      %v2702 = vpack.c.b16 %v2294, %v2270
      %v2703 = vpack.c.b16 %v2295, %v2271
      %v2704 = vpack.c.b16 %v2296, %v2272
      %v2705 = vpack.c.b16 %v2297, %v2273
      %v2706 = vpack.c.b16 %v2298, %v2274
      %v2707 = vpack.c.b16 %v2299, %v2275
      %v2708 = vpack.c.b16 %v2300, %v2276
      %v2709 = vpack.c.b16 %v2301, %v2277
      %v2710 = vpack.c.b16 %v2302, %v2278
      %v2711 = vpack.c.b16 %v2303, %v2279
      %v2712 = vpack.c.b16 %v2304, %v2280
      %v2713 = vpack.c.b16 %v2305, %v2281
      %v2714 = vpack.c.b16 %v2306, %v2282
      %v2715 = vpack.c.b16 %v2307, %v2283
      %v2716 = vpack.c.b16 %v2308, %v2284
      %v2717 = vpack.c.b16 %v2309, %v2285
      %v2718 = vpack.c.b16 %v2310, %v2286
      %v2719 = vpack.c.b16 %v2311, %v2287
      %v2720 = vpack.c.b16 %v2312, %v2288
      %v2721 = vpack.c.b16 %v2337, %v2313
      %v2722 = vpack.c.b16 %v2338, %v2314
      %v2723 = vpack.c.b16 %v2339, %v2315
      %v2724 = vpack.c.b16 %v2340, %v2316
      %v2725 = vpack.c.b16 %v2341, %v2317
      %v2726 = vpack.c.b16 %v2342, %v2318
      %v2727 = vpack.c.b16 %v2343, %v2319
      %v2728 = vpack.c.b16 %v2344, %v2320
      %v2729 = vpack.c.b16 %v2345, %v2321
      %v2730 = vpack.c.b16 %v2346, %v2322
      %v2731 = vpack.c.b16 %v2347, %v2323
      %v2732 = vpack.c.b16 %v2348, %v2324
      %v2733 = vpack.c.b16 %v2349, %v2325
      %v2734 = vpack.c.b16 %v2350, %v2326
      %v2735 = vpack.c.b16 %v2351, %v2327
      %v2736 = vpack.c.b16 %v2352, %v2328
      %v2737 = vpack.c.b16 %v2353, %v2329
      %v2738 = vpack.c.b16 %v2354, %v2330
      %v2739 = vpack.c.b16 %v2355, %v2331
      %v2740 = vpack.c.b16 %v2356, %v2332
      %v2741 = vpack.c.b16 %v2357, %v2333
      %v2742 = vpack.c.b16 %v2358, %v2334
      %v2743 = vpack.c.b16 %v2359, %v2335
      %v2744 = vpack.c.b16 %v2360, %v2336
      %3129 = vmatprep.subr.bf16.mxu0 0
      %3130 = vmatpush1.bf16.msra.mxu0 %v1024
      %3131 = vmatprep.subr.bf16.mxu0 0
      %3132 = vmatpush1.bf16.msra.mxu0 %v1023
      %3133 = vmatprep.subr.bf16.mxu0 0
      %3134 = vmatpush1.bf16.msra.mxu0 %v1022
      %3135 = vmatprep.subr.bf16.mxu0 0
      %3136 = vmatpush1.bf16.msra.mxu0 %v1021
      %3137 = vmatprep.subr.bf16.mxu0 0
      %3138 = vmatpush1.bf16.msra.mxu0 %v1020
      %3139 = vmatprep.subr.bf16.mxu0 0
      %3140 = vmatpush1.bf16.msra.mxu0 %v1019
      %3141 = vmatprep.subr.bf16.mxu0 0
      %3142 = vmatpush1.bf16.msra.mxu0 %v1018
      %3143 = vmatprep.subr.bf16.mxu0 0
      %3144 = vmatpush1.bf16.msra.mxu0 %v1017
      %3145 = vmatprep.subr.bf16.mxu0 0
      %3146 = vmatpush2.bf16.msra.mxu0 %v1032
      %3147 = vmatprep.subr.bf16.mxu0 0
      %3148 = vmatpush2.bf16.msra.mxu0 %v1031
      %3149 = vmatprep.subr.bf16.mxu0 0
      %3150 = vmatpush2.bf16.msra.mxu0 %v1030
      %3151 = vmatprep.subr.bf16.mxu0 0
      %3152 = vmatpush2.bf16.msra.mxu0 %v1029
      %3153 = vmatprep.subr.bf16.mxu0 0
      %3154 = vmatpush2.bf16.msra.mxu0 %v1028
      %3155 = vmatprep.subr.bf16.mxu0 0
      %3156 = vmatpush2.bf16.msra.mxu0 %v1027
      %3157 = vmatprep.subr.bf16.mxu0 0
      %3158 = vmatpush2.bf16.msra.mxu0 %v1026
      %3159 = vmatprep.subr.bf16.mxu0 0
      %3160 = vmatpush2.bf16.msra.mxu0 %v1025
      %3161 = vmatprep.mubr.bf16.mxu0 %v2362
      %3162 = vmatmul.mubr.bf16.gmra.mxu0 %v2361
      %v3163 = vpop.f32.mrf.mxu0
      %v3164 = vadd.f32 0.0, %v3163
      %v3165 = vpop.f32.mrf.mxu0
      %v3166 = vpop.f32.mrf.mxu0
      %v3167 = vadd.f32 0.0, %v3166
      %v3168 = vpop.f32.mrf.mxu0
      %3169 = vmatprep.mubr.bf16.mxu0 %v2386
      %3170 = vmatmul.mubr.bf16.gmra.mxu0 %v2385
      %v3171 = vpop.f32.mrf.mxu0
      %v3172 = vadd.f32 0.0, %v3171
      %v3173 = vpop.f32.mrf.mxu0
      %v3174 = vpop.f32.mrf.mxu0
      %v3175 = vadd.f32 0.0, %v3174
      %v3176 = vpop.f32.mrf.mxu0
      %3177 = vmatprep.mubr.bf16.mxu0 %v2410
      %3178 = vmatmul.mubr.bf16.gmra.mxu0 %v2409
      %v3179 = vpop.f32.mrf.mxu0
      %v3180 = vadd.f32 0.0, %v3179
      %v3181 = vpop.f32.mrf.mxu0
      %v3182 = vpop.f32.mrf.mxu0
      %v3183 = vadd.f32 0.0, %v3182
      %v3184 = vpop.f32.mrf.mxu0
      %3185 = vmatprep.mubr.bf16.mxu0 %v2434
      %3186 = vmatmul.mubr.bf16.gmra.mxu0 %v2433
      %v3187 = vpop.f32.mrf.mxu0
      %v3188 = vadd.f32 0.0, %v3187
      %v3189 = vpop.f32.mrf.mxu0
      %v3190 = vpop.f32.mrf.mxu0
      %v3191 = vadd.f32 0.0, %v3190
      %v3192 = vpop.f32.mrf.mxu0
      %3193 = vmatprep.mubr.bf16.mxu0 %v2458
      %3194 = vmatmul.mubr.bf16.gmra.mxu0 %v2457
      %v3195 = vpop.f32.mrf.mxu0
      %v3196 = vadd.f32 0.0, %v3195
      %v3197 = vpop.f32.mrf.mxu0
      %v3198 = vpop.f32.mrf.mxu0
      %v3199 = vadd.f32 0.0, %v3198
      %v3200 = vpop.f32.mrf.mxu0
      %3201 = vmatprep.mubr.bf16.mxu0 %v2482
      %3202 = vmatmul.mubr.bf16.gmra.mxu0 %v2481
      %v3203 = vpop.f32.mrf.mxu0
      %v3204 = vadd.f32 0.0, %v3203
      %v3205 = vpop.f32.mrf.mxu0
      %v3206 = vpop.f32.mrf.mxu0
      %v3207 = vadd.f32 0.0, %v3206
      %v3208 = vpop.f32.mrf.mxu0
      %3209 = vmatprep.mubr.bf16.mxu0 %v2506
      %3210 = vmatmul.mubr.bf16.gmra.mxu0 %v2505
      %v3211 = vpop.f32.mrf.mxu0
      %v3212 = vadd.f32 0.0, %v3211
      %v3213 = vpop.f32.mrf.mxu0
      %v3214 = vpop.f32.mrf.mxu0
      %v3215 = vadd.f32 0.0, %v3214
      %v3216 = vpop.f32.mrf.mxu0
      %3217 = vmatprep.mubr.bf16.mxu0 %v2530
      %3218 = vmatmul.mubr.bf16.gmra.mxu0 %v2529
      %v3219 = vpop.f32.mrf.mxu0
      %v3220 = vadd.f32 0.0, %v3219
      %v3221 = vpop.f32.mrf.mxu0
      %v3222 = vpop.f32.mrf.mxu0
      %v3223 = vadd.f32 0.0, %v3222
      %v3224 = vpop.f32.mrf.mxu0
      %3225 = vmatprep.mubr.bf16.mxu0 %v2554
      %3226 = vmatmul.mubr.bf16.gmra.mxu0 %v2553
      %v3227 = vpop.f32.mrf.mxu0
      %v3228 = vadd.f32 0.0, %v3227
      %v3229 = vpop.f32.mrf.mxu0
      %v3230 = vpop.f32.mrf.mxu0
      %v3231 = vadd.f32 0.0, %v3230
      %v3232 = vpop.f32.mrf.mxu0
      %3233 = vmatprep.mubr.bf16.mxu0 %v2578
      %3234 = vmatmul.mubr.bf16.gmra.mxu0 %v2577
      %v3235 = vpop.f32.mrf.mxu0
      %v3236 = vadd.f32 0.0, %v3235
      %v3237 = vpop.f32.mrf.mxu0
      %v3238 = vpop.f32.mrf.mxu0
      %v3239 = vadd.f32 0.0, %v3238
      %v3240 = vpop.f32.mrf.mxu0
      %3241 = vmatprep.mubr.bf16.mxu0 %v2602
      %3242 = vmatmul.mubr.bf16.gmra.mxu0 %v2601
      %v3243 = vpop.f32.mrf.mxu0
      %v3244 = vadd.f32 0.0, %v3243
      %v3245 = vpop.f32.mrf.mxu0
      %v3246 = vpop.f32.mrf.mxu0
      %v3247 = vadd.f32 0.0, %v3246
      %v3248 = vpop.f32.mrf.mxu0
      %3249 = vmatprep.mubr.bf16.mxu0 %v2626
      %3250 = vmatmul.mubr.bf16.gmra.mxu0 %v2625
      %v3251 = vpop.f32.mrf.mxu0
      %v3252 = vadd.f32 0.0, %v3251
      %v3253 = vpop.f32.mrf.mxu0
      %v3254 = vpop.f32.mrf.mxu0
      %v3255 = vadd.f32 0.0, %v3254
      %v3256 = vpop.f32.mrf.mxu0
      %3257 = vmatprep.mubr.bf16.mxu0 %v2650
      %3258 = vmatmul.mubr.bf16.gmra.mxu0 %v2649
      %v3259 = vpop.f32.mrf.mxu0
      %v3260 = vadd.f32 0.0, %v3259
      %v3261 = vpop.f32.mrf.mxu0
      %v3262 = vpop.f32.mrf.mxu0
      %v3263 = vadd.f32 0.0, %v3262
      %v3264 = vpop.f32.mrf.mxu0
      %3265 = vmatprep.mubr.bf16.mxu0 %v2674
      %3266 = vmatmul.mubr.bf16.gmra.mxu0 %v2673
      %v3267 = vpop.f32.mrf.mxu0
      %v3268 = vadd.f32 0.0, %v3267
      %v3269 = vpop.f32.mrf.mxu0
      %v3270 = vpop.f32.mrf.mxu0
      %v3271 = vadd.f32 0.0, %v3270
      %v3272 = vpop.f32.mrf.mxu0
      %3273 = vmatprep.mubr.bf16.mxu0 %v2698
      %3274 = vmatmul.mubr.bf16.gmra.mxu0 %v2697
      %v3275 = vpop.f32.mrf.mxu0
      %v3276 = vadd.f32 0.0, %v3275
      %v3277 = vpop.f32.mrf.mxu0
      %v3278 = vpop.f32.mrf.mxu0
      %v3279 = vadd.f32 0.0, %v3278
      %v3280 = vpop.f32.mrf.mxu0
      %3281 = vmatprep.mubr.bf16.mxu0 %v2722
      %3282 = vmatmul.mubr.bf16.gmra.mxu0 %v2721
      %v3283 = vpop.f32.mrf.mxu0
      %v3284 = vadd.f32 0.0, %v3283
      %v3285 = vpop.f32.mrf.mxu0
      %v3286 = vpop.f32.mrf.mxu0
      %v3287 = vadd.f32 0.0, %v3286
      %v3288 = vpop.f32.mrf.mxu0
      %3289 = vdwg.mxu0
      %3290 = vmatprep.subr.bf16.mxu0 0
      %3291 = vmatpush1.bf16.msra.mxu0 %v1040
      %3292 = vmatprep.subr.bf16.mxu0 0
      %3293 = vmatpush1.bf16.msra.mxu0 %v1039
      %3294 = vmatprep.subr.bf16.mxu0 0
      %3295 = vmatpush1.bf16.msra.mxu0 %v1038
      %3296 = vmatprep.subr.bf16.mxu0 0
      %3297 = vmatpush1.bf16.msra.mxu0 %v1037
      %3298 = vmatprep.subr.bf16.mxu0 0
      %3299 = vmatpush1.bf16.msra.mxu0 %v1036
      %3300 = vmatprep.subr.bf16.mxu0 0
      %3301 = vmatpush1.bf16.msra.mxu0 %v1035
      %3302 = vmatprep.subr.bf16.mxu0 0
      %3303 = vmatpush1.bf16.msra.mxu0 %v1034
      %3304 = vmatprep.subr.bf16.mxu0 0
      %3305 = vmatpush1.bf16.msra.mxu0 %v1033
      %3306 = vmatprep.subr.bf16.mxu0 0
      %3307 = vmatpush2.bf16.msra.mxu0 %v1048
      %3308 = vmatprep.subr.bf16.mxu0 0
      %3309 = vmatpush2.bf16.msra.mxu0 %v1047
      %3310 = vmatprep.subr.bf16.mxu0 0
      %3311 = vmatpush2.bf16.msra.mxu0 %v1046
      %3312 = vmatprep.subr.bf16.mxu0 0
      %3313 = vmatpush2.bf16.msra.mxu0 %v1045
      %3314 = vmatprep.subr.bf16.mxu0 0
      %3315 = vmatpush2.bf16.msra.mxu0 %v1044
      %3316 = vmatprep.subr.bf16.mxu0 0
      %3317 = vmatpush2.bf16.msra.mxu0 %v1043
      %3318 = vmatprep.subr.bf16.mxu0 0
      %3319 = vmatpush2.bf16.msra.mxu0 %v1042
      %3320 = vmatprep.subr.bf16.mxu0 0
      %3321 = vmatpush2.bf16.msra.mxu0 %v1041
      %3322 = vmatprep.mubr.bf16.mxu0 %v2364
      %3323 = vmatmul.mubr.bf16.gmra.mxu0 %v2363
      %v3324 = vpop.f32.mrf.mxu0
      %v3325 = vadd.f32 %v3164, %v3324
      %v3326 = vpop.f32.mrf.mxu0
      %v3327 = vpop.f32.mrf.mxu0
      %v3328 = vadd.f32 %v3167, %v3327
      %v3329 = vpop.f32.mrf.mxu0
      %3330 = vmatprep.mubr.bf16.mxu0 %v2388
      %3331 = vmatmul.mubr.bf16.gmra.mxu0 %v2387
      %v3332 = vpop.f32.mrf.mxu0
      %v3333 = vadd.f32 %v3172, %v3332
      %v3334 = vpop.f32.mrf.mxu0
      %v3335 = vpop.f32.mrf.mxu0
      %v3336 = vadd.f32 %v3175, %v3335
      %v3337 = vpop.f32.mrf.mxu0
      %3338 = vmatprep.mubr.bf16.mxu0 %v2412
      %3339 = vmatmul.mubr.bf16.gmra.mxu0 %v2411
      %v3340 = vpop.f32.mrf.mxu0
      %v3341 = vadd.f32 %v3180, %v3340
      %v3342 = vpop.f32.mrf.mxu0
      %v3343 = vpop.f32.mrf.mxu0
      %v3344 = vadd.f32 %v3183, %v3343
      %v3345 = vpop.f32.mrf.mxu0
      %3346 = vmatprep.mubr.bf16.mxu0 %v2436
      %3347 = vmatmul.mubr.bf16.gmra.mxu0 %v2435
      %v3348 = vpop.f32.mrf.mxu0
      %v3349 = vadd.f32 %v3188, %v3348
      %v3350 = vpop.f32.mrf.mxu0
      %v3351 = vpop.f32.mrf.mxu0
      %v3352 = vadd.f32 %v3191, %v3351
      %v3353 = vpop.f32.mrf.mxu0
      %3354 = vmatprep.mubr.bf16.mxu0 %v2460
      %3355 = vmatmul.mubr.bf16.gmra.mxu0 %v2459
      %v3356 = vpop.f32.mrf.mxu0
      %v3357 = vadd.f32 %v3196, %v3356
      %v3358 = vpop.f32.mrf.mxu0
      %v3359 = vpop.f32.mrf.mxu0
      %v3360 = vadd.f32 %v3199, %v3359
      %v3361 = vpop.f32.mrf.mxu0
      %3362 = vmatprep.mubr.bf16.mxu0 %v2484
      %3363 = vmatmul.mubr.bf16.gmra.mxu0 %v2483
      %v3364 = vpop.f32.mrf.mxu0
      %v3365 = vadd.f32 %v3204, %v3364
      %v3366 = vpop.f32.mrf.mxu0
      %v3367 = vpop.f32.mrf.mxu0
      %v3368 = vadd.f32 %v3207, %v3367
      %v3369 = vpop.f32.mrf.mxu0
      %3370 = vmatprep.mubr.bf16.mxu0 %v2508
      %3371 = vmatmul.mubr.bf16.gmra.mxu0 %v2507
      %v3372 = vpop.f32.mrf.mxu0
      %v3373 = vadd.f32 %v3212, %v3372
      %v3374 = vpop.f32.mrf.mxu0
      %v3375 = vpop.f32.mrf.mxu0
      %v3376 = vadd.f32 %v3215, %v3375
      %v3377 = vpop.f32.mrf.mxu0
      %3378 = vmatprep.mubr.bf16.mxu0 %v2532
      %3379 = vmatmul.mubr.bf16.gmra.mxu0 %v2531
      %v3380 = vpop.f32.mrf.mxu0
      %v3381 = vadd.f32 %v3220, %v3380
      %v3382 = vpop.f32.mrf.mxu0
      %v3383 = vpop.f32.mrf.mxu0
      %v3384 = vadd.f32 %v3223, %v3383
      %v3385 = vpop.f32.mrf.mxu0
      %3386 = vmatprep.mubr.bf16.mxu0 %v2556
      %3387 = vmatmul.mubr.bf16.gmra.mxu0 %v2555
      %v3388 = vpop.f32.mrf.mxu0
      %v3389 = vadd.f32 %v3228, %v3388
      %v3390 = vpop.f32.mrf.mxu0
      %v3391 = vpop.f32.mrf.mxu0
      %v3392 = vadd.f32 %v3231, %v3391
      %v3393 = vpop.f32.mrf.mxu0
      %3394 = vmatprep.mubr.bf16.mxu0 %v2580
      %3395 = vmatmul.mubr.bf16.gmra.mxu0 %v2579
      %v3396 = vpop.f32.mrf.mxu0
      %v3397 = vadd.f32 %v3236, %v3396
      %v3398 = vpop.f32.mrf.mxu0
      %v3399 = vpop.f32.mrf.mxu0
      %v3400 = vadd.f32 %v3239, %v3399
      %v3401 = vpop.f32.mrf.mxu0
      %3402 = vmatprep.mubr.bf16.mxu0 %v2604
      %3403 = vmatmul.mubr.bf16.gmra.mxu0 %v2603
      %v3404 = vpop.f32.mrf.mxu0
      %v3405 = vadd.f32 %v3244, %v3404
      %v3406 = vpop.f32.mrf.mxu0
      %v3407 = vpop.f32.mrf.mxu0
      %v3408 = vadd.f32 %v3247, %v3407
      %v3409 = vpop.f32.mrf.mxu0
      %3410 = vmatprep.mubr.bf16.mxu0 %v2628
      %3411 = vmatmul.mubr.bf16.gmra.mxu0 %v2627
      %v3412 = vpop.f32.mrf.mxu0
      %v3413 = vadd.f32 %v3252, %v3412
      %v3414 = vpop.f32.mrf.mxu0
      %v3415 = vpop.f32.mrf.mxu0
      %v3416 = vadd.f32 %v3255, %v3415
      %v3417 = vpop.f32.mrf.mxu0
      %3418 = vmatprep.mubr.bf16.mxu0 %v2652
      %3419 = vmatmul.mubr.bf16.gmra.mxu0 %v2651
      %v3420 = vpop.f32.mrf.mxu0
      %v3421 = vadd.f32 %v3260, %v3420
      %v3422 = vpop.f32.mrf.mxu0
      %v3423 = vpop.f32.mrf.mxu0
      %v3424 = vadd.f32 %v3263, %v3423
      %v3425 = vpop.f32.mrf.mxu0
      %3426 = vmatprep.mubr.bf16.mxu0 %v2676
      %3427 = vmatmul.mubr.bf16.gmra.mxu0 %v2675
      %v3428 = vpop.f32.mrf.mxu0
      %v3429 = vadd.f32 %v3268, %v3428
      %v3430 = vpop.f32.mrf.mxu0
      %v3431 = vpop.f32.mrf.mxu0
      %v3432 = vadd.f32 %v3271, %v3431
      %v3433 = vpop.f32.mrf.mxu0
      %3434 = vmatprep.mubr.bf16.mxu0 %v2700
      %3435 = vmatmul.mubr.bf16.gmra.mxu0 %v2699
      %v3436 = vpop.f32.mrf.mxu0
      %v3437 = vadd.f32 %v3276, %v3436
      %v3438 = vpop.f32.mrf.mxu0
      %v3439 = vpop.f32.mrf.mxu0
      %v3440 = vadd.f32 %v3279, %v3439
      %v3441 = vpop.f32.mrf.mxu0
      %3442 = vmatprep.mubr.bf16.mxu0 %v2724
      %3443 = vmatmul.mubr.bf16.gmra.mxu0 %v2723
      %v3444 = vpop.f32.mrf.mxu0
      %v3445 = vadd.f32 %v3284, %v3444
      %v3446 = vpop.f32.mrf.mxu0
      %v3447 = vpop.f32.mrf.mxu0
      %v3448 = vadd.f32 %v3287, %v3447
      %v3449 = vpop.f32.mrf.mxu0
      %3450 = vdwg.mxu0
      %3451 = vmatprep.subr.bf16.mxu0 0
      %3452 = vmatpush1.bf16.msra.mxu0 %v1056
      %3453 = vmatprep.subr.bf16.mxu0 0
      %3454 = vmatpush1.bf16.msra.mxu0 %v1055
      %3455 = vmatprep.subr.bf16.mxu0 0
      %3456 = vmatpush1.bf16.msra.mxu0 %v1054
      %3457 = vmatprep.subr.bf16.mxu0 0
      %3458 = vmatpush1.bf16.msra.mxu0 %v1053
      %3459 = vmatprep.subr.bf16.mxu0 0
      %3460 = vmatpush1.bf16.msra.mxu0 %v1052
      %3461 = vmatprep.subr.bf16.mxu0 0
      %3462 = vmatpush1.bf16.msra.mxu0 %v1051
      %3463 = vmatprep.subr.bf16.mxu0 0
      %3464 = vmatpush1.bf16.msra.mxu0 %v1050
      %3465 = vmatprep.subr.bf16.mxu0 0
      %3466 = vmatpush1.bf16.msra.mxu0 %v1049
      %3467 = vmatprep.subr.bf16.mxu0 0
      %3468 = vmatpush2.bf16.msra.mxu0 %v1064
      %3469 = vmatprep.subr.bf16.mxu0 0
      %3470 = vmatpush2.bf16.msra.mxu0 %v1063
      %3471 = vmatprep.subr.bf16.mxu0 0
      %3472 = vmatpush2.bf16.msra.mxu0 %v1062
      %3473 = vmatprep.subr.bf16.mxu0 0
      %3474 = vmatpush2.bf16.msra.mxu0 %v1061
      %3475 = vmatprep.subr.bf16.mxu0 0
      %3476 = vmatpush2.bf16.msra.mxu0 %v1060
      %3477 = vmatprep.subr.bf16.mxu0 0
      %3478 = vmatpush2.bf16.msra.mxu0 %v1059
      %3479 = vmatprep.subr.bf16.mxu0 0
      %3480 = vmatpush2.bf16.msra.mxu0 %v1058
      %3481 = vmatprep.subr.bf16.mxu0 0
      %3482 = vmatpush2.bf16.msra.mxu0 %v1057
      %3483 = vmatprep.mubr.bf16.mxu0 %v2366
      %3484 = vmatmul.mubr.bf16.gmra.mxu0 %v2365
      %v3485 = vpop.f32.mrf.mxu0
      %v3486 = vadd.f32 %v3325, %v3485
      %v3487 = vpop.f32.mrf.mxu0
      %v3488 = vpop.f32.mrf.mxu0
      %v3489 = vadd.f32 %v3328, %v3488
      %v3490 = vpop.f32.mrf.mxu0
      %3491 = vmatprep.mubr.bf16.mxu0 %v2390
      %3492 = vmatmul.mubr.bf16.gmra.mxu0 %v2389
      %v3493 = vpop.f32.mrf.mxu0
      %v3494 = vadd.f32 %v3333, %v3493
      %v3495 = vpop.f32.mrf.mxu0
      %v3496 = vpop.f32.mrf.mxu0
      %v3497 = vadd.f32 %v3336, %v3496
      %v3498 = vpop.f32.mrf.mxu0
      %3499 = vmatprep.mubr.bf16.mxu0 %v2414
      %3500 = vmatmul.mubr.bf16.gmra.mxu0 %v2413
      %v3501 = vpop.f32.mrf.mxu0
      %v3502 = vadd.f32 %v3341, %v3501
      %v3503 = vpop.f32.mrf.mxu0
      %v3504 = vpop.f32.mrf.mxu0
      %v3505 = vadd.f32 %v3344, %v3504
      %v3506 = vpop.f32.mrf.mxu0
      %3507 = vmatprep.mubr.bf16.mxu0 %v2438
      %3508 = vmatmul.mubr.bf16.gmra.mxu0 %v2437
      %v3509 = vpop.f32.mrf.mxu0
      %v3510 = vadd.f32 %v3349, %v3509
      %v3511 = vpop.f32.mrf.mxu0
      %v3512 = vpop.f32.mrf.mxu0
      %v3513 = vadd.f32 %v3352, %v3512
      %v3514 = vpop.f32.mrf.mxu0
      %3515 = vmatprep.mubr.bf16.mxu0 %v2462
      %3516 = vmatmul.mubr.bf16.gmra.mxu0 %v2461
      %v3517 = vpop.f32.mrf.mxu0
      %v3518 = vadd.f32 %v3357, %v3517
      %v3519 = vpop.f32.mrf.mxu0
      %v3520 = vpop.f32.mrf.mxu0
      %v3521 = vadd.f32 %v3360, %v3520
      %v3522 = vpop.f32.mrf.mxu0
      %3523 = vmatprep.mubr.bf16.mxu0 %v2486
      %3524 = vmatmul.mubr.bf16.gmra.mxu0 %v2485
      %v3525 = vpop.f32.mrf.mxu0
      %v3526 = vadd.f32 %v3365, %v3525
      %v3527 = vpop.f32.mrf.mxu0
      %v3528 = vpop.f32.mrf.mxu0
      %v3529 = vadd.f32 %v3368, %v3528
      %v3530 = vpop.f32.mrf.mxu0
      %3531 = vmatprep.mubr.bf16.mxu0 %v2510
      %3532 = vmatmul.mubr.bf16.gmra.mxu0 %v2509
      %v3533 = vpop.f32.mrf.mxu0
      %v3534 = vadd.f32 %v3373, %v3533
      %v3535 = vpop.f32.mrf.mxu0
      %v3536 = vpop.f32.mrf.mxu0
      %v3537 = vadd.f32 %v3376, %v3536
      %v3538 = vpop.f32.mrf.mxu0
      %3539 = vmatprep.mubr.bf16.mxu0 %v2534
      %3540 = vmatmul.mubr.bf16.gmra.mxu0 %v2533
      %v3541 = vpop.f32.mrf.mxu0
      %v3542 = vadd.f32 %v3381, %v3541
      %v3543 = vpop.f32.mrf.mxu0
      %v3544 = vpop.f32.mrf.mxu0
      %v3545 = vadd.f32 %v3384, %v3544
      %v3546 = vpop.f32.mrf.mxu0
      %3547 = vmatprep.mubr.bf16.mxu0 %v2558
      %3548 = vmatmul.mubr.bf16.gmra.mxu0 %v2557
      %v3549 = vpop.f32.mrf.mxu0
      %v3550 = vadd.f32 %v3389, %v3549
      %v3551 = vpop.f32.mrf.mxu0
      %v3552 = vpop.f32.mrf.mxu0
      %v3553 = vadd.f32 %v3392, %v3552
      %v3554 = vpop.f32.mrf.mxu0
      %3555 = vmatprep.mubr.bf16.mxu0 %v2582
      %3556 = vmatmul.mubr.bf16.gmra.mxu0 %v2581
      %v3557 = vpop.f32.mrf.mxu0
      %v3558 = vadd.f32 %v3397, %v3557
      %v3559 = vpop.f32.mrf.mxu0
      %v3560 = vpop.f32.mrf.mxu0
      %v3561 = vadd.f32 %v3400, %v3560
      %v3562 = vpop.f32.mrf.mxu0
      %3563 = vmatprep.mubr.bf16.mxu0 %v2606
      %3564 = vmatmul.mubr.bf16.gmra.mxu0 %v2605
      %v3565 = vpop.f32.mrf.mxu0
      %v3566 = vadd.f32 %v3405, %v3565
      %v3567 = vpop.f32.mrf.mxu0
      %v3568 = vpop.f32.mrf.mxu0
      %v3569 = vadd.f32 %v3408, %v3568
      %v3570 = vpop.f32.mrf.mxu0
      %3571 = vmatprep.mubr.bf16.mxu0 %v2630
      %3572 = vmatmul.mubr.bf16.gmra.mxu0 %v2629
      %v3573 = vpop.f32.mrf.mxu0
      %v3574 = vadd.f32 %v3413, %v3573
      %v3575 = vpop.f32.mrf.mxu0
      %v3576 = vpop.f32.mrf.mxu0
      %v3577 = vadd.f32 %v3416, %v3576
      %v3578 = vpop.f32.mrf.mxu0
      %3579 = vmatprep.mubr.bf16.mxu0 %v2654
      %3580 = vmatmul.mubr.bf16.gmra.mxu0 %v2653
      %v3581 = vpop.f32.mrf.mxu0
      %v3582 = vadd.f32 %v3421, %v3581
      %v3583 = vpop.f32.mrf.mxu0
      %v3584 = vpop.f32.mrf.mxu0
      %v3585 = vadd.f32 %v3424, %v3584
      %v3586 = vpop.f32.mrf.mxu0
      %3587 = vmatprep.mubr.bf16.mxu0 %v2678
      %3588 = vmatmul.mubr.bf16.gmra.mxu0 %v2677
      %v3589 = vpop.f32.mrf.mxu0
      %v3590 = vadd.f32 %v3429, %v3589
      %v3591 = vpop.f32.mrf.mxu0
      %v3592 = vpop.f32.mrf.mxu0
      %v3593 = vadd.f32 %v3432, %v3592
      %v3594 = vpop.f32.mrf.mxu0
      %3595 = vmatprep.mubr.bf16.mxu0 %v2702
      %3596 = vmatmul.mubr.bf16.gmra.mxu0 %v2701
      %v3597 = vpop.f32.mrf.mxu0
      %v3598 = vadd.f32 %v3437, %v3597
      %v3599 = vpop.f32.mrf.mxu0
      %v3600 = vpop.f32.mrf.mxu0
      %v3601 = vadd.f32 %v3440, %v3600
      %v3602 = vpop.f32.mrf.mxu0
      %3603 = vmatprep.mubr.bf16.mxu0 %v2726
      %3604 = vmatmul.mubr.bf16.gmra.mxu0 %v2725
      %v3605 = vpop.f32.mrf.mxu0
      %v3606 = vadd.f32 %v3445, %v3605
      %v3607 = vpop.f32.mrf.mxu0
      %v3608 = vpop.f32.mrf.mxu0
      %v3609 = vadd.f32 %v3448, %v3608
      %v3610 = vpop.f32.mrf.mxu0
      %3611 = vdwg.mxu0
      %3612 = vmatprep.subr.bf16.mxu0 0
      %3613 = vmatpush1.bf16.msra.mxu0 %v1072
      %3614 = vmatprep.subr.bf16.mxu0 0
      %3615 = vmatpush1.bf16.msra.mxu0 %v1071
      %3616 = vmatprep.subr.bf16.mxu0 0
      %3617 = vmatpush1.bf16.msra.mxu0 %v1070
      %3618 = vmatprep.subr.bf16.mxu0 0
      %3619 = vmatpush1.bf16.msra.mxu0 %v1069
      %3620 = vmatprep.subr.bf16.mxu0 0
      %3621 = vmatpush1.bf16.msra.mxu0 %v1068
      %3622 = vmatprep.subr.bf16.mxu0 0
      %3623 = vmatpush1.bf16.msra.mxu0 %v1067
      %3624 = vmatprep.subr.bf16.mxu0 0
      %3625 = vmatpush1.bf16.msra.mxu0 %v1066
      %3626 = vmatprep.subr.bf16.mxu0 0
      %3627 = vmatpush1.bf16.msra.mxu0 %v1065
      %3628 = vmatprep.subr.bf16.mxu0 0
      %3629 = vmatpush2.bf16.msra.mxu0 %v1080
      %3630 = vmatprep.subr.bf16.mxu0 0
      %3631 = vmatpush2.bf16.msra.mxu0 %v1079
      %3632 = vmatprep.subr.bf16.mxu0 0
      %3633 = vmatpush2.bf16.msra.mxu0 %v1078
      %3634 = vmatprep.subr.bf16.mxu0 0
      %3635 = vmatpush2.bf16.msra.mxu0 %v1077
      %3636 = vmatprep.subr.bf16.mxu0 0
      %3637 = vmatpush2.bf16.msra.mxu0 %v1076
      %3638 = vmatprep.subr.bf16.mxu0 0
      %3639 = vmatpush2.bf16.msra.mxu0 %v1075
      %3640 = vmatprep.subr.bf16.mxu0 0
      %3641 = vmatpush2.bf16.msra.mxu0 %v1074
      %3642 = vmatprep.subr.bf16.mxu0 0
      %3643 = vmatpush2.bf16.msra.mxu0 %v1073
      %3644 = vmatprep.mubr.bf16.mxu0 %v2368
      %3645 = vmatmul.mubr.bf16.gmra.mxu0 %v2367
      %v3646 = vpop.f32.mrf.mxu0
      %v3647 = vadd.f32 %v3486, %v3646
      %v3648 = vpop.f32.mrf.mxu0
      %v3649 = vpop.f32.mrf.mxu0
      %v3650 = vadd.f32 %v3489, %v3649
      %v3651 = vpop.f32.mrf.mxu0
      %3652 = vmatprep.mubr.bf16.mxu0 %v2392
      %3653 = vmatmul.mubr.bf16.gmra.mxu0 %v2391
      %v3654 = vpop.f32.mrf.mxu0
      %v3655 = vadd.f32 %v3494, %v3654
      %v3656 = vpop.f32.mrf.mxu0
      %v3657 = vpop.f32.mrf.mxu0
      %v3658 = vadd.f32 %v3497, %v3657
      %v3659 = vpop.f32.mrf.mxu0
      %3660 = vmatprep.mubr.bf16.mxu0 %v2416
      %3661 = vmatmul.mubr.bf16.gmra.mxu0 %v2415
      %v3662 = vpop.f32.mrf.mxu0
      %v3663 = vadd.f32 %v3502, %v3662
      %v3664 = vpop.f32.mrf.mxu0
      %v3665 = vpop.f32.mrf.mxu0
      %v3666 = vadd.f32 %v3505, %v3665
      %v3667 = vpop.f32.mrf.mxu0
      %3668 = vmatprep.mubr.bf16.mxu0 %v2440
      %3669 = vmatmul.mubr.bf16.gmra.mxu0 %v2439
      %v3670 = vpop.f32.mrf.mxu0
      %v3671 = vadd.f32 %v3510, %v3670
      %v3672 = vpop.f32.mrf.mxu0
      %v3673 = vpop.f32.mrf.mxu0
      %v3674 = vadd.f32 %v3513, %v3673
      %v3675 = vpop.f32.mrf.mxu0
      %3676 = vmatprep.mubr.bf16.mxu0 %v2464
      %3677 = vmatmul.mubr.bf16.gmra.mxu0 %v2463
      %v3678 = vpop.f32.mrf.mxu0
      %v3679 = vadd.f32 %v3518, %v3678
      %v3680 = vpop.f32.mrf.mxu0
      %v3681 = vpop.f32.mrf.mxu0
      %v3682 = vadd.f32 %v3521, %v3681
      %v3683 = vpop.f32.mrf.mxu0
      %3684 = vmatprep.mubr.bf16.mxu0 %v2488
      %3685 = vmatmul.mubr.bf16.gmra.mxu0 %v2487
      %v3686 = vpop.f32.mrf.mxu0
      %v3687 = vadd.f32 %v3526, %v3686
      %v3688 = vpop.f32.mrf.mxu0
      %v3689 = vpop.f32.mrf.mxu0
      %v3690 = vadd.f32 %v3529, %v3689
      %v3691 = vpop.f32.mrf.mxu0
      %3692 = vmatprep.mubr.bf16.mxu0 %v2512
      %3693 = vmatmul.mubr.bf16.gmra.mxu0 %v2511
      %v3694 = vpop.f32.mrf.mxu0
      %v3695 = vadd.f32 %v3534, %v3694
      %v3696 = vpop.f32.mrf.mxu0
      %v3697 = vpop.f32.mrf.mxu0
      %v3698 = vadd.f32 %v3537, %v3697
      %v3699 = vpop.f32.mrf.mxu0
      %3700 = vmatprep.mubr.bf16.mxu0 %v2536
      %3701 = vmatmul.mubr.bf16.gmra.mxu0 %v2535
      %v3702 = vpop.f32.mrf.mxu0
      %v3703 = vadd.f32 %v3542, %v3702
      %v3704 = vpop.f32.mrf.mxu0
      %v3705 = vpop.f32.mrf.mxu0
      %v3706 = vadd.f32 %v3545, %v3705
      %v3707 = vpop.f32.mrf.mxu0
      %3708 = vmatprep.mubr.bf16.mxu0 %v2560
      %3709 = vmatmul.mubr.bf16.gmra.mxu0 %v2559
      %v3710 = vpop.f32.mrf.mxu0
      %v3711 = vadd.f32 %v3550, %v3710
      %v3712 = vpop.f32.mrf.mxu0
      %v3713 = vpop.f32.mrf.mxu0
      %v3714 = vadd.f32 %v3553, %v3713
      %v3715 = vpop.f32.mrf.mxu0
      %3716 = vmatprep.mubr.bf16.mxu0 %v2584
      %3717 = vmatmul.mubr.bf16.gmra.mxu0 %v2583
      %v3718 = vpop.f32.mrf.mxu0
      %v3719 = vadd.f32 %v3558, %v3718
      %v3720 = vpop.f32.mrf.mxu0
      %v3721 = vpop.f32.mrf.mxu0
      %v3722 = vadd.f32 %v3561, %v3721
      %v3723 = vpop.f32.mrf.mxu0
      %3724 = vmatprep.mubr.bf16.mxu0 %v2608
      %3725 = vmatmul.mubr.bf16.gmra.mxu0 %v2607
      %v3726 = vpop.f32.mrf.mxu0
      %v3727 = vadd.f32 %v3566, %v3726
      %v3728 = vpop.f32.mrf.mxu0
      %v3729 = vpop.f32.mrf.mxu0
      %v3730 = vadd.f32 %v3569, %v3729
      %v3731 = vpop.f32.mrf.mxu0
      %3732 = vmatprep.mubr.bf16.mxu0 %v2632
      %3733 = vmatmul.mubr.bf16.gmra.mxu0 %v2631
      %v3734 = vpop.f32.mrf.mxu0
      %v3735 = vadd.f32 %v3574, %v3734
      %v3736 = vpop.f32.mrf.mxu0
      %v3737 = vpop.f32.mrf.mxu0
      %v3738 = vadd.f32 %v3577, %v3737
      %v3739 = vpop.f32.mrf.mxu0
      %3740 = vmatprep.mubr.bf16.mxu0 %v2656
      %3741 = vmatmul.mubr.bf16.gmra.mxu0 %v2655
      %v3742 = vpop.f32.mrf.mxu0
      %v3743 = vadd.f32 %v3582, %v3742
      %v3744 = vpop.f32.mrf.mxu0
      %v3745 = vpop.f32.mrf.mxu0
      %v3746 = vadd.f32 %v3585, %v3745
      %v3747 = vpop.f32.mrf.mxu0
      %3748 = vmatprep.mubr.bf16.mxu0 %v2680
      %3749 = vmatmul.mubr.bf16.gmra.mxu0 %v2679
      %v3750 = vpop.f32.mrf.mxu0
      %v3751 = vadd.f32 %v3590, %v3750
      %v3752 = vpop.f32.mrf.mxu0
      %v3753 = vpop.f32.mrf.mxu0
      %v3754 = vadd.f32 %v3593, %v3753
      %v3755 = vpop.f32.mrf.mxu0
      %3756 = vmatprep.mubr.bf16.mxu0 %v2704
      %3757 = vmatmul.mubr.bf16.gmra.mxu0 %v2703
      %v3758 = vpop.f32.mrf.mxu0
      %v3759 = vadd.f32 %v3598, %v3758
      %v3760 = vpop.f32.mrf.mxu0
      %v3761 = vpop.f32.mrf.mxu0
      %v3762 = vadd.f32 %v3601, %v3761
      %v3763 = vpop.f32.mrf.mxu0
      %3764 = vmatprep.mubr.bf16.mxu0 %v2728
      %3765 = vmatmul.mubr.bf16.gmra.mxu0 %v2727
      %v3766 = vpop.f32.mrf.mxu0
      %v3767 = vadd.f32 %v3606, %v3766
      %v3768 = vpop.f32.mrf.mxu0
      %v3769 = vpop.f32.mrf.mxu0
      %v3770 = vadd.f32 %v3609, %v3769
      %v3771 = vpop.f32.mrf.mxu0
      %3772 = vdwg.mxu0
      %3773 = vmatprep.subr.bf16.mxu0 0
      %3774 = vmatpush1.bf16.msra.mxu0 %v1088
      %3775 = vmatprep.subr.bf16.mxu0 0
      %3776 = vmatpush1.bf16.msra.mxu0 %v1087
      %3777 = vmatprep.subr.bf16.mxu0 0
      %3778 = vmatpush1.bf16.msra.mxu0 %v1086
      %3779 = vmatprep.subr.bf16.mxu0 0
      %3780 = vmatpush1.bf16.msra.mxu0 %v1085
      %3781 = vmatprep.subr.bf16.mxu0 0
      %3782 = vmatpush1.bf16.msra.mxu0 %v1084
      %3783 = vmatprep.subr.bf16.mxu0 0
      %3784 = vmatpush1.bf16.msra.mxu0 %v1083
      %3785 = vmatprep.subr.bf16.mxu0 0
      %3786 = vmatpush1.bf16.msra.mxu0 %v1082
      %3787 = vmatprep.subr.bf16.mxu0 0
      %3788 = vmatpush1.bf16.msra.mxu0 %v1081
      %3789 = vmatprep.subr.bf16.mxu0 0
      %3790 = vmatpush2.bf16.msra.mxu0 %v1096
      %3791 = vmatprep.subr.bf16.mxu0 0
      %3792 = vmatpush2.bf16.msra.mxu0 %v1095
      %3793 = vmatprep.subr.bf16.mxu0 0
      %3794 = vmatpush2.bf16.msra.mxu0 %v1094
      %3795 = vmatprep.subr.bf16.mxu0 0
      %3796 = vmatpush2.bf16.msra.mxu0 %v1093
      %3797 = vmatprep.subr.bf16.mxu0 0
      %3798 = vmatpush2.bf16.msra.mxu0 %v1092
      %3799 = vmatprep.subr.bf16.mxu0 0
      %3800 = vmatpush2.bf16.msra.mxu0 %v1091
      %3801 = vmatprep.subr.bf16.mxu0 0
      %3802 = vmatpush2.bf16.msra.mxu0 %v1090
      %3803 = vmatprep.subr.bf16.mxu0 0
      %3804 = vmatpush2.bf16.msra.mxu0 %v1089
      %3805 = vmatprep.mubr.bf16.mxu0 %v2370
      %3806 = vmatmul.mubr.bf16.gmra.mxu0 %v2369
      %v3807 = vpop.f32.mrf.mxu0
      %v3808 = vadd.f32 %v3647, %v3807
      %v3809 = vpop.f32.mrf.mxu0
      %v3810 = vpop.f32.mrf.mxu0
      %v3811 = vadd.f32 %v3650, %v3810
      %v3812 = vpop.f32.mrf.mxu0
      %3813 = vmatprep.mubr.bf16.mxu0 %v2394
      %3814 = vmatmul.mubr.bf16.gmra.mxu0 %v2393
      %v3815 = vpop.f32.mrf.mxu0
      %v3816 = vadd.f32 %v3655, %v3815
      %v3817 = vpop.f32.mrf.mxu0
      %v3818 = vpop.f32.mrf.mxu0
      %v3819 = vadd.f32 %v3658, %v3818
      %v3820 = vpop.f32.mrf.mxu0
      %3821 = vmatprep.mubr.bf16.mxu0 %v2418
      %3822 = vmatmul.mubr.bf16.gmra.mxu0 %v2417
      %v3823 = vpop.f32.mrf.mxu0
      %v3824 = vadd.f32 %v3663, %v3823
      %v3825 = vpop.f32.mrf.mxu0
      %v3826 = vpop.f32.mrf.mxu0
      %v3827 = vadd.f32 %v3666, %v3826
      %v3828 = vpop.f32.mrf.mxu0
      %3829 = vmatprep.mubr.bf16.mxu0 %v2442
      %3830 = vmatmul.mubr.bf16.gmra.mxu0 %v2441
      %v3831 = vpop.f32.mrf.mxu0
      %v3832 = vadd.f32 %v3671, %v3831
      %v3833 = vpop.f32.mrf.mxu0
      %v3834 = vpop.f32.mrf.mxu0
      %v3835 = vadd.f32 %v3674, %v3834
      %v3836 = vpop.f32.mrf.mxu0
      %3837 = vmatprep.mubr.bf16.mxu0 %v2466
      %3838 = vmatmul.mubr.bf16.gmra.mxu0 %v2465
      %v3839 = vpop.f32.mrf.mxu0
      %v3840 = vadd.f32 %v3679, %v3839
      %v3841 = vpop.f32.mrf.mxu0
      %v3842 = vpop.f32.mrf.mxu0
      %v3843 = vadd.f32 %v3682, %v3842
      %v3844 = vpop.f32.mrf.mxu0
      %3845 = vmatprep.mubr.bf16.mxu0 %v2490
      %3846 = vmatmul.mubr.bf16.gmra.mxu0 %v2489
      %v3847 = vpop.f32.mrf.mxu0
      %v3848 = vadd.f32 %v3687, %v3847
      %v3849 = vpop.f32.mrf.mxu0
      %v3850 = vpop.f32.mrf.mxu0
      %v3851 = vadd.f32 %v3690, %v3850
      %v3852 = vpop.f32.mrf.mxu0
      %3853 = vmatprep.mubr.bf16.mxu0 %v2514
      %3854 = vmatmul.mubr.bf16.gmra.mxu0 %v2513
      %v3855 = vpop.f32.mrf.mxu0
      %v3856 = vadd.f32 %v3695, %v3855
      %v3857 = vpop.f32.mrf.mxu0
      %v3858 = vpop.f32.mrf.mxu0
      %v3859 = vadd.f32 %v3698, %v3858
      %v3860 = vpop.f32.mrf.mxu0
      %3861 = vmatprep.mubr.bf16.mxu0 %v2538
      %3862 = vmatmul.mubr.bf16.gmra.mxu0 %v2537
      %v3863 = vpop.f32.mrf.mxu0
      %v3864 = vadd.f32 %v3703, %v3863
      %v3865 = vpop.f32.mrf.mxu0
      %v3866 = vpop.f32.mrf.mxu0
      %v3867 = vadd.f32 %v3706, %v3866
      %v3868 = vpop.f32.mrf.mxu0
      %3869 = vmatprep.mubr.bf16.mxu0 %v2562
      %3870 = vmatmul.mubr.bf16.gmra.mxu0 %v2561
      %v3871 = vpop.f32.mrf.mxu0
      %v3872 = vadd.f32 %v3711, %v3871
      %v3873 = vpop.f32.mrf.mxu0
      %v3874 = vpop.f32.mrf.mxu0
      %v3875 = vadd.f32 %v3714, %v3874
      %v3876 = vpop.f32.mrf.mxu0
      %3877 = vmatprep.mubr.bf16.mxu0 %v2586
      %3878 = vmatmul.mubr.bf16.gmra.mxu0 %v2585
      %v3879 = vpop.f32.mrf.mxu0
      %v3880 = vadd.f32 %v3719, %v3879
      %v3881 = vpop.f32.mrf.mxu0
      %v3882 = vpop.f32.mrf.mxu0
      %v3883 = vadd.f32 %v3722, %v3882
      %v3884 = vpop.f32.mrf.mxu0
      %3885 = vmatprep.mubr.bf16.mxu0 %v2610
      %3886 = vmatmul.mubr.bf16.gmra.mxu0 %v2609
      %v3887 = vpop.f32.mrf.mxu0
      %v3888 = vadd.f32 %v3727, %v3887
      %v3889 = vpop.f32.mrf.mxu0
      %v3890 = vpop.f32.mrf.mxu0
      %v3891 = vadd.f32 %v3730, %v3890
      %v3892 = vpop.f32.mrf.mxu0
      %3893 = vmatprep.mubr.bf16.mxu0 %v2634
      %3894 = vmatmul.mubr.bf16.gmra.mxu0 %v2633
      %v3895 = vpop.f32.mrf.mxu0
      %v3896 = vadd.f32 %v3735, %v3895
      %v3897 = vpop.f32.mrf.mxu0
      %v3898 = vpop.f32.mrf.mxu0
      %v3899 = vadd.f32 %v3738, %v3898
      %v3900 = vpop.f32.mrf.mxu0
      %3901 = vmatprep.mubr.bf16.mxu0 %v2658
      %3902 = vmatmul.mubr.bf16.gmra.mxu0 %v2657
      %v3903 = vpop.f32.mrf.mxu0
      %v3904 = vadd.f32 %v3743, %v3903
      %v3905 = vpop.f32.mrf.mxu0
      %v3906 = vpop.f32.mrf.mxu0
      %v3907 = vadd.f32 %v3746, %v3906
      %v3908 = vpop.f32.mrf.mxu0
      %3909 = vmatprep.mubr.bf16.mxu0 %v2682
      %3910 = vmatmul.mubr.bf16.gmra.mxu0 %v2681
      %v3911 = vpop.f32.mrf.mxu0
      %v3912 = vadd.f32 %v3751, %v3911
      %v3913 = vpop.f32.mrf.mxu0
      %v3914 = vpop.f32.mrf.mxu0
      %v3915 = vadd.f32 %v3754, %v3914
      %v3916 = vpop.f32.mrf.mxu0
      %3917 = vmatprep.mubr.bf16.mxu0 %v2706
      %3918 = vmatmul.mubr.bf16.gmra.mxu0 %v2705
      %v3919 = vpop.f32.mrf.mxu0
      %v3920 = vadd.f32 %v3759, %v3919
      %v3921 = vpop.f32.mrf.mxu0
      %v3922 = vpop.f32.mrf.mxu0
      %v3923 = vadd.f32 %v3762, %v3922
      %v3924 = vpop.f32.mrf.mxu0
      %3925 = vmatprep.mubr.bf16.mxu0 %v2730
      %3926 = vmatmul.mubr.bf16.gmra.mxu0 %v2729
      %v3927 = vpop.f32.mrf.mxu0
      %v3928 = vadd.f32 %v3767, %v3927
      %v3929 = vpop.f32.mrf.mxu0
      %v3930 = vpop.f32.mrf.mxu0
      %v3931 = vadd.f32 %v3770, %v3930
      %v3932 = vpop.f32.mrf.mxu0
      %3933 = vdwg.mxu0
      %3934 = vmatprep.subr.bf16.mxu0 0
      %3935 = vmatpush1.bf16.msra.mxu0 %v1104
      %3936 = vmatprep.subr.bf16.mxu0 0
      %3937 = vmatpush1.bf16.msra.mxu0 %v1103
      %3938 = vmatprep.subr.bf16.mxu0 0
      %3939 = vmatpush1.bf16.msra.mxu0 %v1102
      %3940 = vmatprep.subr.bf16.mxu0 0
      %3941 = vmatpush1.bf16.msra.mxu0 %v1101
      %3942 = vmatprep.subr.bf16.mxu0 0
      %3943 = vmatpush1.bf16.msra.mxu0 %v1100
      %3944 = vmatprep.subr.bf16.mxu0 0
      %3945 = vmatpush1.bf16.msra.mxu0 %v1099
      %3946 = vmatprep.subr.bf16.mxu0 0
      %3947 = vmatpush1.bf16.msra.mxu0 %v1098
      %3948 = vmatprep.subr.bf16.mxu0 0
      %3949 = vmatpush1.bf16.msra.mxu0 %v1097
      %3950 = vmatprep.subr.bf16.mxu0 0
      %3951 = vmatpush2.bf16.msra.mxu0 %v1112
      %3952 = vmatprep.subr.bf16.mxu0 0
      %3953 = vmatpush2.bf16.msra.mxu0 %v1111
      %3954 = vmatprep.subr.bf16.mxu0 0
      %3955 = vmatpush2.bf16.msra.mxu0 %v1110
      %3956 = vmatprep.subr.bf16.mxu0 0
      %3957 = vmatpush2.bf16.msra.mxu0 %v1109
      %3958 = vmatprep.subr.bf16.mxu0 0
      %3959 = vmatpush2.bf16.msra.mxu0 %v1108
      %3960 = vmatprep.subr.bf16.mxu0 0
      %3961 = vmatpush2.bf16.msra.mxu0 %v1107
      %3962 = vmatprep.subr.bf16.mxu0 0
      %3963 = vmatpush2.bf16.msra.mxu0 %v1106
      %3964 = vmatprep.subr.bf16.mxu0 0
      %3965 = vmatpush2.bf16.msra.mxu0 %v1105
      %3966 = vmatprep.mubr.bf16.mxu0 %v2372
      %3967 = vmatmul.mubr.bf16.gmra.mxu0 %v2371
      %v3968 = vpop.f32.mrf.mxu0
      %v3969 = vadd.f32 %v3808, %v3968
      %v3970 = vpop.f32.mrf.mxu0
      %v3971 = vpop.f32.mrf.mxu0
      %v3972 = vadd.f32 %v3811, %v3971
      %v3973 = vpop.f32.mrf.mxu0
      %3974 = vmatprep.mubr.bf16.mxu0 %v2396
      %3975 = vmatmul.mubr.bf16.gmra.mxu0 %v2395
      %v3976 = vpop.f32.mrf.mxu0
      %v3977 = vadd.f32 %v3816, %v3976
      %v3978 = vpop.f32.mrf.mxu0
      %v3979 = vpop.f32.mrf.mxu0
      %v3980 = vadd.f32 %v3819, %v3979
      %v3981 = vpop.f32.mrf.mxu0
      %3982 = vmatprep.mubr.bf16.mxu0 %v2420
      %3983 = vmatmul.mubr.bf16.gmra.mxu0 %v2419
      %v3984 = vpop.f32.mrf.mxu0
      %v3985 = vadd.f32 %v3824, %v3984
      %v3986 = vpop.f32.mrf.mxu0
      %v3987 = vpop.f32.mrf.mxu0
      %v3988 = vadd.f32 %v3827, %v3987
      %v3989 = vpop.f32.mrf.mxu0
      %3990 = vmatprep.mubr.bf16.mxu0 %v2444
      %3991 = vmatmul.mubr.bf16.gmra.mxu0 %v2443
      %v3992 = vpop.f32.mrf.mxu0
      %v3993 = vadd.f32 %v3832, %v3992
      %v3994 = vpop.f32.mrf.mxu0
      %v3995 = vpop.f32.mrf.mxu0
      %v3996 = vadd.f32 %v3835, %v3995
      %v3997 = vpop.f32.mrf.mxu0
      %3998 = vmatprep.mubr.bf16.mxu0 %v2468
      %3999 = vmatmul.mubr.bf16.gmra.mxu0 %v2467
      %v4000 = vpop.f32.mrf.mxu0
      %v4001 = vadd.f32 %v3840, %v4000
      %v4002 = vpop.f32.mrf.mxu0
      %v4003 = vpop.f32.mrf.mxu0
      %v4004 = vadd.f32 %v3843, %v4003
      %v4005 = vpop.f32.mrf.mxu0
      %4006 = vmatprep.mubr.bf16.mxu0 %v2492
      %4007 = vmatmul.mubr.bf16.gmra.mxu0 %v2491
      %v4008 = vpop.f32.mrf.mxu0
      %v4009 = vadd.f32 %v3848, %v4008
      %v4010 = vpop.f32.mrf.mxu0
      %v4011 = vpop.f32.mrf.mxu0
      %v4012 = vadd.f32 %v3851, %v4011
      %v4013 = vpop.f32.mrf.mxu0
      %4014 = vmatprep.mubr.bf16.mxu0 %v2516
      %4015 = vmatmul.mubr.bf16.gmra.mxu0 %v2515
      %v4016 = vpop.f32.mrf.mxu0
      %v4017 = vadd.f32 %v3856, %v4016
      %v4018 = vpop.f32.mrf.mxu0
      %v4019 = vpop.f32.mrf.mxu0
      %v4020 = vadd.f32 %v3859, %v4019
      %v4021 = vpop.f32.mrf.mxu0
      %4022 = vmatprep.mubr.bf16.mxu0 %v2540
      %4023 = vmatmul.mubr.bf16.gmra.mxu0 %v2539
      %v4024 = vpop.f32.mrf.mxu0
      %v4025 = vadd.f32 %v3864, %v4024
      %v4026 = vpop.f32.mrf.mxu0
      %v4027 = vpop.f32.mrf.mxu0
      %v4028 = vadd.f32 %v3867, %v4027
      %v4029 = vpop.f32.mrf.mxu0
      %4030 = vmatprep.mubr.bf16.mxu0 %v2564
      %4031 = vmatmul.mubr.bf16.gmra.mxu0 %v2563
      %v4032 = vpop.f32.mrf.mxu0
      %v4033 = vadd.f32 %v3872, %v4032
      %v4034 = vpop.f32.mrf.mxu0
      %v4035 = vpop.f32.mrf.mxu0
      %v4036 = vadd.f32 %v3875, %v4035
      %v4037 = vpop.f32.mrf.mxu0
      %4038 = vmatprep.mubr.bf16.mxu0 %v2588
      %4039 = vmatmul.mubr.bf16.gmra.mxu0 %v2587
      %v4040 = vpop.f32.mrf.mxu0
      %v4041 = vadd.f32 %v3880, %v4040
      %v4042 = vpop.f32.mrf.mxu0
      %v4043 = vpop.f32.mrf.mxu0
      %v4044 = vadd.f32 %v3883, %v4043
      %v4045 = vpop.f32.mrf.mxu0
      %4046 = vmatprep.mubr.bf16.mxu0 %v2612
      %4047 = vmatmul.mubr.bf16.gmra.mxu0 %v2611
      %v4048 = vpop.f32.mrf.mxu0
      %v4049 = vadd.f32 %v3888, %v4048
      %v4050 = vpop.f32.mrf.mxu0
      %v4051 = vpop.f32.mrf.mxu0
      %v4052 = vadd.f32 %v3891, %v4051
      %v4053 = vpop.f32.mrf.mxu0
      %4054 = vmatprep.mubr.bf16.mxu0 %v2636
      %4055 = vmatmul.mubr.bf16.gmra.mxu0 %v2635
      %v4056 = vpop.f32.mrf.mxu0
      %v4057 = vadd.f32 %v3896, %v4056
      %v4058 = vpop.f32.mrf.mxu0
      %v4059 = vpop.f32.mrf.mxu0
      %v4060 = vadd.f32 %v3899, %v4059
      %v4061 = vpop.f32.mrf.mxu0
      %4062 = vmatprep.mubr.bf16.mxu0 %v2660
      %4063 = vmatmul.mubr.bf16.gmra.mxu0 %v2659
      %v4064 = vpop.f32.mrf.mxu0
      %v4065 = vadd.f32 %v3904, %v4064
      %v4066 = vpop.f32.mrf.mxu0
      %v4067 = vpop.f32.mrf.mxu0
      %v4068 = vadd.f32 %v3907, %v4067
      %v4069 = vpop.f32.mrf.mxu0
      %4070 = vmatprep.mubr.bf16.mxu0 %v2684
      %4071 = vmatmul.mubr.bf16.gmra.mxu0 %v2683
      %v4072 = vpop.f32.mrf.mxu0
      %v4073 = vadd.f32 %v3912, %v4072
      %v4074 = vpop.f32.mrf.mxu0
      %v4075 = vpop.f32.mrf.mxu0
      %v4076 = vadd.f32 %v3915, %v4075
      %v4077 = vpop.f32.mrf.mxu0
      %4078 = vmatprep.mubr.bf16.mxu0 %v2708
      %4079 = vmatmul.mubr.bf16.gmra.mxu0 %v2707
      %v4080 = vpop.f32.mrf.mxu0
      %v4081 = vadd.f32 %v3920, %v4080
      %v4082 = vpop.f32.mrf.mxu0
      %v4083 = vpop.f32.mrf.mxu0
      %v4084 = vadd.f32 %v3923, %v4083
      %v4085 = vpop.f32.mrf.mxu0
      %4086 = vmatprep.mubr.bf16.mxu0 %v2732
      %4087 = vmatmul.mubr.bf16.gmra.mxu0 %v2731
      %v4088 = vpop.f32.mrf.mxu0
      %v4089 = vadd.f32 %v3928, %v4088
      %v4090 = vpop.f32.mrf.mxu0
      %v4091 = vpop.f32.mrf.mxu0
      %v4092 = vadd.f32 %v3931, %v4091
      %v4093 = vpop.f32.mrf.mxu0
      %4094 = vdwg.mxu0
      %4095 = vmatprep.subr.bf16.mxu0 0
      %4096 = vmatpush1.bf16.msra.mxu0 %v1120
      %4097 = vmatprep.subr.bf16.mxu0 0
      %4098 = vmatpush1.bf16.msra.mxu0 %v1119
      %4099 = vmatprep.subr.bf16.mxu0 0
      %4100 = vmatpush1.bf16.msra.mxu0 %v1118
      %4101 = vmatprep.subr.bf16.mxu0 0
      %4102 = vmatpush1.bf16.msra.mxu0 %v1117
      %4103 = vmatprep.subr.bf16.mxu0 0
      %4104 = vmatpush1.bf16.msra.mxu0 %v1116
      %4105 = vmatprep.subr.bf16.mxu0 0
      %4106 = vmatpush1.bf16.msra.mxu0 %v1115
      %4107 = vmatprep.subr.bf16.mxu0 0
      %4108 = vmatpush1.bf16.msra.mxu0 %v1114
      %4109 = vmatprep.subr.bf16.mxu0 0
      %4110 = vmatpush1.bf16.msra.mxu0 %v1113
      %4111 = vmatprep.subr.bf16.mxu0 0
      %4112 = vmatpush2.bf16.msra.mxu0 %v1128
      %4113 = vmatprep.subr.bf16.mxu0 0
      %4114 = vmatpush2.bf16.msra.mxu0 %v1127
      %4115 = vmatprep.subr.bf16.mxu0 0
      %4116 = vmatpush2.bf16.msra.mxu0 %v1126
      %4117 = vmatprep.subr.bf16.mxu0 0
      %4118 = vmatpush2.bf16.msra.mxu0 %v1125
      %4119 = vmatprep.subr.bf16.mxu0 0
      %4120 = vmatpush2.bf16.msra.mxu0 %v1124
      %4121 = vmatprep.subr.bf16.mxu0 0
      %4122 = vmatpush2.bf16.msra.mxu0 %v1123
      %4123 = vmatprep.subr.bf16.mxu0 0
      %4124 = vmatpush2.bf16.msra.mxu0 %v1122
      %4125 = vmatprep.subr.bf16.mxu0 0
      %4126 = vmatpush2.bf16.msra.mxu0 %v1121
      %4127 = vmatprep.mubr.bf16.mxu0 %v2374
      %4128 = vmatmul.mubr.bf16.gmra.mxu0 %v2373
      %v4129 = vpop.f32.mrf.mxu0
      %v4130 = vadd.f32 %v3969, %v4129
      %v4131 = vpop.f32.mrf.mxu0
      %v4132 = vpop.f32.mrf.mxu0
      %v4133 = vadd.f32 %v3972, %v4132
      %v4134 = vpop.f32.mrf.mxu0
      %4135 = vmatprep.mubr.bf16.mxu0 %v2398
      %4136 = vmatmul.mubr.bf16.gmra.mxu0 %v2397
      %v4137 = vpop.f32.mrf.mxu0
      %v4138 = vadd.f32 %v3977, %v4137
      %v4139 = vpop.f32.mrf.mxu0
      %v4140 = vpop.f32.mrf.mxu0
      %v4141 = vadd.f32 %v3980, %v4140
      %v4142 = vpop.f32.mrf.mxu0
      %4143 = vmatprep.mubr.bf16.mxu0 %v2422
      %4144 = vmatmul.mubr.bf16.gmra.mxu0 %v2421
      %v4145 = vpop.f32.mrf.mxu0
      %v4146 = vadd.f32 %v3985, %v4145
      %v4147 = vpop.f32.mrf.mxu0
      %v4148 = vpop.f32.mrf.mxu0
      %v4149 = vadd.f32 %v3988, %v4148
      %v4150 = vpop.f32.mrf.mxu0
      %4151 = vmatprep.mubr.bf16.mxu0 %v2446
      %4152 = vmatmul.mubr.bf16.gmra.mxu0 %v2445
      %v4153 = vpop.f32.mrf.mxu0
      %v4154 = vadd.f32 %v3993, %v4153
      %v4155 = vpop.f32.mrf.mxu0
      %v4156 = vpop.f32.mrf.mxu0
      %v4157 = vadd.f32 %v3996, %v4156
      %v4158 = vpop.f32.mrf.mxu0
      %4159 = vmatprep.mubr.bf16.mxu0 %v2470
      %4160 = vmatmul.mubr.bf16.gmra.mxu0 %v2469
      %v4161 = vpop.f32.mrf.mxu0
      %v4162 = vadd.f32 %v4001, %v4161
      %v4163 = vpop.f32.mrf.mxu0
      %v4164 = vpop.f32.mrf.mxu0
      %v4165 = vadd.f32 %v4004, %v4164
      %v4166 = vpop.f32.mrf.mxu0
      %4167 = vmatprep.mubr.bf16.mxu0 %v2494
      %4168 = vmatmul.mubr.bf16.gmra.mxu0 %v2493
      %v4169 = vpop.f32.mrf.mxu0
      %v4170 = vadd.f32 %v4009, %v4169
      %v4171 = vpop.f32.mrf.mxu0
      %v4172 = vpop.f32.mrf.mxu0
      %v4173 = vadd.f32 %v4012, %v4172
      %v4174 = vpop.f32.mrf.mxu0
      %4175 = vmatprep.mubr.bf16.mxu0 %v2518
      %4176 = vmatmul.mubr.bf16.gmra.mxu0 %v2517
      %v4177 = vpop.f32.mrf.mxu0
      %v4178 = vadd.f32 %v4017, %v4177
      %v4179 = vpop.f32.mrf.mxu0
      %v4180 = vpop.f32.mrf.mxu0
      %v4181 = vadd.f32 %v4020, %v4180
      %v4182 = vpop.f32.mrf.mxu0
      %4183 = vmatprep.mubr.bf16.mxu0 %v2542
      %4184 = vmatmul.mubr.bf16.gmra.mxu0 %v2541
      %v4185 = vpop.f32.mrf.mxu0
      %v4186 = vadd.f32 %v4025, %v4185
      %v4187 = vpop.f32.mrf.mxu0
      %v4188 = vpop.f32.mrf.mxu0
      %v4189 = vadd.f32 %v4028, %v4188
      %v4190 = vpop.f32.mrf.mxu0
      %4191 = vmatprep.mubr.bf16.mxu0 %v2566
      %4192 = vmatmul.mubr.bf16.gmra.mxu0 %v2565
      %v4193 = vpop.f32.mrf.mxu0
      %v4194 = vadd.f32 %v4033, %v4193
      %v4195 = vpop.f32.mrf.mxu0
      %v4196 = vpop.f32.mrf.mxu0
      %v4197 = vadd.f32 %v4036, %v4196
      %v4198 = vpop.f32.mrf.mxu0
      %4199 = vmatprep.mubr.bf16.mxu0 %v2590
      %4200 = vmatmul.mubr.bf16.gmra.mxu0 %v2589
      %v4201 = vpop.f32.mrf.mxu0
      %v4202 = vadd.f32 %v4041, %v4201
      %v4203 = vpop.f32.mrf.mxu0
      %v4204 = vpop.f32.mrf.mxu0
      %v4205 = vadd.f32 %v4044, %v4204
      %v4206 = vpop.f32.mrf.mxu0
      %4207 = vmatprep.mubr.bf16.mxu0 %v2614
      %4208 = vmatmul.mubr.bf16.gmra.mxu0 %v2613
      %v4209 = vpop.f32.mrf.mxu0
      %v4210 = vadd.f32 %v4049, %v4209
      %v4211 = vpop.f32.mrf.mxu0
      %v4212 = vpop.f32.mrf.mxu0
      %v4213 = vadd.f32 %v4052, %v4212
      %v4214 = vpop.f32.mrf.mxu0
      %4215 = vmatprep.mubr.bf16.mxu0 %v2638
      %4216 = vmatmul.mubr.bf16.gmra.mxu0 %v2637
      %v4217 = vpop.f32.mrf.mxu0
      %v4218 = vadd.f32 %v4057, %v4217
      %v4219 = vpop.f32.mrf.mxu0
      %v4220 = vpop.f32.mrf.mxu0
      %v4221 = vadd.f32 %v4060, %v4220
      %v4222 = vpop.f32.mrf.mxu0
      %4223 = vmatprep.mubr.bf16.mxu0 %v2662
      %4224 = vmatmul.mubr.bf16.gmra.mxu0 %v2661
      %v4225 = vpop.f32.mrf.mxu0
      %v4226 = vadd.f32 %v4065, %v4225
      %v4227 = vpop.f32.mrf.mxu0
      %v4228 = vpop.f32.mrf.mxu0
      %v4229 = vadd.f32 %v4068, %v4228
      %v4230 = vpop.f32.mrf.mxu0
      %4231 = vmatprep.mubr.bf16.mxu0 %v2686
      %4232 = vmatmul.mubr.bf16.gmra.mxu0 %v2685
      %v4233 = vpop.f32.mrf.mxu0
      %v4234 = vadd.f32 %v4073, %v4233
      %v4235 = vpop.f32.mrf.mxu0
      %v4236 = vpop.f32.mrf.mxu0
      %v4237 = vadd.f32 %v4076, %v4236
      %v4238 = vpop.f32.mrf.mxu0
      %4239 = vmatprep.mubr.bf16.mxu0 %v2710
      %4240 = vmatmul.mubr.bf16.gmra.mxu0 %v2709
      %v4241 = vpop.f32.mrf.mxu0
      %v4242 = vadd.f32 %v4081, %v4241
      %v4243 = vpop.f32.mrf.mxu0
      %v4244 = vpop.f32.mrf.mxu0
      %v4245 = vadd.f32 %v4084, %v4244
      %v4246 = vpop.f32.mrf.mxu0
      %4247 = vmatprep.mubr.bf16.mxu0 %v2734
      %4248 = vmatmul.mubr.bf16.gmra.mxu0 %v2733
      %v4249 = vpop.f32.mrf.mxu0
      %v4250 = vadd.f32 %v4089, %v4249
      %v4251 = vpop.f32.mrf.mxu0
      %v4252 = vpop.f32.mrf.mxu0
      %v4253 = vadd.f32 %v4092, %v4252
      %v4254 = vpop.f32.mrf.mxu0
      %4255 = vdwg.mxu0
      %4256 = vmatprep.subr.bf16.mxu0 0
      %4257 = vmatpush1.bf16.msra.mxu0 %v1136
      %4258 = vmatprep.subr.bf16.mxu0 0
      %4259 = vmatpush1.bf16.msra.mxu0 %v1135
      %4260 = vmatprep.subr.bf16.mxu0 0
      %4261 = vmatpush1.bf16.msra.mxu0 %v1134
      %4262 = vmatprep.subr.bf16.mxu0 0
      %4263 = vmatpush1.bf16.msra.mxu0 %v1133
      %4264 = vmatprep.subr.bf16.mxu0 0
      %4265 = vmatpush1.bf16.msra.mxu0 %v1132
      %4266 = vmatprep.subr.bf16.mxu0 0
      %4267 = vmatpush1.bf16.msra.mxu0 %v1131
      %4268 = vmatprep.subr.bf16.mxu0 0
      %4269 = vmatpush1.bf16.msra.mxu0 %v1130
      %4270 = vmatprep.subr.bf16.mxu0 0
      %4271 = vmatpush1.bf16.msra.mxu0 %v1129
      %4272 = vmatprep.subr.bf16.mxu0 0
      %4273 = vmatpush2.bf16.msra.mxu0 %v1144
      %4274 = vmatprep.subr.bf16.mxu0 0
      %4275 = vmatpush2.bf16.msra.mxu0 %v1143
      %4276 = vmatprep.subr.bf16.mxu0 0
      %4277 = vmatpush2.bf16.msra.mxu0 %v1142
      %4278 = vmatprep.subr.bf16.mxu0 0
      %4279 = vmatpush2.bf16.msra.mxu0 %v1141
      %4280 = vmatprep.subr.bf16.mxu0 0
      %4281 = vmatpush2.bf16.msra.mxu0 %v1140
      %4282 = vmatprep.subr.bf16.mxu0 0
      %4283 = vmatpush2.bf16.msra.mxu0 %v1139
      %4284 = vmatprep.subr.bf16.mxu0 0
      %4285 = vmatpush2.bf16.msra.mxu0 %v1138
      %4286 = vmatprep.subr.bf16.mxu0 0
      %4287 = vmatpush2.bf16.msra.mxu0 %v1137
      %4288 = vmatprep.mubr.bf16.mxu0 %v2376
      %4289 = vmatmul.mubr.bf16.gmra.mxu0 %v2375
      %v4290 = vpop.f32.mrf.mxu0
      %v4291 = vadd.f32 %v4130, %v4290
      %v4292 = vpop.f32.mrf.mxu0
      %v4293 = vpop.f32.mrf.mxu0
      %v4294 = vadd.f32 %v4133, %v4293
      %v4295 = vpop.f32.mrf.mxu0
      %4296 = vmatprep.mubr.bf16.mxu0 %v2400
      %4297 = vmatmul.mubr.bf16.gmra.mxu0 %v2399
      %v4298 = vpop.f32.mrf.mxu0
      %v4299 = vadd.f32 %v4138, %v4298
      %v4300 = vpop.f32.mrf.mxu0
      %v4301 = vpop.f32.mrf.mxu0
      %v4302 = vadd.f32 %v4141, %v4301
      %v4303 = vpop.f32.mrf.mxu0
      %4304 = vmatprep.mubr.bf16.mxu0 %v2424
      %4305 = vmatmul.mubr.bf16.gmra.mxu0 %v2423
      %v4306 = vpop.f32.mrf.mxu0
      %v4307 = vadd.f32 %v4146, %v4306
      %v4308 = vpop.f32.mrf.mxu0
      %v4309 = vpop.f32.mrf.mxu0
      %v4310 = vadd.f32 %v4149, %v4309
      %v4311 = vpop.f32.mrf.mxu0
      %4312 = vmatprep.mubr.bf16.mxu0 %v2448
      %4313 = vmatmul.mubr.bf16.gmra.mxu0 %v2447
      %v4314 = vpop.f32.mrf.mxu0
      %v4315 = vadd.f32 %v4154, %v4314
      %v4316 = vpop.f32.mrf.mxu0
      %v4317 = vpop.f32.mrf.mxu0
      %v4318 = vadd.f32 %v4157, %v4317
      %v4319 = vpop.f32.mrf.mxu0
      %4320 = vmatprep.mubr.bf16.mxu0 %v2472
      %4321 = vmatmul.mubr.bf16.gmra.mxu0 %v2471
      %v4322 = vpop.f32.mrf.mxu0
      %v4323 = vadd.f32 %v4162, %v4322
      %v4324 = vpop.f32.mrf.mxu0
      %v4325 = vpop.f32.mrf.mxu0
      %v4326 = vadd.f32 %v4165, %v4325
      %v4327 = vpop.f32.mrf.mxu0
      %4328 = vmatprep.mubr.bf16.mxu0 %v2496
      %4329 = vmatmul.mubr.bf16.gmra.mxu0 %v2495
      %v4330 = vpop.f32.mrf.mxu0
      %v4331 = vadd.f32 %v4170, %v4330
      %v4332 = vpop.f32.mrf.mxu0
      %v4333 = vpop.f32.mrf.mxu0
      %v4334 = vadd.f32 %v4173, %v4333
      %v4335 = vpop.f32.mrf.mxu0
      %4336 = vmatprep.mubr.bf16.mxu0 %v2520
      %4337 = vmatmul.mubr.bf16.gmra.mxu0 %v2519
      %v4338 = vpop.f32.mrf.mxu0
      %v4339 = vadd.f32 %v4178, %v4338
      %v4340 = vpop.f32.mrf.mxu0
      %v4341 = vpop.f32.mrf.mxu0
      %v4342 = vadd.f32 %v4181, %v4341
      %v4343 = vpop.f32.mrf.mxu0
      %4344 = vmatprep.mubr.bf16.mxu0 %v2544
      %4345 = vmatmul.mubr.bf16.gmra.mxu0 %v2543
      %v4346 = vpop.f32.mrf.mxu0
      %v4347 = vadd.f32 %v4186, %v4346
      %v4348 = vpop.f32.mrf.mxu0
      %v4349 = vpop.f32.mrf.mxu0
      %v4350 = vadd.f32 %v4189, %v4349
      %v4351 = vpop.f32.mrf.mxu0
      %4352 = vmatprep.mubr.bf16.mxu0 %v2568
      %4353 = vmatmul.mubr.bf16.gmra.mxu0 %v2567
      %v4354 = vpop.f32.mrf.mxu0
      %v4355 = vadd.f32 %v4194, %v4354
      %v4356 = vpop.f32.mrf.mxu0
      %v4357 = vpop.f32.mrf.mxu0
      %v4358 = vadd.f32 %v4197, %v4357
      %v4359 = vpop.f32.mrf.mxu0
      %4360 = vmatprep.mubr.bf16.mxu0 %v2592
      %4361 = vmatmul.mubr.bf16.gmra.mxu0 %v2591
      %v4362 = vpop.f32.mrf.mxu0
      %v4363 = vadd.f32 %v4202, %v4362
      %v4364 = vpop.f32.mrf.mxu0
      %v4365 = vpop.f32.mrf.mxu0
      %v4366 = vadd.f32 %v4205, %v4365
      %v4367 = vpop.f32.mrf.mxu0
      %4368 = vmatprep.mubr.bf16.mxu0 %v2616
      %4369 = vmatmul.mubr.bf16.gmra.mxu0 %v2615
      %v4370 = vpop.f32.mrf.mxu0
      %v4371 = vadd.f32 %v4210, %v4370
      %v4372 = vpop.f32.mrf.mxu0
      %v4373 = vpop.f32.mrf.mxu0
      %v4374 = vadd.f32 %v4213, %v4373
      %v4375 = vpop.f32.mrf.mxu0
      %4376 = vmatprep.mubr.bf16.mxu0 %v2640
      %4377 = vmatmul.mubr.bf16.gmra.mxu0 %v2639
      %v4378 = vpop.f32.mrf.mxu0
      %v4379 = vadd.f32 %v4218, %v4378
      %v4380 = vpop.f32.mrf.mxu0
      %v4381 = vpop.f32.mrf.mxu0
      %v4382 = vadd.f32 %v4221, %v4381
      %v4383 = vpop.f32.mrf.mxu0
      %4384 = vmatprep.mubr.bf16.mxu0 %v2664
      %4385 = vmatmul.mubr.bf16.gmra.mxu0 %v2663
      %v4386 = vpop.f32.mrf.mxu0
      %v4387 = vadd.f32 %v4226, %v4386
      %v4388 = vpop.f32.mrf.mxu0
      %v4389 = vpop.f32.mrf.mxu0
      %v4390 = vadd.f32 %v4229, %v4389
      %v4391 = vpop.f32.mrf.mxu0
      %4392 = vmatprep.mubr.bf16.mxu0 %v2688
      %4393 = vmatmul.mubr.bf16.gmra.mxu0 %v2687
      %v4394 = vpop.f32.mrf.mxu0
      %v4395 = vadd.f32 %v4234, %v4394
      %v4396 = vpop.f32.mrf.mxu0
      %v4397 = vpop.f32.mrf.mxu0
      %v4398 = vadd.f32 %v4237, %v4397
      %v4399 = vpop.f32.mrf.mxu0
      %4400 = vmatprep.mubr.bf16.mxu0 %v2712
      %4401 = vmatmul.mubr.bf16.gmra.mxu0 %v2711
      %v4402 = vpop.f32.mrf.mxu0
      %v4403 = vadd.f32 %v4242, %v4402
      %v4404 = vpop.f32.mrf.mxu0
      %v4405 = vpop.f32.mrf.mxu0
      %v4406 = vadd.f32 %v4245, %v4405
      %v4407 = vpop.f32.mrf.mxu0
      %4408 = vmatprep.mubr.bf16.mxu0 %v2736
      %4409 = vmatmul.mubr.bf16.gmra.mxu0 %v2735
      %v4410 = vpop.f32.mrf.mxu0
      %v4411 = vadd.f32 %v4250, %v4410
      %v4412 = vpop.f32.mrf.mxu0
      %v4413 = vpop.f32.mrf.mxu0
      %v4414 = vadd.f32 %v4253, %v4413
      %v4415 = vpop.f32.mrf.mxu0
      %4416 = vdwg.mxu0
      %4417 = vmatprep.subr.bf16.mxu0 0
      %4418 = vmatpush1.bf16.msra.mxu0 %v1152
      %4419 = vmatprep.subr.bf16.mxu0 0
      %4420 = vmatpush1.bf16.msra.mxu0 %v1151
      %4421 = vmatprep.subr.bf16.mxu0 0
      %4422 = vmatpush1.bf16.msra.mxu0 %v1150
      %4423 = vmatprep.subr.bf16.mxu0 0
      %4424 = vmatpush1.bf16.msra.mxu0 %v1149
      %4425 = vmatprep.subr.bf16.mxu0 0
      %4426 = vmatpush1.bf16.msra.mxu0 %v1148
      %4427 = vmatprep.subr.bf16.mxu0 0
      %4428 = vmatpush1.bf16.msra.mxu0 %v1147
      %4429 = vmatprep.subr.bf16.mxu0 0
      %4430 = vmatpush1.bf16.msra.mxu0 %v1146
      %4431 = vmatprep.subr.bf16.mxu0 0
      %4432 = vmatpush1.bf16.msra.mxu0 %v1145
      %4433 = vmatprep.subr.bf16.mxu0 0
      %4434 = vmatpush2.bf16.msra.mxu0 %v1160
      %4435 = vmatprep.subr.bf16.mxu0 0
      %4436 = vmatpush2.bf16.msra.mxu0 %v1159
      %4437 = vmatprep.subr.bf16.mxu0 0
      %4438 = vmatpush2.bf16.msra.mxu0 %v1158
      %4439 = vmatprep.subr.bf16.mxu0 0
      %4440 = vmatpush2.bf16.msra.mxu0 %v1157
      %4441 = vmatprep.subr.bf16.mxu0 0
      %4442 = vmatpush2.bf16.msra.mxu0 %v1156
      %4443 = vmatprep.subr.bf16.mxu0 0
      %4444 = vmatpush2.bf16.msra.mxu0 %v1155
      %4445 = vmatprep.subr.bf16.mxu0 0
      %4446 = vmatpush2.bf16.msra.mxu0 %v1154
      %4447 = vmatprep.subr.bf16.mxu0 0
      %4448 = vmatpush2.bf16.msra.mxu0 %v1153
      %4449 = vmatprep.mubr.bf16.mxu0 %v2378
      %4450 = vmatmul.mubr.bf16.gmra.mxu0 %v2377
      %v4451 = vpop.f32.mrf.mxu0
      %v4452 = vadd.f32 %v4291, %v4451
      %v4453 = vpop.f32.mrf.mxu0
      %v4454 = vpop.f32.mrf.mxu0
      %v4455 = vadd.f32 %v4294, %v4454
      %v4456 = vpop.f32.mrf.mxu0
      %4457 = vmatprep.mubr.bf16.mxu0 %v2402
      %4458 = vmatmul.mubr.bf16.gmra.mxu0 %v2401
      %v4459 = vpop.f32.mrf.mxu0
      %v4460 = vadd.f32 %v4299, %v4459
      %v4461 = vpop.f32.mrf.mxu0
      %v4462 = vpop.f32.mrf.mxu0
      %v4463 = vadd.f32 %v4302, %v4462
      %v4464 = vpop.f32.mrf.mxu0
      %4465 = vmatprep.mubr.bf16.mxu0 %v2426
      %4466 = vmatmul.mubr.bf16.gmra.mxu0 %v2425
      %v4467 = vpop.f32.mrf.mxu0
      %v4468 = vadd.f32 %v4307, %v4467
      %v4469 = vpop.f32.mrf.mxu0
      %v4470 = vpop.f32.mrf.mxu0
      %v4471 = vadd.f32 %v4310, %v4470
      %v4472 = vpop.f32.mrf.mxu0
      %4473 = vmatprep.mubr.bf16.mxu0 %v2450
      %4474 = vmatmul.mubr.bf16.gmra.mxu0 %v2449
      %v4475 = vpop.f32.mrf.mxu0
      %v4476 = vadd.f32 %v4315, %v4475
      %v4477 = vpop.f32.mrf.mxu0
      %v4478 = vpop.f32.mrf.mxu0
      %v4479 = vadd.f32 %v4318, %v4478
      %v4480 = vpop.f32.mrf.mxu0
      %4481 = vmatprep.mubr.bf16.mxu0 %v2474
      %4482 = vmatmul.mubr.bf16.gmra.mxu0 %v2473
      %v4483 = vpop.f32.mrf.mxu0
      %v4484 = vadd.f32 %v4323, %v4483
      %v4485 = vpop.f32.mrf.mxu0
      %v4486 = vpop.f32.mrf.mxu0
      %v4487 = vadd.f32 %v4326, %v4486
      %v4488 = vpop.f32.mrf.mxu0
      %4489 = vmatprep.mubr.bf16.mxu0 %v2498
      %4490 = vmatmul.mubr.bf16.gmra.mxu0 %v2497
      %v4491 = vpop.f32.mrf.mxu0
      %v4492 = vadd.f32 %v4331, %v4491
      %v4493 = vpop.f32.mrf.mxu0
      %v4494 = vpop.f32.mrf.mxu0
      %v4495 = vadd.f32 %v4334, %v4494
      %v4496 = vpop.f32.mrf.mxu0
      %4497 = vmatprep.mubr.bf16.mxu0 %v2522
      %4498 = vmatmul.mubr.bf16.gmra.mxu0 %v2521
      %v4499 = vpop.f32.mrf.mxu0
      %v4500 = vadd.f32 %v4339, %v4499
      %v4501 = vpop.f32.mrf.mxu0
      %v4502 = vpop.f32.mrf.mxu0
      %v4503 = vadd.f32 %v4342, %v4502
      %v4504 = vpop.f32.mrf.mxu0
      %4505 = vmatprep.mubr.bf16.mxu0 %v2546
      %4506 = vmatmul.mubr.bf16.gmra.mxu0 %v2545
      %v4507 = vpop.f32.mrf.mxu0
      %v4508 = vadd.f32 %v4347, %v4507
      %v4509 = vpop.f32.mrf.mxu0
      %v4510 = vpop.f32.mrf.mxu0
      %v4511 = vadd.f32 %v4350, %v4510
      %v4512 = vpop.f32.mrf.mxu0
      %4513 = vmatprep.mubr.bf16.mxu0 %v2570
      %4514 = vmatmul.mubr.bf16.gmra.mxu0 %v2569
      %v4515 = vpop.f32.mrf.mxu0
      %v4516 = vadd.f32 %v4355, %v4515
      %v4517 = vpop.f32.mrf.mxu0
      %v4518 = vpop.f32.mrf.mxu0
      %v4519 = vadd.f32 %v4358, %v4518
      %v4520 = vpop.f32.mrf.mxu0
      %4521 = vmatprep.mubr.bf16.mxu0 %v2594
      %4522 = vmatmul.mubr.bf16.gmra.mxu0 %v2593
      %v4523 = vpop.f32.mrf.mxu0
      %v4524 = vadd.f32 %v4363, %v4523
      %v4525 = vpop.f32.mrf.mxu0
      %v4526 = vpop.f32.mrf.mxu0
      %v4527 = vadd.f32 %v4366, %v4526
      %v4528 = vpop.f32.mrf.mxu0
      %4529 = vmatprep.mubr.bf16.mxu0 %v2618
      %4530 = vmatmul.mubr.bf16.gmra.mxu0 %v2617
      %v4531 = vpop.f32.mrf.mxu0
      %v4532 = vadd.f32 %v4371, %v4531
      %v4533 = vpop.f32.mrf.mxu0
      %v4534 = vpop.f32.mrf.mxu0
      %v4535 = vadd.f32 %v4374, %v4534
      %v4536 = vpop.f32.mrf.mxu0
      %4537 = vmatprep.mubr.bf16.mxu0 %v2642
      %4538 = vmatmul.mubr.bf16.gmra.mxu0 %v2641
      %v4539 = vpop.f32.mrf.mxu0
      %v4540 = vadd.f32 %v4379, %v4539
      %v4541 = vpop.f32.mrf.mxu0
      %v4542 = vpop.f32.mrf.mxu0
      %v4543 = vadd.f32 %v4382, %v4542
      %v4544 = vpop.f32.mrf.mxu0
      %4545 = vmatprep.mubr.bf16.mxu0 %v2666
      %4546 = vmatmul.mubr.bf16.gmra.mxu0 %v2665
      %v4547 = vpop.f32.mrf.mxu0
      %v4548 = vadd.f32 %v4387, %v4547
      %v4549 = vpop.f32.mrf.mxu0
      %v4550 = vpop.f32.mrf.mxu0
      %v4551 = vadd.f32 %v4390, %v4550
      %v4552 = vpop.f32.mrf.mxu0
      %4553 = vmatprep.mubr.bf16.mxu0 %v2690
      %4554 = vmatmul.mubr.bf16.gmra.mxu0 %v2689
      %v4555 = vpop.f32.mrf.mxu0
      %v4556 = vadd.f32 %v4395, %v4555
      %v4557 = vpop.f32.mrf.mxu0
      %v4558 = vpop.f32.mrf.mxu0
      %v4559 = vadd.f32 %v4398, %v4558
      %v4560 = vpop.f32.mrf.mxu0
      %4561 = vmatprep.mubr.bf16.mxu0 %v2714
      %4562 = vmatmul.mubr.bf16.gmra.mxu0 %v2713
      %v4563 = vpop.f32.mrf.mxu0
      %v4564 = vadd.f32 %v4403, %v4563
      %v4565 = vpop.f32.mrf.mxu0
      %v4566 = vpop.f32.mrf.mxu0
      %v4567 = vadd.f32 %v4406, %v4566
      %v4568 = vpop.f32.mrf.mxu0
      %4569 = vmatprep.mubr.bf16.mxu0 %v2738
      %4570 = vmatmul.mubr.bf16.gmra.mxu0 %v2737
      %v4571 = vpop.f32.mrf.mxu0
      %v4572 = vadd.f32 %v4411, %v4571
      %v4573 = vpop.f32.mrf.mxu0
      %v4574 = vpop.f32.mrf.mxu0
      %v4575 = vadd.f32 %v4414, %v4574
      %v4576 = vpop.f32.mrf.mxu0
      %4577 = vdwg.mxu0
      %4578 = vmatprep.subr.bf16.mxu0 0
      %4579 = vmatpush1.bf16.msra.mxu0 %v1168
      %4580 = vmatprep.subr.bf16.mxu0 0
      %4581 = vmatpush1.bf16.msra.mxu0 %v1167
      %4582 = vmatprep.subr.bf16.mxu0 0
      %4583 = vmatpush1.bf16.msra.mxu0 %v1166
      %4584 = vmatprep.subr.bf16.mxu0 0
      %4585 = vmatpush1.bf16.msra.mxu0 %v1165
      %4586 = vmatprep.subr.bf16.mxu0 0
      %4587 = vmatpush1.bf16.msra.mxu0 %v1164
      %4588 = vmatprep.subr.bf16.mxu0 0
      %4589 = vmatpush1.bf16.msra.mxu0 %v1163
      %4590 = vmatprep.subr.bf16.mxu0 0
      %4591 = vmatpush1.bf16.msra.mxu0 %v1162
      %4592 = vmatprep.subr.bf16.mxu0 0
      %4593 = vmatpush1.bf16.msra.mxu0 %v1161
      %4594 = vmatprep.subr.bf16.mxu0 0
      %4595 = vmatpush2.bf16.msra.mxu0 %v1176
      %4596 = vmatprep.subr.bf16.mxu0 0
      %4597 = vmatpush2.bf16.msra.mxu0 %v1175
      %4598 = vmatprep.subr.bf16.mxu0 0
      %4599 = vmatpush2.bf16.msra.mxu0 %v1174
      %4600 = vmatprep.subr.bf16.mxu0 0
      %4601 = vmatpush2.bf16.msra.mxu0 %v1173
      %4602 = vmatprep.subr.bf16.mxu0 0
      %4603 = vmatpush2.bf16.msra.mxu0 %v1172
      %4604 = vmatprep.subr.bf16.mxu0 0
      %4605 = vmatpush2.bf16.msra.mxu0 %v1171
      %4606 = vmatprep.subr.bf16.mxu0 0
      %4607 = vmatpush2.bf16.msra.mxu0 %v1170
      %4608 = vmatprep.subr.bf16.mxu0 0
      %4609 = vmatpush2.bf16.msra.mxu0 %v1169
      %4610 = vmatprep.mubr.bf16.mxu0 %v2380
      %4611 = vmatmul.mubr.bf16.gmra.mxu0 %v2379
      %v4612 = vpop.f32.mrf.mxu0
      %v4613 = vadd.f32 %v4452, %v4612
      %v4614 = vpop.f32.mrf.mxu0
      %v4615 = vpop.f32.mrf.mxu0
      %v4616 = vadd.f32 %v4455, %v4615
      %v4617 = vpop.f32.mrf.mxu0
      %4618 = vmatprep.mubr.bf16.mxu0 %v2404
      %4619 = vmatmul.mubr.bf16.gmra.mxu0 %v2403
      %v4620 = vpop.f32.mrf.mxu0
      %v4621 = vadd.f32 %v4460, %v4620
      %v4622 = vpop.f32.mrf.mxu0
      %v4623 = vpop.f32.mrf.mxu0
      %v4624 = vadd.f32 %v4463, %v4623
      %v4625 = vpop.f32.mrf.mxu0
      %4626 = vmatprep.mubr.bf16.mxu0 %v2428
      %4627 = vmatmul.mubr.bf16.gmra.mxu0 %v2427
      %v4628 = vpop.f32.mrf.mxu0
      %v4629 = vadd.f32 %v4468, %v4628
      %v4630 = vpop.f32.mrf.mxu0
      %v4631 = vpop.f32.mrf.mxu0
      %v4632 = vadd.f32 %v4471, %v4631
      %v4633 = vpop.f32.mrf.mxu0
      %4634 = vmatprep.mubr.bf16.mxu0 %v2452
      %4635 = vmatmul.mubr.bf16.gmra.mxu0 %v2451
      %v4636 = vpop.f32.mrf.mxu0
      %v4637 = vadd.f32 %v4476, %v4636
      %v4638 = vpop.f32.mrf.mxu0
      %v4639 = vpop.f32.mrf.mxu0
      %v4640 = vadd.f32 %v4479, %v4639
      %v4641 = vpop.f32.mrf.mxu0
      %4642 = vmatprep.mubr.bf16.mxu0 %v2476
      %4643 = vmatmul.mubr.bf16.gmra.mxu0 %v2475
      %v4644 = vpop.f32.mrf.mxu0
      %v4645 = vadd.f32 %v4484, %v4644
      %v4646 = vpop.f32.mrf.mxu0
      %v4647 = vpop.f32.mrf.mxu0
      %v4648 = vadd.f32 %v4487, %v4647
      %v4649 = vpop.f32.mrf.mxu0
      %4650 = vmatprep.mubr.bf16.mxu0 %v2500
      %4651 = vmatmul.mubr.bf16.gmra.mxu0 %v2499
      %v4652 = vpop.f32.mrf.mxu0
      %v4653 = vadd.f32 %v4492, %v4652
      %v4654 = vpop.f32.mrf.mxu0
      %v4655 = vpop.f32.mrf.mxu0
      %v4656 = vadd.f32 %v4495, %v4655
      %v4657 = vpop.f32.mrf.mxu0
      %4658 = vmatprep.mubr.bf16.mxu0 %v2524
      %4659 = vmatmul.mubr.bf16.gmra.mxu0 %v2523
      %v4660 = vpop.f32.mrf.mxu0
      %v4661 = vadd.f32 %v4500, %v4660
      %v4662 = vpop.f32.mrf.mxu0
      %v4663 = vpop.f32.mrf.mxu0
      %v4664 = vadd.f32 %v4503, %v4663
      %v4665 = vpop.f32.mrf.mxu0
      %4666 = vmatprep.mubr.bf16.mxu0 %v2548
      %4667 = vmatmul.mubr.bf16.gmra.mxu0 %v2547
      %v4668 = vpop.f32.mrf.mxu0
      %v4669 = vadd.f32 %v4508, %v4668
      %v4670 = vpop.f32.mrf.mxu0
      %v4671 = vpop.f32.mrf.mxu0
      %v4672 = vadd.f32 %v4511, %v4671
      %v4673 = vpop.f32.mrf.mxu0
      %4674 = vmatprep.mubr.bf16.mxu0 %v2572
      %4675 = vmatmul.mubr.bf16.gmra.mxu0 %v2571
      %v4676 = vpop.f32.mrf.mxu0
      %v4677 = vadd.f32 %v4516, %v4676
      %v4678 = vpop.f32.mrf.mxu0
      %v4679 = vpop.f32.mrf.mxu0
      %v4680 = vadd.f32 %v4519, %v4679
      %v4681 = vpop.f32.mrf.mxu0
      %4682 = vmatprep.mubr.bf16.mxu0 %v2596
      %4683 = vmatmul.mubr.bf16.gmra.mxu0 %v2595
      %v4684 = vpop.f32.mrf.mxu0
      %v4685 = vadd.f32 %v4524, %v4684
      %v4686 = vpop.f32.mrf.mxu0
      %v4687 = vpop.f32.mrf.mxu0
      %v4688 = vadd.f32 %v4527, %v4687
      %v4689 = vpop.f32.mrf.mxu0
      %4690 = vmatprep.mubr.bf16.mxu0 %v2620
      %4691 = vmatmul.mubr.bf16.gmra.mxu0 %v2619
      %v4692 = vpop.f32.mrf.mxu0
      %v4693 = vadd.f32 %v4532, %v4692
      %v4694 = vpop.f32.mrf.mxu0
      %v4695 = vpop.f32.mrf.mxu0
      %v4696 = vadd.f32 %v4535, %v4695
      %v4697 = vpop.f32.mrf.mxu0
      %4698 = vmatprep.mubr.bf16.mxu0 %v2644
      %4699 = vmatmul.mubr.bf16.gmra.mxu0 %v2643
      %v4700 = vpop.f32.mrf.mxu0
      %v4701 = vadd.f32 %v4540, %v4700
      %v4702 = vpop.f32.mrf.mxu0
      %v4703 = vpop.f32.mrf.mxu0
      %v4704 = vadd.f32 %v4543, %v4703
      %v4705 = vpop.f32.mrf.mxu0
      %4706 = vmatprep.mubr.bf16.mxu0 %v2668
      %4707 = vmatmul.mubr.bf16.gmra.mxu0 %v2667
      %v4708 = vpop.f32.mrf.mxu0
      %v4709 = vadd.f32 %v4548, %v4708
      %v4710 = vpop.f32.mrf.mxu0
      %v4711 = vpop.f32.mrf.mxu0
      %v4712 = vadd.f32 %v4551, %v4711
      %v4713 = vpop.f32.mrf.mxu0
      %4714 = vmatprep.mubr.bf16.mxu0 %v2692
      %4715 = vmatmul.mubr.bf16.gmra.mxu0 %v2691
      %v4716 = vpop.f32.mrf.mxu0
      %v4717 = vadd.f32 %v4556, %v4716
      %v4718 = vpop.f32.mrf.mxu0
      %v4719 = vpop.f32.mrf.mxu0
      %v4720 = vadd.f32 %v4559, %v4719
      %v4721 = vpop.f32.mrf.mxu0
      %4722 = vmatprep.mubr.bf16.mxu0 %v2716
      %4723 = vmatmul.mubr.bf16.gmra.mxu0 %v2715
      %v4724 = vpop.f32.mrf.mxu0
      %v4725 = vadd.f32 %v4564, %v4724
      %v4726 = vpop.f32.mrf.mxu0
      %v4727 = vpop.f32.mrf.mxu0
      %v4728 = vadd.f32 %v4567, %v4727
      %v4729 = vpop.f32.mrf.mxu0
      %4730 = vmatprep.mubr.bf16.mxu0 %v2740
      %4731 = vmatmul.mubr.bf16.gmra.mxu0 %v2739
      %v4732 = vpop.f32.mrf.mxu0
      %v4733 = vadd.f32 %v4572, %v4732
      %v4734 = vpop.f32.mrf.mxu0
      %v4735 = vpop.f32.mrf.mxu0
      %v4736 = vadd.f32 %v4575, %v4735
      %v4737 = vpop.f32.mrf.mxu0
      %4738 = vdwg.mxu0
      %4739 = vmatprep.subr.bf16.mxu0 0
      %4740 = vmatpush1.bf16.msra.mxu0 %v1184
      %4741 = vmatprep.subr.bf16.mxu0 0
      %4742 = vmatpush1.bf16.msra.mxu0 %v1183
      %4743 = vmatprep.subr.bf16.mxu0 0
      %4744 = vmatpush1.bf16.msra.mxu0 %v1182
      %4745 = vmatprep.subr.bf16.mxu0 0
      %4746 = vmatpush1.bf16.msra.mxu0 %v1181
      %4747 = vmatprep.subr.bf16.mxu0 0
      %4748 = vmatpush1.bf16.msra.mxu0 %v1180
      %4749 = vmatprep.subr.bf16.mxu0 0
      %4750 = vmatpush1.bf16.msra.mxu0 %v1179
      %4751 = vmatprep.subr.bf16.mxu0 0
      %4752 = vmatpush1.bf16.msra.mxu0 %v1178
      %4753 = vmatprep.subr.bf16.mxu0 0
      %4754 = vmatpush1.bf16.msra.mxu0 %v1177
      %4755 = vmatprep.subr.bf16.mxu0 0
      %4756 = vmatpush2.bf16.msra.mxu0 %v1192
      %4757 = vmatprep.subr.bf16.mxu0 0
      %4758 = vmatpush2.bf16.msra.mxu0 %v1191
      %4759 = vmatprep.subr.bf16.mxu0 0
      %4760 = vmatpush2.bf16.msra.mxu0 %v1190
      %4761 = vmatprep.subr.bf16.mxu0 0
      %4762 = vmatpush2.bf16.msra.mxu0 %v1189
      %4763 = vmatprep.subr.bf16.mxu0 0
      %4764 = vmatpush2.bf16.msra.mxu0 %v1188
      %4765 = vmatprep.subr.bf16.mxu0 0
      %4766 = vmatpush2.bf16.msra.mxu0 %v1187
      %4767 = vmatprep.subr.bf16.mxu0 0
      %4768 = vmatpush2.bf16.msra.mxu0 %v1186
      %4769 = vmatprep.subr.bf16.mxu0 0
      %4770 = vmatpush2.bf16.msra.mxu0 %v1185
      %4771 = vmatprep.mubr.bf16.mxu0 %v2382
      %4772 = vmatmul.mubr.bf16.gmra.mxu0 %v2381
      %v4773 = vpop.f32.mrf.mxu0
      %v4774 = vadd.f32 %v4613, %v4773
      %v4775 = vpop.f32.mrf.mxu0
      %v4776 = vpop.f32.mrf.mxu0
      %v4777 = vadd.f32 %v4616, %v4776
      %v4778 = vpop.f32.mrf.mxu0
      %4779 = vmatprep.mubr.bf16.mxu0 %v2406
      %4780 = vmatmul.mubr.bf16.gmra.mxu0 %v2405
      %v4781 = vpop.f32.mrf.mxu0
      %v4782 = vadd.f32 %v4621, %v4781
      %v4783 = vpop.f32.mrf.mxu0
      %v4784 = vpop.f32.mrf.mxu0
      %v4785 = vadd.f32 %v4624, %v4784
      %v4786 = vpop.f32.mrf.mxu0
      %4787 = vmatprep.mubr.bf16.mxu0 %v2430
      %4788 = vmatmul.mubr.bf16.gmra.mxu0 %v2429
      %v4789 = vpop.f32.mrf.mxu0
      %v4790 = vadd.f32 %v4629, %v4789
      %v4791 = vpop.f32.mrf.mxu0
      %v4792 = vpop.f32.mrf.mxu0
      %v4793 = vadd.f32 %v4632, %v4792
      %v4794 = vpop.f32.mrf.mxu0
      %4795 = vmatprep.mubr.bf16.mxu0 %v2454
      %4796 = vmatmul.mubr.bf16.gmra.mxu0 %v2453
      %v4797 = vpop.f32.mrf.mxu0
      %v4798 = vadd.f32 %v4637, %v4797
      %v4799 = vpop.f32.mrf.mxu0
      %v4800 = vpop.f32.mrf.mxu0
      %v4801 = vadd.f32 %v4640, %v4800
      %v4802 = vpop.f32.mrf.mxu0
      %4803 = vmatprep.mubr.bf16.mxu0 %v2478
      %4804 = vmatmul.mubr.bf16.gmra.mxu0 %v2477
      %v4805 = vpop.f32.mrf.mxu0
      %v4806 = vadd.f32 %v4645, %v4805
      %v4807 = vpop.f32.mrf.mxu0
      %v4808 = vpop.f32.mrf.mxu0
      %v4809 = vadd.f32 %v4648, %v4808
      %v4810 = vpop.f32.mrf.mxu0
      %4811 = vmatprep.mubr.bf16.mxu0 %v2502
      %4812 = vmatmul.mubr.bf16.gmra.mxu0 %v2501
      %v4813 = vpop.f32.mrf.mxu0
      %v4814 = vadd.f32 %v4653, %v4813
      %v4815 = vpop.f32.mrf.mxu0
      %v4816 = vpop.f32.mrf.mxu0
      %v4817 = vadd.f32 %v4656, %v4816
      %v4818 = vpop.f32.mrf.mxu0
      %4819 = vmatprep.mubr.bf16.mxu0 %v2526
      %4820 = vmatmul.mubr.bf16.gmra.mxu0 %v2525
      %v4821 = vpop.f32.mrf.mxu0
      %v4822 = vadd.f32 %v4661, %v4821
      %v4823 = vpop.f32.mrf.mxu0
      %v4824 = vpop.f32.mrf.mxu0
      %v4825 = vadd.f32 %v4664, %v4824
      %v4826 = vpop.f32.mrf.mxu0
      %4827 = vmatprep.mubr.bf16.mxu0 %v2550
      %4828 = vmatmul.mubr.bf16.gmra.mxu0 %v2549
      %v4829 = vpop.f32.mrf.mxu0
      %v4830 = vadd.f32 %v4669, %v4829
      %v4831 = vpop.f32.mrf.mxu0
      %v4832 = vpop.f32.mrf.mxu0
      %v4833 = vadd.f32 %v4672, %v4832
      %v4834 = vpop.f32.mrf.mxu0
      %4835 = vmatprep.mubr.bf16.mxu0 %v2574
      %4836 = vmatmul.mubr.bf16.gmra.mxu0 %v2573
      %v4837 = vpop.f32.mrf.mxu0
      %v4838 = vadd.f32 %v4677, %v4837
      %v4839 = vpop.f32.mrf.mxu0
      %v4840 = vpop.f32.mrf.mxu0
      %v4841 = vadd.f32 %v4680, %v4840
      %v4842 = vpop.f32.mrf.mxu0
      %4843 = vmatprep.mubr.bf16.mxu0 %v2598
      %4844 = vmatmul.mubr.bf16.gmra.mxu0 %v2597
      %v4845 = vpop.f32.mrf.mxu0
      %v4846 = vadd.f32 %v4685, %v4845
      %v4847 = vpop.f32.mrf.mxu0
      %v4848 = vpop.f32.mrf.mxu0
      %v4849 = vadd.f32 %v4688, %v4848
      %v4850 = vpop.f32.mrf.mxu0
      %4851 = vmatprep.mubr.bf16.mxu0 %v2622
      %4852 = vmatmul.mubr.bf16.gmra.mxu0 %v2621
      %v4853 = vpop.f32.mrf.mxu0
      %v4854 = vadd.f32 %v4693, %v4853
      %v4855 = vpop.f32.mrf.mxu0
      %v4856 = vpop.f32.mrf.mxu0
      %v4857 = vadd.f32 %v4696, %v4856
      %v4858 = vpop.f32.mrf.mxu0
      %4859 = vmatprep.mubr.bf16.mxu0 %v2646
      %4860 = vmatmul.mubr.bf16.gmra.mxu0 %v2645
      %v4861 = vpop.f32.mrf.mxu0
      %v4862 = vadd.f32 %v4701, %v4861
      %v4863 = vpop.f32.mrf.mxu0
      %v4864 = vpop.f32.mrf.mxu0
      %v4865 = vadd.f32 %v4704, %v4864
      %v4866 = vpop.f32.mrf.mxu0
      %4867 = vmatprep.mubr.bf16.mxu0 %v2670
      %4868 = vmatmul.mubr.bf16.gmra.mxu0 %v2669
      %v4869 = vpop.f32.mrf.mxu0
      %v4870 = vadd.f32 %v4709, %v4869
      %v4871 = vpop.f32.mrf.mxu0
      %v4872 = vpop.f32.mrf.mxu0
      %v4873 = vadd.f32 %v4712, %v4872
      %v4874 = vpop.f32.mrf.mxu0
      %4875 = vmatprep.mubr.bf16.mxu0 %v2694
      %4876 = vmatmul.mubr.bf16.gmra.mxu0 %v2693
      %v4877 = vpop.f32.mrf.mxu0
      %v4878 = vadd.f32 %v4717, %v4877
      %v4879 = vpop.f32.mrf.mxu0
      %v4880 = vpop.f32.mrf.mxu0
      %v4881 = vadd.f32 %v4720, %v4880
      %v4882 = vpop.f32.mrf.mxu0
      %4883 = vmatprep.mubr.bf16.mxu0 %v2718
      %4884 = vmatmul.mubr.bf16.gmra.mxu0 %v2717
      %v4885 = vpop.f32.mrf.mxu0
      %v4886 = vadd.f32 %v4725, %v4885
      %v4887 = vpop.f32.mrf.mxu0
      %v4888 = vpop.f32.mrf.mxu0
      %v4889 = vadd.f32 %v4728, %v4888
      %v4890 = vpop.f32.mrf.mxu0
      %4891 = vmatprep.mubr.bf16.mxu0 %v2742
      %4892 = vmatmul.mubr.bf16.gmra.mxu0 %v2741
      %v4893 = vpop.f32.mrf.mxu0
      %v4894 = vadd.f32 %v4733, %v4893
      %v4895 = vpop.f32.mrf.mxu0
      %v4896 = vpop.f32.mrf.mxu0
      %v4897 = vadd.f32 %v4736, %v4896
      %v4898 = vpop.f32.mrf.mxu0
      %4899 = vdwg.mxu0
      %4900 = vmatprep.subr.bf16.mxu0 0
      %4901 = vmatpush1.bf16.msra.mxu0 %v1200
      %4902 = vmatprep.subr.bf16.mxu0 0
      %4903 = vmatpush1.bf16.msra.mxu0 %v1199
      %4904 = vmatprep.subr.bf16.mxu0 0
      %4905 = vmatpush1.bf16.msra.mxu0 %v1198
      %4906 = vmatprep.subr.bf16.mxu0 0
      %4907 = vmatpush1.bf16.msra.mxu0 %v1197
      %4908 = vmatprep.subr.bf16.mxu0 0
      %4909 = vmatpush1.bf16.msra.mxu0 %v1196
      %4910 = vmatprep.subr.bf16.mxu0 0
      %4911 = vmatpush1.bf16.msra.mxu0 %v1195
      %4912 = vmatprep.subr.bf16.mxu0 0
      %4913 = vmatpush1.bf16.msra.mxu0 %v1194
      %4914 = vmatprep.subr.bf16.mxu0 0
      %4915 = vmatpush1.bf16.msra.mxu0 %v1193
      %4916 = vmatprep.subr.bf16.mxu0 0
      %4917 = vmatpush2.bf16.msra.mxu0 %v1208
      %4918 = vmatprep.subr.bf16.mxu0 0
      %4919 = vmatpush2.bf16.msra.mxu0 %v1207
      %4920 = vmatprep.subr.bf16.mxu0 0
      %4921 = vmatpush2.bf16.msra.mxu0 %v1206
      %4922 = vmatprep.subr.bf16.mxu0 0
      %4923 = vmatpush2.bf16.msra.mxu0 %v1205
      %4924 = vmatprep.subr.bf16.mxu0 0
      %4925 = vmatpush2.bf16.msra.mxu0 %v1204
      %4926 = vmatprep.subr.bf16.mxu0 0
      %4927 = vmatpush2.bf16.msra.mxu0 %v1203
      %4928 = vmatprep.subr.bf16.mxu0 0
      %4929 = vmatpush2.bf16.msra.mxu0 %v1202
      %4930 = vmatprep.subr.bf16.mxu0 0
      %4931 = vmatpush2.bf16.msra.mxu0 %v1201
      %4932 = vmatprep.mubr.bf16.mxu0 %v2384
      %4933 = vmatmul.mubr.bf16.gmra.mxu0 %v2383
      %v4934 = vpop.f32.mrf.mxu0
      %v4935 = vadd.f32 %v4774, %v4934
      %v4936 = vpop.f32.mrf.mxu0
      %v4937 = vpop.f32.mrf.mxu0
      %v4938 = vadd.f32 %v4777, %v4937
      %v4939 = vpop.f32.mrf.mxu0
      %4940 = vmatprep.mubr.bf16.mxu0 %v2408
      %4941 = vmatmul.mubr.bf16.gmra.mxu0 %v2407
      %v4942 = vpop.f32.mrf.mxu0
      %v4943 = vadd.f32 %v4782, %v4942
      %v4944 = vpop.f32.mrf.mxu0
      %v4945 = vpop.f32.mrf.mxu0
      %v4946 = vadd.f32 %v4785, %v4945
      %v4947 = vpop.f32.mrf.mxu0
      %4948 = vmatprep.mubr.bf16.mxu0 %v2432
      %4949 = vmatmul.mubr.bf16.gmra.mxu0 %v2431
      %v4950 = vpop.f32.mrf.mxu0
      %v4951 = vadd.f32 %v4790, %v4950
      %v4952 = vpop.f32.mrf.mxu0
      %v4953 = vpop.f32.mrf.mxu0
      %v4954 = vadd.f32 %v4793, %v4953
      %v4955 = vpop.f32.mrf.mxu0
      %4956 = vmatprep.mubr.bf16.mxu0 %v2456
      %4957 = vmatmul.mubr.bf16.gmra.mxu0 %v2455
      %v4958 = vpop.f32.mrf.mxu0
      %v4959 = vadd.f32 %v4798, %v4958
      %v4960 = vpop.f32.mrf.mxu0
      %v4961 = vpop.f32.mrf.mxu0
      %v4962 = vadd.f32 %v4801, %v4961
      %v4963 = vpop.f32.mrf.mxu0
      %4964 = vmatprep.mubr.bf16.mxu0 %v2480
      %4965 = vmatmul.mubr.bf16.gmra.mxu0 %v2479
      %v4966 = vpop.f32.mrf.mxu0
      %v4967 = vadd.f32 %v4806, %v4966
      %v4968 = vpop.f32.mrf.mxu0
      %v4969 = vpop.f32.mrf.mxu0
      %v4970 = vadd.f32 %v4809, %v4969
      %v4971 = vpop.f32.mrf.mxu0
      %4972 = vmatprep.mubr.bf16.mxu0 %v2504
      %4973 = vmatmul.mubr.bf16.gmra.mxu0 %v2503
      %v4974 = vpop.f32.mrf.mxu0
      %v4975 = vadd.f32 %v4814, %v4974
      %v4976 = vpop.f32.mrf.mxu0
      %v4977 = vpop.f32.mrf.mxu0
      %v4978 = vadd.f32 %v4817, %v4977
      %v4979 = vpop.f32.mrf.mxu0
      %4980 = vmatprep.mubr.bf16.mxu0 %v2528
      %4981 = vmatmul.mubr.bf16.gmra.mxu0 %v2527
      %v4982 = vpop.f32.mrf.mxu0
      %v4983 = vadd.f32 %v4822, %v4982
      %v4984 = vpop.f32.mrf.mxu0
      %v4985 = vpop.f32.mrf.mxu0
      %v4986 = vadd.f32 %v4825, %v4985
      %v4987 = vpop.f32.mrf.mxu0
      %4988 = vmatprep.mubr.bf16.mxu0 %v2552
      %4989 = vmatmul.mubr.bf16.gmra.mxu0 %v2551
      %v4990 = vpop.f32.mrf.mxu0
      %v4991 = vadd.f32 %v4830, %v4990
      %v4992 = vpop.f32.mrf.mxu0
      %v4993 = vpop.f32.mrf.mxu0
      %v4994 = vadd.f32 %v4833, %v4993
      %v4995 = vpop.f32.mrf.mxu0
      %4996 = vmatprep.mubr.bf16.mxu0 %v2576
      %4997 = vmatmul.mubr.bf16.gmra.mxu0 %v2575
      %v4998 = vpop.f32.mrf.mxu0
      %v4999 = vadd.f32 %v4838, %v4998
      %v5000 = vpop.f32.mrf.mxu0
      %v5001 = vpop.f32.mrf.mxu0
      %v5002 = vadd.f32 %v4841, %v5001
      %v5003 = vpop.f32.mrf.mxu0
      %5004 = vmatprep.mubr.bf16.mxu0 %v2600
      %5005 = vmatmul.mubr.bf16.gmra.mxu0 %v2599
      %v5006 = vpop.f32.mrf.mxu0
      %v5007 = vadd.f32 %v4846, %v5006
      %v5008 = vpop.f32.mrf.mxu0
      %v5009 = vpop.f32.mrf.mxu0
      %v5010 = vadd.f32 %v4849, %v5009
      %v5011 = vpop.f32.mrf.mxu0
      %5012 = vmatprep.mubr.bf16.mxu0 %v2624
      %5013 = vmatmul.mubr.bf16.gmra.mxu0 %v2623
      %v5014 = vpop.f32.mrf.mxu0
      %v5015 = vadd.f32 %v4854, %v5014
      %v5016 = vpop.f32.mrf.mxu0
      %v5017 = vpop.f32.mrf.mxu0
      %v5018 = vadd.f32 %v4857, %v5017
      %v5019 = vpop.f32.mrf.mxu0
      %5020 = vmatprep.mubr.bf16.mxu0 %v2648
      %5021 = vmatmul.mubr.bf16.gmra.mxu0 %v2647
      %v5022 = vpop.f32.mrf.mxu0
      %v5023 = vadd.f32 %v4862, %v5022
      %v5024 = vpop.f32.mrf.mxu0
      %v5025 = vpop.f32.mrf.mxu0
      %v5026 = vadd.f32 %v4865, %v5025
      %v5027 = vpop.f32.mrf.mxu0
      %5028 = vmatprep.mubr.bf16.mxu0 %v2672
      %5029 = vmatmul.mubr.bf16.gmra.mxu0 %v2671
      %v5030 = vpop.f32.mrf.mxu0
      %v5031 = vadd.f32 %v4870, %v5030
      %v5032 = vpop.f32.mrf.mxu0
      %v5033 = vpop.f32.mrf.mxu0
      %v5034 = vadd.f32 %v4873, %v5033
      %v5035 = vpop.f32.mrf.mxu0
      %5036 = vmatprep.mubr.bf16.mxu0 %v2696
      %5037 = vmatmul.mubr.bf16.gmra.mxu0 %v2695
      %v5038 = vpop.f32.mrf.mxu0
      %v5039 = vadd.f32 %v4878, %v5038
      %v5040 = vpop.f32.mrf.mxu0
      %v5041 = vpop.f32.mrf.mxu0
      %v5042 = vadd.f32 %v4881, %v5041
      %v5043 = vpop.f32.mrf.mxu0
      %5044 = vmatprep.mubr.bf16.mxu0 %v2720
      %5045 = vmatmul.mubr.bf16.gmra.mxu0 %v2719
      %v5046 = vpop.f32.mrf.mxu0
      %v5047 = vadd.f32 %v4886, %v5046
      %v5048 = vpop.f32.mrf.mxu0
      %v5049 = vpop.f32.mrf.mxu0
      %v5050 = vadd.f32 %v4889, %v5049
      %v5051 = vpop.f32.mrf.mxu0
      %5052 = vmatprep.mubr.bf16.mxu0 %v2744
      %5053 = vmatmul.mubr.bf16.gmra.mxu0 %v2743
      %v5054 = vpop.f32.mrf.mxu0
      %v5055 = vadd.f32 %v4894, %v5054
      %v5056 = vpop.f32.mrf.mxu0
      %v5057 = vpop.f32.mrf.mxu0
      %v5058 = vadd.f32 %v4897, %v5057
      %v5059 = vpop.f32.mrf.mxu0
      %5060 = vdwg.mxu0
      %vm5061 = vcmask 400384
      %v5062 = vsel %vm5061, %v4935, 0.0
      %5063 = vadd.xlane.f32.xlu0 %v5062
      %v5064 = vpop.xlane.xlu0 %5063
      %v5065 = vsel %vm5061, %v4938, 0.0
      %5066 = vadd.xlane.f32.xlu0 %v5065
      %v5067 = vpop.xlane.xlu0 %5066
      %v5068 = vsel %vm5061, %v4943, 0.0
      %5069 = vadd.xlane.f32.xlu0 %v5068
      %v5070 = vpop.xlane.xlu0 %5069
      %v5071 = vsel %vm5061, %v4946, 0.0
      %5072 = vadd.xlane.f32.xlu0 %v5071
      %v5073 = vpop.xlane.xlu0 %5072
      %v5074 = vsel %vm5061, %v4951, 0.0
      %5075 = vadd.xlane.f32.xlu0 %v5074
      %v5076 = vpop.xlane.xlu0 %5075
      %v5077 = vsel %vm5061, %v4954, 0.0
      %5078 = vadd.xlane.f32.xlu0 %v5077
      %v5079 = vpop.xlane.xlu0 %5078
      %v5080 = vsel %vm5061, %v4959, 0.0
      %5081 = vadd.xlane.f32.xlu0 %v5080
      %v5082 = vpop.xlane.xlu0 %5081
      %v5083 = vsel %vm5061, %v4962, 0.0
      %5084 = vadd.xlane.f32.xlu0 %v5083
      %v5085 = vpop.xlane.xlu0 %5084
      %v5086 = vsel %vm5061, %v4967, 0.0
      %5087 = vadd.xlane.f32.xlu0 %v5086
      %v5088 = vpop.xlane.xlu0 %5087
      %v5089 = vsel %vm5061, %v4970, 0.0
      %5090 = vadd.xlane.f32.xlu0 %v5089
      %v5091 = vpop.xlane.xlu0 %5090
      %v5092 = vsel %vm5061, %v4975, 0.0
      %5093 = vadd.xlane.f32.xlu0 %v5092
      %v5094 = vpop.xlane.xlu0 %5093
      %v5095 = vsel %vm5061, %v4978, 0.0
      %5096 = vadd.xlane.f32.xlu0 %v5095
      %v5097 = vpop.xlane.xlu0 %5096
      %v5098 = vsel %vm5061, %v4983, 0.0
      %5099 = vadd.xlane.f32.xlu0 %v5098
      %v5100 = vpop.xlane.xlu0 %5099
      %v5101 = vsel %vm5061, %v4986, 0.0
      %5102 = vadd.xlane.f32.xlu0 %v5101
      %v5103 = vpop.xlane.xlu0 %5102
      %v5104 = vsel %vm5061, %v4991, 0.0
      %5105 = vadd.xlane.f32.xlu0 %v5104
      %v5106 = vpop.xlane.xlu0 %5105
      %v5107 = vsel %vm5061, %v4994, 0.0
      %5108 = vadd.xlane.f32.xlu0 %v5107
      %v5109 = vpop.xlane.xlu0 %5108
      %v5110 = vsel %vm5061, %v4999, 0.0
      %5111 = vadd.xlane.f32.xlu0 %v5110
      %v5112 = vpop.xlane.xlu0 %5111
      %v5113 = vsel %vm5061, %v5002, 0.0
      %5114 = vadd.xlane.f32.xlu0 %v5113
      %v5115 = vpop.xlane.xlu0 %5114
      %v5116 = vsel %vm5061, %v5007, 0.0
      %5117 = vadd.xlane.f32.xlu0 %v5116
      %v5118 = vpop.xlane.xlu0 %5117
      %v5119 = vsel %vm5061, %v5010, 0.0
      %5120 = vadd.xlane.f32.xlu0 %v5119
      %v5121 = vpop.xlane.xlu0 %5120
      %v5122 = vsel %vm5061, %v5015, 0.0
      %5123 = vadd.xlane.f32.xlu0 %v5122
      %v5124 = vpop.xlane.xlu0 %5123
      %v5125 = vsel %vm5061, %v5018, 0.0
      %5126 = vadd.xlane.f32.xlu0 %v5125
      %v5127 = vpop.xlane.xlu0 %5126
      %v5128 = vsel %vm5061, %v5023, 0.0
      %5129 = vadd.xlane.f32.xlu0 %v5128
      %v5130 = vpop.xlane.xlu0 %5129
      %v5131 = vsel %vm5061, %v5026, 0.0
      %5132 = vadd.xlane.f32.xlu0 %v5131
      %v5133 = vpop.xlane.xlu0 %5132
      %v5134 = vsel %vm5061, %v5031, 0.0
      %5135 = vadd.xlane.f32.xlu0 %v5134
      %v5136 = vpop.xlane.xlu0 %5135
      %v5137 = vsel %vm5061, %v5034, 0.0
      %5138 = vadd.xlane.f32.xlu0 %v5137
      %v5139 = vpop.xlane.xlu0 %5138
      %v5140 = vsel %vm5061, %v5039, 0.0
      %5141 = vadd.xlane.f32.xlu0 %v5140
      %v5142 = vpop.xlane.xlu0 %5141
      %v5143 = vsel %vm5061, %v5042, 0.0
      %5144 = vadd.xlane.f32.xlu0 %v5143
      %v5145 = vpop.xlane.xlu0 %5144
      %v5146 = vsel %vm5061, %v5047, 0.0
      %5147 = vadd.xlane.f32.xlu0 %v5146
      %v5148 = vpop.xlane.xlu0 %5147
      %v5149 = vsel %vm5061, %v5050, 0.0
      %5150 = vadd.xlane.f32.xlu0 %v5149
      %v5151 = vpop.xlane.xlu0 %5150
      %v5152 = vsel %vm5061, %v5055, 0.0
      %5153 = vadd.xlane.f32.xlu0 %v5152
      %v5154 = vpop.xlane.xlu0 %5153
      %v5155 = vsel %vm5061, %v5058, 0.0
      %5156 = vadd.xlane.f32.xlu0 %v5155
      %v5157 = vpop.xlane.xlu0 %5156
      %v5158 = vmul.f32 %v5064, 0.020408163
      %v5159 = vmul.f32 %v5067, 0.020408163
      %v5160 = vmul.f32 %v5070, 0.020408163
      %v5161 = vmul.f32 %v5073, 0.020408163
      %v5162 = vmul.f32 %v5076, 0.020408163
      %v5163 = vmul.f32 %v5079, 0.020408163
      %v5164 = vmul.f32 %v5082, 0.020408163
      %v5165 = vmul.f32 %v5085, 0.020408163
      %v5166 = vmul.f32 %v5088, 0.020408163
      %v5167 = vmul.f32 %v5091, 0.020408163
      %v5168 = vmul.f32 %v5094, 0.020408163
      %v5169 = vmul.f32 %v5097, 0.020408163
      %v5170 = vmul.f32 %v5100, 0.020408163
      %v5171 = vmul.f32 %v5103, 0.020408163
      %v5172 = vmul.f32 %v5106, 0.020408163
      %v5173 = vmul.f32 %v5109, 0.020408163
      %v5174 = vmul.f32 %v5112, 0.020408163
      %v5175 = vmul.f32 %v5115, 0.020408163
      %v5176 = vmul.f32 %v5118, 0.020408163
      %v5177 = vmul.f32 %v5121, 0.020408163
      %v5178 = vmul.f32 %v5124, 0.020408163
      %v5179 = vmul.f32 %v5127, 0.020408163
      %v5180 = vmul.f32 %v5130, 0.020408163
      %v5181 = vmul.f32 %v5133, 0.020408163
      %v5182 = vmul.f32 %v5136, 0.020408163
      %v5183 = vmul.f32 %v5139, 0.020408163
      %v5184 = vmul.f32 %v5142, 0.020408163
      %v5185 = vmul.f32 %v5145, 0.020408163
      %v5186 = vmul.f32 %v5148, 0.020408163
      %v5187 = vmul.f32 %v5151, 0.020408163
      %v5188 = vmul.f32 %v5154, 0.020408163
      %v5189 = vmul.f32 %v5157, 0.020408163
      %v5190 = vsub.f32 %v4935, %v5158
      %v5191 = vsub.f32 %v4938, %v5159
      %v5192 = vsub.f32 %v4943, %v5160
      %v5193 = vsub.f32 %v4946, %v5161
      %v5194 = vsub.f32 %v4951, %v5162
      %v5195 = vsub.f32 %v4954, %v5163
      %v5196 = vsub.f32 %v4959, %v5164
      %v5197 = vsub.f32 %v4962, %v5165
      %v5198 = vsub.f32 %v4967, %v5166
      %v5199 = vsub.f32 %v4970, %v5167
      %v5200 = vsub.f32 %v4975, %v5168
      %v5201 = vsub.f32 %v4978, %v5169
      %v5202 = vsub.f32 %v4983, %v5170
      %v5203 = vsub.f32 %v4986, %v5171
      %v5204 = vsub.f32 %v4991, %v5172
      %v5205 = vsub.f32 %v4994, %v5173
      %v5206 = vsub.f32 %v4999, %v5174
      %v5207 = vsub.f32 %v5002, %v5175
      %v5208 = vsub.f32 %v5007, %v5176
      %v5209 = vsub.f32 %v5010, %v5177
      %v5210 = vsub.f32 %v5015, %v5178
      %v5211 = vsub.f32 %v5018, %v5179
      %v5212 = vsub.f32 %v5023, %v5180
      %v5213 = vsub.f32 %v5026, %v5181
      %v5214 = vsub.f32 %v5031, %v5182
      %v5215 = vsub.f32 %v5034, %v5183
      %v5216 = vsub.f32 %v5039, %v5184
      %v5217 = vsub.f32 %v5042, %v5185
      %v5218 = vsub.f32 %v5047, %v5186
      %v5219 = vsub.f32 %v5050, %v5187
      %v5220 = vsub.f32 %v5055, %v5188
      %v5221 = vsub.f32 %v5058, %v5189
      %v5222 = vmul.f32 %v5190, %v5190
      %v5223 = vmul.f32 %v5191, %v5191
      %v5224 = vmul.f32 %v5192, %v5192
      %v5225 = vmul.f32 %v5193, %v5193
      %v5226 = vmul.f32 %v5194, %v5194
      %v5227 = vmul.f32 %v5195, %v5195
      %v5228 = vmul.f32 %v5196, %v5196
      %v5229 = vmul.f32 %v5197, %v5197
      %v5230 = vmul.f32 %v5198, %v5198
      %v5231 = vmul.f32 %v5199, %v5199
      %v5232 = vmul.f32 %v5200, %v5200
      %v5233 = vmul.f32 %v5201, %v5201
      %v5234 = vmul.f32 %v5202, %v5202
      %v5235 = vmul.f32 %v5203, %v5203
      %v5236 = vmul.f32 %v5204, %v5204
      %v5237 = vmul.f32 %v5205, %v5205
      %v5238 = vmul.f32 %v5206, %v5206
      %v5239 = vmul.f32 %v5207, %v5207
      %v5240 = vmul.f32 %v5208, %v5208
      %v5241 = vmul.f32 %v5209, %v5209
      %v5242 = vmul.f32 %v5210, %v5210
      %v5243 = vmul.f32 %v5211, %v5211
      %v5244 = vmul.f32 %v5212, %v5212
      %v5245 = vmul.f32 %v5213, %v5213
      %v5246 = vmul.f32 %v5214, %v5214
      %v5247 = vmul.f32 %v5215, %v5215
      %v5248 = vmul.f32 %v5216, %v5216
      %v5249 = vmul.f32 %v5217, %v5217
      %v5250 = vmul.f32 %v5218, %v5218
      %v5251 = vmul.f32 %v5219, %v5219
      %v5252 = vmul.f32 %v5220, %v5220
      %v5253 = vmul.f32 %v5221, %v5221
      %v5254 = vsel %vm5061, %v5222, 0.0
      %5255 = vadd.xlane.f32.xlu0 %v5254
      %v5256 = vpop.xlane.xlu0 %5255
      %v5257 = vsel %vm5061, %v5223, 0.0
      %5258 = vadd.xlane.f32.xlu0 %v5257
      %v5259 = vpop.xlane.xlu0 %5258
      %v5260 = vsel %vm5061, %v5224, 0.0
      %5261 = vadd.xlane.f32.xlu0 %v5260
      %v5262 = vpop.xlane.xlu0 %5261
      %v5263 = vsel %vm5061, %v5225, 0.0
      %5264 = vadd.xlane.f32.xlu0 %v5263
      %v5265 = vpop.xlane.xlu0 %5264
      %v5266 = vsel %vm5061, %v5226, 0.0
      %5267 = vadd.xlane.f32.xlu0 %v5266
      %v5268 = vpop.xlane.xlu0 %5267
      %v5269 = vsel %vm5061, %v5227, 0.0
      %5270 = vadd.xlane.f32.xlu0 %v5269
      %v5271 = vpop.xlane.xlu0 %5270
      %v5272 = vsel %vm5061, %v5228, 0.0
      %5273 = vadd.xlane.f32.xlu0 %v5272
      %v5274 = vpop.xlane.xlu0 %5273
      %v5275 = vsel %vm5061, %v5229, 0.0
      %5276 = vadd.xlane.f32.xlu0 %v5275
      %v5277 = vpop.xlane.xlu0 %5276
      %v5278 = vsel %vm5061, %v5230, 0.0
      %5279 = vadd.xlane.f32.xlu0 %v5278
      %v5280 = vpop.xlane.xlu0 %5279
      %v5281 = vsel %vm5061, %v5231, 0.0
      %5282 = vadd.xlane.f32.xlu0 %v5281
      %v5283 = vpop.xlane.xlu0 %5282
      %v5284 = vsel %vm5061, %v5232, 0.0
      %5285 = vadd.xlane.f32.xlu0 %v5284
      %v5286 = vpop.xlane.xlu0 %5285
      %v5287 = vsel %vm5061, %v5233, 0.0
      %5288 = vadd.xlane.f32.xlu0 %v5287
      %v5289 = vpop.xlane.xlu0 %5288
      %v5290 = vsel %vm5061, %v5234, 0.0
      %5291 = vadd.xlane.f32.xlu0 %v5290
      %v5292 = vpop.xlane.xlu0 %5291
      %v5293 = vsel %vm5061, %v5235, 0.0
      %5294 = vadd.xlane.f32.xlu0 %v5293
      %v5295 = vpop.xlane.xlu0 %5294
      %v5296 = vsel %vm5061, %v5236, 0.0
      %5297 = vadd.xlane.f32.xlu0 %v5296
      %v5298 = vpop.xlane.xlu0 %5297
      %v5299 = vsel %vm5061, %v5237, 0.0
      %5300 = vadd.xlane.f32.xlu0 %v5299
      %v5301 = vpop.xlane.xlu0 %5300
      %v5302 = vsel %vm5061, %v5238, 0.0
      %5303 = vadd.xlane.f32.xlu0 %v5302
      %v5304 = vpop.xlane.xlu0 %5303
      %v5305 = vsel %vm5061, %v5239, 0.0
      %5306 = vadd.xlane.f32.xlu0 %v5305
      %v5307 = vpop.xlane.xlu0 %5306
      %v5308 = vsel %vm5061, %v5240, 0.0
      %5309 = vadd.xlane.f32.xlu0 %v5308
      %v5310 = vpop.xlane.xlu0 %5309
      %v5311 = vsel %vm5061, %v5241, 0.0
      %5312 = vadd.xlane.f32.xlu0 %v5311
      %v5313 = vpop.xlane.xlu0 %5312
      %v5314 = vsel %vm5061, %v5242, 0.0
      %5315 = vadd.xlane.f32.xlu0 %v5314
      %v5316 = vpop.xlane.xlu0 %5315
      %v5317 = vsel %vm5061, %v5243, 0.0
      %5318 = vadd.xlane.f32.xlu0 %v5317
      %v5319 = vpop.xlane.xlu0 %5318
      %v5320 = vsel %vm5061, %v5244, 0.0
      %5321 = vadd.xlane.f32.xlu0 %v5320
      %v5322 = vpop.xlane.xlu0 %5321
      %v5323 = vsel %vm5061, %v5245, 0.0
      %5324 = vadd.xlane.f32.xlu0 %v5323
      %v5325 = vpop.xlane.xlu0 %5324
      %v5326 = vsel %vm5061, %v5246, 0.0
      %5327 = vadd.xlane.f32.xlu0 %v5326
      %v5328 = vpop.xlane.xlu0 %5327
      %v5329 = vsel %vm5061, %v5247, 0.0
      %5330 = vadd.xlane.f32.xlu0 %v5329
      %v5331 = vpop.xlane.xlu0 %5330
      %v5332 = vsel %vm5061, %v5248, 0.0
      %5333 = vadd.xlane.f32.xlu0 %v5332
      %v5334 = vpop.xlane.xlu0 %5333
      %v5335 = vsel %vm5061, %v5249, 0.0
      %5336 = vadd.xlane.f32.xlu0 %v5335
      %v5337 = vpop.xlane.xlu0 %5336
      %v5338 = vsel %vm5061, %v5250, 0.0
      %5339 = vadd.xlane.f32.xlu0 %v5338
      %v5340 = vpop.xlane.xlu0 %5339
      %v5341 = vsel %vm5061, %v5251, 0.0
      %5342 = vadd.xlane.f32.xlu0 %v5341
      %v5343 = vpop.xlane.xlu0 %5342
      %v5344 = vsel %vm5061, %v5252, 0.0
      %5345 = vadd.xlane.f32.xlu0 %v5344
      %v5346 = vpop.xlane.xlu0 %5345
      %v5347 = vsel %vm5061, %v5253, 0.0
      %5348 = vadd.xlane.f32.xlu0 %v5347
      %v5349 = vpop.xlane.xlu0 %5348
      %v5350 = vmul.f32 %v5256, 0.020408163
      %v5351 = vmul.f32 %v5259, 0.020408163
      %v5352 = vmul.f32 %v5262, 0.020408163
      %v5353 = vmul.f32 %v5265, 0.020408163
      %v5354 = vmul.f32 %v5268, 0.020408163
      %v5355 = vmul.f32 %v5271, 0.020408163
      %v5356 = vmul.f32 %v5274, 0.020408163
      %v5357 = vmul.f32 %v5277, 0.020408163
      %v5358 = vmul.f32 %v5280, 0.020408163
      %v5359 = vmul.f32 %v5283, 0.020408163
      %v5360 = vmul.f32 %v5286, 0.020408163
      %v5361 = vmul.f32 %v5289, 0.020408163
      %v5362 = vmul.f32 %v5292, 0.020408163
      %v5363 = vmul.f32 %v5295, 0.020408163
      %v5364 = vmul.f32 %v5298, 0.020408163
      %v5365 = vmul.f32 %v5301, 0.020408163
      %v5366 = vmul.f32 %v5304, 0.020408163
      %v5367 = vmul.f32 %v5307, 0.020408163
      %v5368 = vmul.f32 %v5310, 0.020408163
      %v5369 = vmul.f32 %v5313, 0.020408163
      %v5370 = vmul.f32 %v5316, 0.020408163
      %v5371 = vmul.f32 %v5319, 0.020408163
      %v5372 = vmul.f32 %v5322, 0.020408163
      %v5373 = vmul.f32 %v5325, 0.020408163
      %v5374 = vmul.f32 %v5328, 0.020408163
      %v5375 = vmul.f32 %v5331, 0.020408163
      %v5376 = vmul.f32 %v5334, 0.020408163
      %v5377 = vmul.f32 %v5337, 0.020408163
      %v5378 = vmul.f32 %v5340, 0.020408163
      %v5379 = vmul.f32 %v5343, 0.020408163
      %v5380 = vmul.f32 %v5346, 0.020408163
      %v5381 = vmul.f32 %v5349, 0.020408163
      %v5382 = vld [vmem:[%s234] sm:$0xff]
      %v5383 = vld [vmem:[%s234 + $0x8] sm:$0xff]
      %v5384 = vld [vmem:[%s234 + $0x10] sm:$0xff]
      %v5385 = vld [vmem:[%s234 + $0x18] sm:$0xff]
      %v5386 = vld [vmem:[%s234 + $0x20] sm:$0xff]
      %v5387 = vld [vmem:[%s234 + $0x28] sm:$0xff]
      %v5388 = vld [vmem:[%s234 + $0x30] sm:$0xff]
      %v5389 = vld [vmem:[%s234 + $0x38] sm:$0xff]
      %v5390 = vld [vmem:[%s234 + $0x40] sm:$0xff]
      %v5391 = vld [vmem:[%s234 + $0x48] sm:$0xff]
      %v5392 = vld [vmem:[%s234 + $0x50] sm:$0xff]
      %v5393 = vld [vmem:[%s234 + $0x58] sm:$0xff]
      %v5394 = vld [vmem:[%s234 + $0x60] sm:$0xff]
      %v5395 = vld [vmem:[%s234 + $0x68] sm:$0xff]
      %v5396 = vld [vmem:[%s234 + $0x70] sm:$0xff]
      %v5397 = vld [vmem:[%s234 + $0x78] sm:$0xff]
      %v5398 = vld [vmem:[%s234 + $0x80] sm:$0xff]
      %v5399 = vld [vmem:[%s234 + $0x88] sm:$0xff]
      %v5400 = vld [vmem:[%s234 + $0x90] sm:$0xff]
      %v5401 = vld [vmem:[%s234 + $0x98] sm:$0xff]
      %v5402 = vld [vmem:[%s234 + $0xa0] sm:$0xff]
      %v5403 = vld [vmem:[%s234 + $0xa8] sm:$0xff]
      %v5404 = vld [vmem:[%s234 + $0xb0] sm:$0xff]
      %v5405 = vld [vmem:[%s234 + $0xb8] sm:$0xff]
      %v5406 = vld [vmem:[%s234 + $0xc0] sm:$0xff]
      %v5407 = vld [vmem:[%s234 + $0xc8] sm:$0xff]
      %v5408 = vld [vmem:[%s234 + $0xd0] sm:$0xff]
      %v5409 = vld [vmem:[%s234 + $0xd8] sm:$0xff]
      %v5410 = vld [vmem:[%s234 + $0xe0] sm:$0xff]
      %v5411 = vld [vmem:[%s234 + $0xe8] sm:$0xff]
      %v5412 = vld [vmem:[%s234 + $0xf0] sm:$0xff]
      %v5413 = vld [vmem:[%s234 + $0xf8] sm:$0xff]
      %v5414 = vadd.f32 %v5350, 0.001
      %v5415 = vadd.f32 %v5351, 0.001
      %v5416 = vadd.f32 %v5352, 0.001
      %v5417 = vadd.f32 %v5353, 0.001
      %v5418 = vadd.f32 %v5354, 0.001
      %v5419 = vadd.f32 %v5355, 0.001
      %v5420 = vadd.f32 %v5356, 0.001
      %v5421 = vadd.f32 %v5357, 0.001
      %v5422 = vadd.f32 %v5358, 0.001
      %v5423 = vadd.f32 %v5359, 0.001
      %v5424 = vadd.f32 %v5360, 0.001
      %v5425 = vadd.f32 %v5361, 0.001
      %v5426 = vadd.f32 %v5362, 0.001
      %v5427 = vadd.f32 %v5363, 0.001
      %v5428 = vadd.f32 %v5364, 0.001
      %v5429 = vadd.f32 %v5365, 0.001
      %v5430 = vadd.f32 %v5366, 0.001
      %v5431 = vadd.f32 %v5367, 0.001
      %v5432 = vadd.f32 %v5368, 0.001
      %v5433 = vadd.f32 %v5369, 0.001
      %v5434 = vadd.f32 %v5370, 0.001
      %v5435 = vadd.f32 %v5371, 0.001
      %v5436 = vadd.f32 %v5372, 0.001
      %v5437 = vadd.f32 %v5373, 0.001
      %v5438 = vadd.f32 %v5374, 0.001
      %v5439 = vadd.f32 %v5375, 0.001
      %v5440 = vadd.f32 %v5376, 0.001
      %v5441 = vadd.f32 %v5377, 0.001
      %v5442 = vadd.f32 %v5378, 0.001
      %v5443 = vadd.f32 %v5379, 0.001
      %v5444 = vadd.f32 %v5380, 0.001
      %v5445 = vadd.f32 %v5381, 0.001
      %v5446 = vrsqrt.pop %v5414
      %v5447 = vrsqrt.pop %v5415
      %v5448 = vrsqrt.pop %v5416
      %v5449 = vrsqrt.pop %v5417
      %v5450 = vrsqrt.pop %v5418
      %v5451 = vrsqrt.pop %v5419
      %v5452 = vrsqrt.pop %v5420
      %v5453 = vrsqrt.pop %v5421
      %v5454 = vrsqrt.pop %v5422
      %v5455 = vrsqrt.pop %v5423
      %v5456 = vrsqrt.pop %v5424
      %v5457 = vrsqrt.pop %v5425
      %v5458 = vrsqrt.pop %v5426
      %v5459 = vrsqrt.pop %v5427
      %v5460 = vrsqrt.pop %v5428
      %v5461 = vrsqrt.pop %v5429
      %v5462 = vrsqrt.pop %v5430
      %v5463 = vrsqrt.pop %v5431
      %v5464 = vrsqrt.pop %v5432
      %v5465 = vrsqrt.pop %v5433
      %v5466 = vrsqrt.pop %v5434
      %v5467 = vrsqrt.pop %v5435
      %v5468 = vrsqrt.pop %v5436
      %v5469 = vrsqrt.pop %v5437
      %v5470 = vrsqrt.pop %v5438
      %v5471 = vrsqrt.pop %v5439
      %v5472 = vrsqrt.pop %v5440
      %v5473 = vrsqrt.pop %v5441
      %v5474 = vrsqrt.pop %v5442
      %v5475 = vrsqrt.pop %v5443
      %v5476 = vrsqrt.pop %v5444
      %v5477 = vrsqrt.pop %v5445
      %v5478 = vmul.f32 %v5382, %v5446
      %v5479 = vmul.f32 %v5383, %v5447
      %v5480 = vmul.f32 %v5384, %v5448
      %v5481 = vmul.f32 %v5385, %v5449
      %v5482 = vmul.f32 %v5386, %v5450
      %v5483 = vmul.f32 %v5387, %v5451
      %v5484 = vmul.f32 %v5388, %v5452
      %v5485 = vmul.f32 %v5389, %v5453
      %v5486 = vmul.f32 %v5390, %v5454
      %v5487 = vmul.f32 %v5391, %v5455
      %v5488 = vmul.f32 %v5392, %v5456
      %v5489 = vmul.f32 %v5393, %v5457
      %v5490 = vmul.f32 %v5394, %v5458
      %v5491 = vmul.f32 %v5395, %v5459
      %v5492 = vmul.f32 %v5396, %v5460
      %v5493 = vmul.f32 %v5397, %v5461
      %v5494 = vmul.f32 %v5398, %v5462
      %v5495 = vmul.f32 %v5399, %v5463
      %v5496 = vmul.f32 %v5400, %v5464
      %v5497 = vmul.f32 %v5401, %v5465
      %v5498 = vmul.f32 %v5402, %v5466
      %v5499 = vmul.f32 %v5403, %v5467
      %v5500 = vmul.f32 %v5404, %v5468
      %v5501 = vmul.f32 %v5405, %v5469
      %v5502 = vmul.f32 %v5406, %v5470
      %v5503 = vmul.f32 %v5407, %v5471
      %v5504 = vmul.f32 %v5408, %v5472
      %v5505 = vmul.f32 %v5409, %v5473
      %v5506 = vmul.f32 %v5410, %v5474
      %v5507 = vmul.f32 %v5411, %v5475
      %v5508 = vmul.f32 %v5412, %v5476
      %v5509 = vmul.f32 %v5413, %v5477
      %5511 = vset.pattern.permute.xlu0 0
      %5512 = vperm.xlu0 %5511, %v5478
      %v5513 = vpop.permute.xlu0 %5512
      %5516 = vset.pattern.permute.xlu0 0
      %5517 = vperm.xlu0 %5516, %v5479
      %v5518 = vpop.permute.xlu0 %5517
      %5521 = vset.pattern.permute.xlu0 0
      %5522 = vperm.xlu0 %5521, %v5480
      %v5523 = vpop.permute.xlu0 %5522
      %5526 = vset.pattern.permute.xlu0 0
      %5527 = vperm.xlu0 %5526, %v5481
      %v5528 = vpop.permute.xlu0 %5527
      %5531 = vset.pattern.permute.xlu0 0
      %5532 = vperm.xlu0 %5531, %v5482
      %v5533 = vpop.permute.xlu0 %5532
      %5536 = vset.pattern.permute.xlu0 0
      %5537 = vperm.xlu0 %5536, %v5483
      %v5538 = vpop.permute.xlu0 %5537
      %5541 = vset.pattern.permute.xlu0 0
      %5542 = vperm.xlu0 %5541, %v5484
      %v5543 = vpop.permute.xlu0 %5542
      %5546 = vset.pattern.permute.xlu0 0
      %5547 = vperm.xlu0 %5546, %v5485
      %v5548 = vpop.permute.xlu0 %5547
      %5551 = vset.pattern.permute.xlu0 0
      %5552 = vperm.xlu0 %5551, %v5486
      %v5553 = vpop.permute.xlu0 %5552
      %5556 = vset.pattern.permute.xlu0 0
      %5557 = vperm.xlu0 %5556, %v5487
      %v5558 = vpop.permute.xlu0 %5557
      %5561 = vset.pattern.permute.xlu0 0
      %5562 = vperm.xlu0 %5561, %v5488
      %v5563 = vpop.permute.xlu0 %5562
      %5566 = vset.pattern.permute.xlu0 0
      %5567 = vperm.xlu0 %5566, %v5489
      %v5568 = vpop.permute.xlu0 %5567
      %5571 = vset.pattern.permute.xlu0 0
      %5572 = vperm.xlu0 %5571, %v5490
      %v5573 = vpop.permute.xlu0 %5572
      %5576 = vset.pattern.permute.xlu0 0
      %5577 = vperm.xlu0 %5576, %v5491
      %v5578 = vpop.permute.xlu0 %5577
      %5581 = vset.pattern.permute.xlu0 0
      %5582 = vperm.xlu0 %5581, %v5492
      %v5583 = vpop.permute.xlu0 %5582
      %5586 = vset.pattern.permute.xlu0 0
      %5587 = vperm.xlu0 %5586, %v5493
      %v5588 = vpop.permute.xlu0 %5587
      %5591 = vset.pattern.permute.xlu0 0
      %5592 = vperm.xlu0 %5591, %v5494
      %v5593 = vpop.permute.xlu0 %5592
      %5596 = vset.pattern.permute.xlu0 0
      %5597 = vperm.xlu0 %5596, %v5495
      %v5598 = vpop.permute.xlu0 %5597
      %5601 = vset.pattern.permute.xlu0 0
      %5602 = vperm.xlu0 %5601, %v5496
      %v5603 = vpop.permute.xlu0 %5602
      %5606 = vset.pattern.permute.xlu0 0
      %5607 = vperm.xlu0 %5606, %v5497
      %v5608 = vpop.permute.xlu0 %5607
      %5611 = vset.pattern.permute.xlu0 0
      %5612 = vperm.xlu0 %5611, %v5498
      %v5613 = vpop.permute.xlu0 %5612
      %5616 = vset.pattern.permute.xlu0 0
      %5617 = vperm.xlu0 %5616, %v5499
      %v5618 = vpop.permute.xlu0 %5617
      %5621 = vset.pattern.permute.xlu0 0
      %5622 = vperm.xlu0 %5621, %v5500
      %v5623 = vpop.permute.xlu0 %5622
      %5626 = vset.pattern.permute.xlu0 0
      %5627 = vperm.xlu0 %5626, %v5501
      %v5628 = vpop.permute.xlu0 %5627
      %5631 = vset.pattern.permute.xlu0 0
      %5632 = vperm.xlu0 %5631, %v5502
      %v5633 = vpop.permute.xlu0 %5632
      %5636 = vset.pattern.permute.xlu0 0
      %5637 = vperm.xlu0 %5636, %v5503
      %v5638 = vpop.permute.xlu0 %5637
      %5641 = vset.pattern.permute.xlu0 0
      %5642 = vperm.xlu0 %5641, %v5504
      %v5643 = vpop.permute.xlu0 %5642
      %5646 = vset.pattern.permute.xlu0 0
      %5647 = vperm.xlu0 %5646, %v5505
      %v5648 = vpop.permute.xlu0 %5647
      %5651 = vset.pattern.permute.xlu0 0
      %5652 = vperm.xlu0 %5651, %v5506
      %v5653 = vpop.permute.xlu0 %5652
      %5656 = vset.pattern.permute.xlu0 0
      %5657 = vperm.xlu0 %5656, %v5507
      %v5658 = vpop.permute.xlu0 %5657
      %5661 = vset.pattern.permute.xlu0 0
      %5662 = vperm.xlu0 %5661, %v5508
      %v5663 = vpop.permute.xlu0 %5662
      %5666 = vset.pattern.permute.xlu0 0
      %5667 = vperm.xlu0 %5666, %v5509
      %v5668 = vpop.permute.xlu0 %5667
      %v5670 = vmul.f32 %v5190, %v5513
      %v5671 = vmul.f32 %v5191, %v5518
      %v5672 = vmul.f32 %v5192, %v5523
      %v5673 = vmul.f32 %v5193, %v5528
      %v5674 = vmul.f32 %v5194, %v5533
      %v5675 = vmul.f32 %v5195, %v5538
      %v5676 = vmul.f32 %v5196, %v5543
      %v5677 = vmul.f32 %v5197, %v5548
      %v5678 = vmul.f32 %v5198, %v5553
      %v5679 = vmul.f32 %v5199, %v5558
      %v5680 = vmul.f32 %v5200, %v5563
      %v5681 = vmul.f32 %v5201, %v5568
      %v5682 = vmul.f32 %v5202, %v5573
      %v5683 = vmul.f32 %v5203, %v5578
      %v5684 = vmul.f32 %v5204, %v5583
      %v5685 = vmul.f32 %v5205, %v5588
      %v5686 = vmul.f32 %v5206, %v5593
      %v5687 = vmul.f32 %v5207, %v5598
      %v5688 = vmul.f32 %v5208, %v5603
      %v5689 = vmul.f32 %v5209, %v5608
      %v5690 = vmul.f32 %v5210, %v5613
      %v5691 = vmul.f32 %v5211, %v5618
      %v5692 = vmul.f32 %v5212, %v5623
      %v5693 = vmul.f32 %v5213, %v5628
      %v5694 = vmul.f32 %v5214, %v5633
      %v5695 = vmul.f32 %v5215, %v5638
      %v5696 = vmul.f32 %v5216, %v5643
      %v5697 = vmul.f32 %v5217, %v5648
      %v5698 = vmul.f32 %v5218, %v5653
      %v5699 = vmul.f32 %v5219, %v5658
      %v5700 = vmul.f32 %v5220, %v5663
      %v5701 = vmul.f32 %v5221, %v5668
      %v5702 = vld [vmem:[%s240] sm:$0xff]
      %v5703 = vld [vmem:[%s240 + $0x8] sm:$0xff]
      %v5704 = vld [vmem:[%s240 + $0x10] sm:$0xff]
      %v5705 = vld [vmem:[%s240 + $0x18] sm:$0xff]
      %v5706 = vld [vmem:[%s240 + $0x20] sm:$0xff]
      %v5707 = vld [vmem:[%s240 + $0x28] sm:$0xff]
      %v5708 = vld [vmem:[%s240 + $0x30] sm:$0xff]
      %v5709 = vld [vmem:[%s240 + $0x38] sm:$0xff]
      %v5710 = vld [vmem:[%s240 + $0x40] sm:$0xff]
      %v5711 = vld [vmem:[%s240 + $0x48] sm:$0xff]
      %v5712 = vld [vmem:[%s240 + $0x50] sm:$0xff]
      %v5713 = vld [vmem:[%s240 + $0x58] sm:$0xff]
      %v5714 = vld [vmem:[%s240 + $0x60] sm:$0xff]
      %v5715 = vld [vmem:[%s240 + $0x68] sm:$0xff]
      %v5716 = vld [vmem:[%s240 + $0x70] sm:$0xff]
      %v5717 = vld [vmem:[%s240 + $0x78] sm:$0xff]
      %v5718 = vld [vmem:[%s240 + $0x80] sm:$0xff]
      %v5719 = vld [vmem:[%s240 + $0x88] sm:$0xff]
      %v5720 = vld [vmem:[%s240 + $0x90] sm:$0xff]
      %v5721 = vld [vmem:[%s240 + $0x98] sm:$0xff]
      %v5722 = vld [vmem:[%s240 + $0xa0] sm:$0xff]
      %v5723 = vld [vmem:[%s240 + $0xa8] sm:$0xff]
      %v5724 = vld [vmem:[%s240 + $0xb0] sm:$0xff]
      %v5725 = vld [vmem:[%s240 + $0xb8] sm:$0xff]
      %v5726 = vld [vmem:[%s240 + $0xc0] sm:$0xff]
      %v5727 = vld [vmem:[%s240 + $0xc8] sm:$0xff]
      %v5728 = vld [vmem:[%s240 + $0xd0] sm:$0xff]
      %v5729 = vld [vmem:[%s240 + $0xd8] sm:$0xff]
      %v5730 = vld [vmem:[%s240 + $0xe0] sm:$0xff]
      %v5731 = vld [vmem:[%s240 + $0xe8] sm:$0xff]
      %v5732 = vld [vmem:[%s240 + $0xf0] sm:$0xff]
      %v5733 = vld [vmem:[%s240 + $0xf8] sm:$0xff]
      %5735 = vset.pattern.permute.xlu0 0
      %5736 = vperm.xlu0 %5735, %v5702
      %v5737 = vpop.permute.xlu0 %5736
      %5740 = vset.pattern.permute.xlu0 0
      %5741 = vperm.xlu0 %5740, %v5703
      %v5742 = vpop.permute.xlu0 %5741
      %5745 = vset.pattern.permute.xlu0 0
      %5746 = vperm.xlu0 %5745, %v5704
      %v5747 = vpop.permute.xlu0 %5746
      %5750 = vset.pattern.permute.xlu0 0
      %5751 = vperm.xlu0 %5750, %v5705
      %v5752 = vpop.permute.xlu0 %5751
      %5755 = vset.pattern.permute.xlu0 0
      %5756 = vperm.xlu0 %5755, %v5706
      %v5757 = vpop.permute.xlu0 %5756
      %5760 = vset.pattern.permute.xlu0 0
      %5761 = vperm.xlu0 %5760, %v5707
      %v5762 = vpop.permute.xlu0 %5761
      %5765 = vset.pattern.permute.xlu0 0
      %5766 = vperm.xlu0 %5765, %v5708
      %v5767 = vpop.permute.xlu0 %5766
      %5770 = vset.pattern.permute.xlu0 0
      %5771 = vperm.xlu0 %5770, %v5709
      %v5772 = vpop.permute.xlu0 %5771
      %5775 = vset.pattern.permute.xlu0 0
      %5776 = vperm.xlu0 %5775, %v5710
      %v5777 = vpop.permute.xlu0 %5776
      %5780 = vset.pattern.permute.xlu0 0
      %5781 = vperm.xlu0 %5780, %v5711
      %v5782 = vpop.permute.xlu0 %5781
      %5785 = vset.pattern.permute.xlu0 0
      %5786 = vperm.xlu0 %5785, %v5712
      %v5787 = vpop.permute.xlu0 %5786
      %5790 = vset.pattern.permute.xlu0 0
      %5791 = vperm.xlu0 %5790, %v5713
      %v5792 = vpop.permute.xlu0 %5791
      %5795 = vset.pattern.permute.xlu0 0
      %5796 = vperm.xlu0 %5795, %v5714
      %v5797 = vpop.permute.xlu0 %5796
      %5800 = vset.pattern.permute.xlu0 0
      %5801 = vperm.xlu0 %5800, %v5715
      %v5802 = vpop.permute.xlu0 %5801
      %5805 = vset.pattern.permute.xlu0 0
      %5806 = vperm.xlu0 %5805, %v5716
      %v5807 = vpop.permute.xlu0 %5806
      %5810 = vset.pattern.permute.xlu0 0
      %5811 = vperm.xlu0 %5810, %v5717
      %v5812 = vpop.permute.xlu0 %5811
      %5815 = vset.pattern.permute.xlu0 0
      %5816 = vperm.xlu0 %5815, %v5718
      %v5817 = vpop.permute.xlu0 %5816
      %5820 = vset.pattern.permute.xlu0 0
      %5821 = vperm.xlu0 %5820, %v5719
      %v5822 = vpop.permute.xlu0 %5821
      %5825 = vset.pattern.permute.xlu0 0
      %5826 = vperm.xlu0 %5825, %v5720
      %v5827 = vpop.permute.xlu0 %5826
      %5830 = vset.pattern.permute.xlu0 0
      %5831 = vperm.xlu0 %5830, %v5721
      %v5832 = vpop.permute.xlu0 %5831
      %5835 = vset.pattern.permute.xlu0 0
      %5836 = vperm.xlu0 %5835, %v5722
      %v5837 = vpop.permute.xlu0 %5836
      %5840 = vset.pattern.permute.xlu0 0
      %5841 = vperm.xlu0 %5840, %v5723
      %v5842 = vpop.permute.xlu0 %5841
      %5845 = vset.pattern.permute.xlu0 0
      %5846 = vperm.xlu0 %5845, %v5724
      %v5847 = vpop.permute.xlu0 %5846
      %5850 = vset.pattern.permute.xlu0 0
      %5851 = vperm.xlu0 %5850, %v5725
      %v5852 = vpop.permute.xlu0 %5851
      %5855 = vset.pattern.permute.xlu0 0
      %5856 = vperm.xlu0 %5855, %v5726
      %v5857 = vpop.permute.xlu0 %5856
      %5860 = vset.pattern.permute.xlu0 0
      %5861 = vperm.xlu0 %5860, %v5727
      %v5862 = vpop.permute.xlu0 %5861
      %5865 = vset.pattern.permute.xlu0 0
      %5866 = vperm.xlu0 %5865, %v5728
      %v5867 = vpop.permute.xlu0 %5866
      %5870 = vset.pattern.permute.xlu0 0
      %5871 = vperm.xlu0 %5870, %v5729
      %v5872 = vpop.permute.xlu0 %5871
      %5875 = vset.pattern.permute.xlu0 0
      %5876 = vperm.xlu0 %5875, %v5730
      %v5877 = vpop.permute.xlu0 %5876
      %5880 = vset.pattern.permute.xlu0 0
      %5881 = vperm.xlu0 %5880, %v5731
      %v5882 = vpop.permute.xlu0 %5881
      %5885 = vset.pattern.permute.xlu0 0
      %5886 = vperm.xlu0 %5885, %v5732
      %v5887 = vpop.permute.xlu0 %5886
      %5890 = vset.pattern.permute.xlu0 0
      %5891 = vperm.xlu0 %5890, %v5733
      %v5892 = vpop.permute.xlu0 %5891
      %v5894 = vadd.f32 %v5670, %v5737
      %v5895 = vadd.f32 %v5671, %v5742
      %v5896 = vadd.f32 %v5672, %v5747
      %v5897 = vadd.f32 %v5673, %v5752
      %v5898 = vadd.f32 %v5674, %v5757
      %v5899 = vadd.f32 %v5675, %v5762
      %v5900 = vadd.f32 %v5676, %v5767
      %v5901 = vadd.f32 %v5677, %v5772
      %v5902 = vadd.f32 %v5678, %v5777
      %v5903 = vadd.f32 %v5679, %v5782
      %v5904 = vadd.f32 %v5680, %v5787
      %v5905 = vadd.f32 %v5681, %v5792
      %v5906 = vadd.f32 %v5682, %v5797
      %v5907 = vadd.f32 %v5683, %v5802
      %v5908 = vadd.f32 %v5684, %v5807
      %v5909 = vadd.f32 %v5685, %v5812
      %v5910 = vadd.f32 %v5686, %v5817
      %v5911 = vadd.f32 %v5687, %v5822
      %v5912 = vadd.f32 %v5688, %v5827
      %v5913 = vadd.f32 %v5689, %v5832
      %v5914 = vadd.f32 %v5690, %v5837
      %v5915 = vadd.f32 %v5691, %v5842
      %v5916 = vadd.f32 %v5692, %v5847
      %v5917 = vadd.f32 %v5693, %v5852
      %v5918 = vadd.f32 %v5694, %v5857
      %v5919 = vadd.f32 %v5695, %v5862
      %v5920 = vadd.f32 %v5696, %v5867
      %v5921 = vadd.f32 %v5697, %v5872
      %v5922 = vadd.f32 %v5698, %v5877
      %v5923 = vadd.f32 %v5699, %v5882
      %v5924 = vadd.f32 %v5700, %v5887
      %v5925 = vadd.f32 %v5701, %v5892
      %5926 = vst.msk [vmem:[%s246] sm:$0xff] %vm5061, %v5894
      %5927 = vst.msk [vmem:[%s246 + $0x8] sm:$0xff] %vm5061, %v5895
      %5928 = vst.msk [vmem:[%s246 + $0x10] sm:$0xff] %vm5061, %v5896
      %5929 = vst.msk [vmem:[%s246 + $0x18] sm:$0xff] %vm5061, %v5897
      %5930 = vst.msk [vmem:[%s246 + $0x20] sm:$0xff] %vm5061, %v5898
      %5931 = vst.msk [vmem:[%s246 + $0x28] sm:$0xff] %vm5061, %v5899
      %5932 = vst.msk [vmem:[%s246 + $0x30] sm:$0xff] %vm5061, %v5900
      %5933 = vst.msk [vmem:[%s246 + $0x38] sm:$0xff] %vm5061, %v5901
      %5934 = vst.msk [vmem:[%s246 + $0x40] sm:$0xff] %vm5061, %v5902
      %5935 = vst.msk [vmem:[%s246 + $0x48] sm:$0xff] %vm5061, %v5903
      %5936 = vst.msk [vmem:[%s246 + $0x50] sm:$0xff] %vm5061, %v5904
      %5937 = vst.msk [vmem:[%s246 + $0x58] sm:$0xff] %vm5061, %v5905
      %5938 = vst.msk [vmem:[%s246 + $0x60] sm:$0xff] %vm5061, %v5906
      %5939 = vst.msk [vmem:[%s246 + $0x68] sm:$0xff] %vm5061, %v5907
      %5940 = vst.msk [vmem:[%s246 + $0x70] sm:$0xff] %vm5061, %v5908
      %5941 = vst.msk [vmem:[%s246 + $0x78] sm:$0xff] %vm5061, %v5909
      %5942 = vst.msk [vmem:[%s246 + $0x80] sm:$0xff] %vm5061, %v5910
      %5943 = vst.msk [vmem:[%s246 + $0x88] sm:$0xff] %vm5061, %v5911
      %5944 = vst.msk [vmem:[%s246 + $0x90] sm:$0xff] %vm5061, %v5912
      %5945 = vst.msk [vmem:[%s246 + $0x98] sm:$0xff] %vm5061, %v5913
      %5946 = vst.msk [vmem:[%s246 + $0xa0] sm:$0xff] %vm5061, %v5914
      %5947 = vst.msk [vmem:[%s246 + $0xa8] sm:$0xff] %vm5061, %v5915
      %5948 = vst.msk [vmem:[%s246 + $0xb0] sm:$0xff] %vm5061, %v5916
      %5949 = vst.msk [vmem:[%s246 + $0xb8] sm:$0xff] %vm5061, %v5917
      %5950 = vst.msk [vmem:[%s246 + $0xc0] sm:$0xff] %vm5061, %v5918
      %5951 = vst.msk [vmem:[%s246 + $0xc8] sm:$0xff] %vm5061, %v5919
      %5952 = vst.msk [vmem:[%s246 + $0xd0] sm:$0xff] %vm5061, %v5920
      %5953 = vst.msk [vmem:[%s246 + $0xd8] sm:$0xff] %vm5061, %v5921
      %5954 = vst.msk [vmem:[%s246 + $0xe0] sm:$0xff] %vm5061, %v5922
      %5955 = vst.msk [vmem:[%s246 + $0xe8] sm:$0xff] %vm5061, %v5923
      %5956 = vst.msk [vmem:[%s246 + $0xf0] sm:$0xff] %vm5061, %v5924
      %5957 = vst.msk [vmem:[%s246 + $0xf8] sm:$0xff] %vm5061, %v5925
      %s5958 = smul.u32 32, %s15
      %p5959 = scmp.lt.s32.totalorder %s5958, 63
      %s5960 = scalar_select %p5959, %s5958, 63
      %s5961 = smul.addr %s5960, 8
      %s5962 = scalar_lea.vmem %s4, %s5961
      // Predicated region
      $region37: #{module_forward.1} parent=35 // pred_check
        %p5963 = pneg %p132
      $region38: #{module_forward.1} parent=35 // pred_check_branch
        %5965 = sbr.rel (%p5963) target = $region40
      $region39: #{module_forward.1} parent=35 // pred_region
        %s5966 = smul.u32 32, %s15
      $region40: #{module_forward.1} parent=35 // pred_fallthru
        _
    $region36: #{module_forward.1} parent=5 // pred_fallthru
      _
    %p5967 = scmp.le.s32.totalorder 2, %s10
    // Predicated region
    $region41: #{module_forward.1} parent=5 // pred_check
      %p5968 = pneg %p5967
    $region42: #{module_forward.1} parent=5 // pred_check_branch
      %5970 = sbr.rel (%p5968) target = $region44
    $region43: #{module_forward.1} parent=5 // pred_region
      %s5971 = ssub.s32 %s10, 2
      // Predicated region
      $region45: #{module_forward.1} parent=43 // pred_check
        %p5972 = pneg %p138
      $region46: #{module_forward.1} parent=43 // pred_check_branch
        %5974 = sbr.rel (%p5972) target = $region48
      $region47: #{module_forward.1} parent=43 // pred_region
        %s5975 = smul.u32 32, %s16
        %p5976 = scmp.lt.s32.totalorder %s5975, 63
        %s5977 = scalar_select %p5976, %s5975, 63
        %s5978 = smul.addr %s5977, 8
        %s5979 = scalar_lea.vmem %s4, %s5978
      $region48: #{module_forward.1} parent=43 // pred_fallthru
        _
    $region44: #{module_forward.1} parent=5 // pred_fallthru
      _
  $region6: #{module_forward.1} parent=0 // loop_footer
    %s14 = sadd.s32 1, %s10
  $region7: #{module_forward.1} parent=0 // loop_footer_branch
    %9 = sbr.rel target = $region3
  $region8: #{module_forward.1} parent=0 // loop_exit
    _

</llo_original>
